<compile_context>
chip_gen: v5e
topology: v5e:2x2
jax: 0.10.0
libtpu: 0.0.40
codegen_flags: <defaults>
</compile_context>

<pallas_src>
import math
import functools

import numpy as np
import jax
import jax.numpy as jnp
from jax.experimental import pallas as pl
from jax.experimental.pallas import tpu as pltpu

# ----------------------------- model constants -----------------------------
POINTS_PER_UNIT = 32.0
MARGIN = 0.1
KERNEL_SIZE = 5
UNET_CHANNELS = (8, 16, 16, 32)          # small=True variant of the UNet
IN_CHANNELS = 4                          # 2 (density+signal) x 2 tasks
OUT_CHANNELS = 3                         # 1 class channel + 2 regression channels
NUM_HALVING = len(UNET_CHANNELS)
GRID_MULTIPLE = 2 ** NUM_HALVING
# lcm(2**num_halving, 128): keeps the UNet halving constraint AND lane-dense stores.
GRID_LANE_MULTIPLE = (GRID_MULTIPLE * 128) // math.gcd(GRID_MULTIPLE, 128)

ENC_SCALE = 2.0 / POINTS_PER_UNIT        # SetConv log_scale init = log(2/ppu)
INV_SCALE2 = 1.0 / (ENC_SCALE * ENC_SCALE)
LOG_SIGMA = math.log(0.1)                # nn.Parameter log_sigma (unused in forward)

# one parallel grid axis over batch -> both v7x TensorCores get work
_PARALLEL_B = pltpu.CompilerParams(dimension_semantics=("parallel",))


# ------------------------- fused dual SetConv encoder -----------------------
def _dual_encoder_kernel(xc_ref, yc_ref, xr_ref, yr_ref, g_ref, o_ref, *, inv_scale2):
    # xc/xr: (1, N, 1); yc/yr: (1, 1, N); g: (1, M); o: (1, 4, M) bf16
    g = g_ref[...]                                                # (1, M) f32

    def one_task(x_ref, y_ref):
        x = x_ref[0]                                              # (N, 1)
        d = x - g                                                 # (N, M), M lane-dense
        w = jnp.exp(-0.5 * inv_scale2 * d * d).astype(jnp.bfloat16)
        y_row = y_ref[0]                                          # (1, N)
        a = jnp.concatenate([jnp.ones_like(y_row), y_row],
                            axis=0).astype(jnp.bfloat16)          # (2, N)
        # density + signal from one bf16 MXU matmul (f32 accumulation), M on lanes
        r = jnp.dot(a, w, preferred_element_type=jnp.float32)     # (2, M)
        dens = r[0:1, :]
        sig = r[1:2, :] * pl.reciprocal(dens + 1e-8, approx=True)  # EUP reciprocal
        return dens, sig

    dc, sc = one_task(xc_ref, yc_ref)
    dr, sr = one_task(xr_ref, yr_ref)
    o_ref[...] = jnp.concatenate([dc, sc, dr, sr], axis=0).astype(o_ref.dtype)[None]


def setconv_encode_dual(x_class, y_class, x_reg, y_reg, grid):
    """Both context sets -> (B, 4, M) bf16 = [dens_cls, sig_cls, dens_reg, sig_reg]."""
    B, Nc, _ = x_class.shape
    Nr = x_reg.shape[1]
    M = grid.shape[0]
    g2 = grid.reshape(1, M)
    yc_row = jnp.transpose(y_class, (0, 2, 1))                    # (B, 1, Nc)
    yr_row = jnp.transpose(y_reg, (0, 2, 1))                      # (B, 1, Nr)
    return pl.pallas_call(
        functools.partial(_dual_encoder_kernel, inv_scale2=INV_SCALE2),
        out_shape=jax.ShapeDtypeStruct((B, 4, M), jnp.bfloat16),
        grid=(B,),
        in_specs=[
            pl.BlockSpec((1, Nc, 1), lambda i: (i, 0, 0)),
            pl.BlockSpec((1, 1, Nc), lambda i: (i, 0, 0)),
            pl.BlockSpec((1, Nr, 1), lambda i: (i, 0, 0)),
            pl.BlockSpec((1, 1, Nr), lambda i: (i, 0, 0)),
            pl.BlockSpec((1, M), lambda i: (0, 0)),
        ],
        out_specs=pl.BlockSpec((1, 4, M), lambda i: (i, 0, 0)),
        compiler_params=_PARALLEL_B,
    )(x_class, yc_row, x_reg, yr_row, g2)


# ------------------------ fused dual SetConv decoder -------------------------
def _dual_decoder_kernel(g_ref, z_ref, xtc_ref, xtr_ref, oc_ref, or_ref, *, inv_scale2):
    g = g_ref[...]                                                # (1, M) f32
    z = z_ref[0]                                                  # (3, M) bf16

    def decode(xt_ref):
        xt = xt_ref[0]                                            # (Nt, 1)
        d = xt - g                                                # (Nt, M), M lane-dense
        w = jnp.exp(-0.5 * inv_scale2 * d * d).astype(jnp.bfloat16)
        # contract over M (lane dim of both operands); emits (Nt, C) directly
        return jax.lax.dot_general(
            w, z, dimension_numbers=(((1,), (1,)), ((), ())),
            preferred_element_type=jnp.float32)                   # (Nt, 3)

    oc_ref[...] = decode(xtc_ref)[:, 0:1][None]                   # (1, Ntc, 1)
    or_ref[...] = decode(xtr_ref)[:, 1:3][None]                   # (1, Ntr, 2)


def setconv_decode_dual(grid, z, x_tgt_class, x_tgt_reg):
    """grid: (M,); z: (B, 3, M) bf16 -> class (B, Ntc, 1) and reg (B, Ntr, 2) f32."""
    B, _, M = z.shape
    Ntc = x_tgt_class.shape[1]
    Ntr = x_tgt_reg.shape[1]
    g2 = grid.reshape(1, M)
    return pl.pallas_call(
        functools.partial(_dual_decoder_kernel, inv_scale2=INV_SCALE2),
        out_shape=(jax.ShapeDtypeStruct((B, Ntc, 1), jnp.float32),
                   jax.ShapeDtypeStruct((B, Ntr, 2), jnp.float32)),
        grid=(B,),
        in_specs=[
            pl.BlockSpec((1, M), lambda i: (0, 0)),
            pl.BlockSpec((1, 3, M), lambda i: (i, 0, 0)),
            pl.BlockSpec((1, Ntc, 1), lambda i: (i, 0, 0)),
            pl.BlockSpec((1, Ntr, 1), lambda i: (i, 0, 0)),
        ],
        out_specs=(pl.BlockSpec((1, Ntc, 1), lambda i: (i, 0, 0)),
                   pl.BlockSpec((1, Ntr, 2), lambda i: (i, 0, 0))),
        compiler_params=_PARALLEL_B,
    )(g2, z, x_tgt_class, x_tgt_reg)


# ------------------------- fully fused UNet (one kernel) ---------------------
def _downsample_matrix(l, dtype):
    """(l, l//2) 0/1 matrix: out = f @ S selects even columns (exact)."""
    r = jax.lax.broadcasted_iota(jnp.int32, (l, l // 2), 0)
    c = jax.lax.broadcasted_iota(jnp.int32, (l, l // 2), 1)
    return jnp.where(r == 2 * c, 1.0, 0.0).astype(dtype)


def _interleave_matrices(l, dtype):
    """(l, 2l) 0/1 matrices: ev @ Pe + od @ Po interleaves even/odd phases (exact)."""
    r = jax.lax.broadcasted_iota(jnp.int32, (l, 2 * l), 0)
    c = jax.lax.broadcasted_iota(jnp.int32, (l, 2 * l), 1)
    pe = jnp.where(c == 2 * r, 1.0, 0.0).astype(dtype)
    po = jnp.where(c == 2 * r + 1, 1.0, 0.0).astype(dtype)
    return pe, po


def _down_block(x, w_ref, b_ref):
    """Conv1d K=5, stride=2, pad=2, + ReLU.  x: (Cin, L) bf16 -> (Cout, L//2) bf16."""
    cin, l = x.shape
    cout = b_ref.shape[0]
    zp = jnp.zeros((cin, 2), x.dtype)
    xp = jnp.concatenate([zp, x, zp], axis=-1)                    # (cin, l+4)
    f = b_ref[...]                                                # (cout, 1) f32
    for k in range(KERNEL_SIZE):                                  # K accumulated MXU matmuls
        wk = w_ref[k * cout:(k + 1) * cout, :]                    # (cout, cin) bf16
        f = f + jnp.dot(wk, xp[:, k:k + l], preferred_element_type=jnp.float32)
    f = jnp.maximum(f, 0.0).astype(jnp.bfloat16)                  # stride-1 output + ReLU
    sel = _downsample_matrix(l, jnp.bfloat16)
    return jnp.dot(f, sel, preferred_element_type=jnp.float32).astype(jnp.bfloat16)


def _up_block(x, we_ref, wo_ref, b_ref):
    """ConvTranspose1d K=5, stride=2, pad=2, out_pad=1, + ReLU (polyphase).
    x: (Cin, L) bf16 -> (Cout, 2L) bf16."""
    cin, l = x.shape
    cout = b_ref.shape[0]
    zp = jnp.zeros((cin, 1), x.dtype)
    xp = jnp.concatenate([zp, x, zp], axis=-1)                    # (cin, l+2)
    taps = (xp[:, 0:l], xp[:, 1:1 + l], xp[:, 2:2 + l])           # x[t-1], x[t], x[t+1]
    ev = b_ref[...]                                               # even[t] = W4 x[t-1]+W2 x[t]+W0 x[t+1]
    for k in range(3):
        ev = ev + jnp.dot(we_ref[k * cout:(k + 1) * cout, :], taps[k],
                          preferred_element_type=jnp.float32)
    od = b_ref[...]                                               # odd[t] = W3 x[t] + W1 x[t+1]
    for k in range(2):
        od = od + jnp.dot(wo_ref[k * cout:(k + 1) * cout, :], taps[k + 1],
                          preferred_element_type=jnp.float32)
    ev = jnp.maximum(ev, 0.0).astype(jnp.bfloat16)
    od = jnp.maximum(od, 0.0).astype(jnp.bfloat16)
    pe, po = _interleave_matrices(l, jnp.bfloat16)
    out = (jnp.dot(ev, pe, preferred_element_type=jnp.float32)
           + jnp.dot(od, po, preferred_element_type=jnp.float32))
    return out.astype(jnp.bfloat16)                               # (cout, 2l)


def _fused_unet_kernel(*refs):
    x_ref, o_ref = refs[0], refs[-1]
    wl = list(refs[1:-1])
    n = (len(wl) - 4) // 5                                        # number of UNet levels
    pos = 0

    def nxt():
        nonlocal pos
        r = wl[pos]
        pos += 1
        return r

    wi, bi = nxt(), nxt()
    down = [(nxt(), nxt()) for _ in range(n)]
    up = [(nxt(), nxt(), nxt()) for _ in range(n)]
    wf, bf = nxt(), nxt()

    x = x_ref[0]                                                  # (4, M) bf16
    # initial 1x1 (no ReLU)
    h = jnp.dot(wi[...], x, preferred_element_type=jnp.float32) + bi[...]
    h = h.astype(jnp.bfloat16)

    hs = []                                                       # whole pyramid stays on-chip
    for (w_ref, b_ref) in down:
        h = _down_block(h, w_ref, b_ref)
        hs.append(h)

    we, wo, bu = up[-1]
    u = _up_block(hs[-1], we, wo, bu)
    for h_skip, (we, wo, bu) in zip(reversed(hs[:-1]), reversed(up[:-1])):
        u = _up_block(jnp.concatenate([h_skip, u], axis=0), we, wo, bu)

    # final 1x1 (no ReLU)
    out = jnp.dot(wf[...], u, preferred_element_type=jnp.float32) + bf[...]
    o_ref[...] = out[None].astype(o_ref.dtype)                    # lane-dense (1, 3, M) store


def unet_forward(params, x):
    """x: (B, 4, M) bf16 -> (B, 3, M) bf16, entire UNet in a single pallas_call."""
    B, cin, M = x.shape
    flat = [params["initial"][0], params["initial"][1]]
    for w, b in params["down"]:
        flat += [w, b]
    for we, wo, b in params["up"]:
        flat += [we, wo, b]
    flat += [params["final"][0], params["final"][1]]

    in_specs = [pl.BlockSpec((1, cin, M), lambda i: (i, 0, 0))]
    # constant-index weight blocks stay VMEM-resident across the batch grid
    in_specs += [pl.BlockSpec(w.shape, lambda i: (0, 0)) for w in flat]

    return pl.pallas_call(
        _fused_unet_kernel,
        out_shape=jax.ShapeDtypeStruct((B, OUT_CHANNELS, M), jnp.bfloat16),
        grid=(B,),
        in_specs=in_specs,
        out_specs=pl.BlockSpec((1, OUT_CHANNELS, M), lambda i: (i, 0, 0)),
        compiler_params=_PARALLEL_B,
    )(x, *flat)


# ------------------------------ UNet parameters ------------------------------
def _uniform_init(key, shape, fan_in):
    bound = 1.0 / math.sqrt(fan_in)
    return jax.random.uniform(key, shape, jnp.float32, -bound, bound)


def init_unet_params(key):
    ch = UNET_CHANNELS
    n = len(ch)
    keys = jax.random.split(key, 2 + 2 * n)

    def conv_w(k, cout, cin, ksz):
        kw, kb = jax.random.split(k)
        return (_uniform_init(kw, (cout, cin, ksz), cin * ksz),
                _uniform_init(kb, (cout,), cin * ksz))

    wi, bi = conv_w(keys[0], ch[0], IN_CHANNELS, 1)
    wf, bf = conv_w(keys[1], OUT_CHANNELS, ch[0], 1)
    params = {
        "initial": (wi.reshape(ch[0], IN_CHANNELS).astype(jnp.bfloat16),
                    bi.reshape(ch[0], 1)),
        "final": (wf.reshape(OUT_CHANNELS, ch[0]).astype(jnp.bfloat16),
                  bf.reshape(OUT_CHANNELS, 1)),
        "down": [],
        "up": [],
    }

    # down convs: taps stacked along the first axis so the kernel reads
    # W_k = w[k*Cout:(k+1)*Cout, :] with cheap sublane-offset slices.  bf16 MXU operands.
    for i in range(n):
        cout, cin = ch[i], ch[max(i - 1, 0)]
        w, b = conv_w(keys[2 + i], cout, cin, KERNEL_SIZE)        # (cout, cin, 5)
        w_stack = jnp.concatenate([w[:, :, k] for k in range(KERNEL_SIZE)], axis=0)
        params["down"].append((w_stack.astype(jnp.bfloat16), b.reshape(cout, 1)))

    # transposed convs (PyTorch layout (Cin, Cout, K)), polyphase packing:
    #   even[t] = W4 x[t-1] + W2 x[t] + W0 x[t+1]
    #   odd[t]  = W3 x[t]   + W1 x[t+1]
    for i in range(n):
        cin = ch[i] if i == n - 1 else 2 * ch[i]                  # skip connection doubles channels
        cout = ch[max(i - 1, 0)]
        kw, kb = jax.random.split(keys[2 + n + i])
        w = _uniform_init(kw, (cin, cout, KERNEL_SIZE), cin * KERNEL_SIZE)
        b = _uniform_init(kb, (cout,), cin * KERNEL_SIZE)
        wT = jnp.transpose(w, (1, 0, 2))                          # (cout, cin, 5)
        w_even = jnp.concatenate([wT[:, :, 4], wT[:, :, 2], wT[:, :, 0]], axis=0)
        w_odd = jnp.concatenate([wT[:, :, 3], wT[:, :, 1]], axis=0)
        params["up"].append((w_even.astype(jnp.bfloat16),
                             w_odd.astype(jnp.bfloat16),
                             b.reshape(cout, 1)))
    return params


# --------------------------- Discretisation1d -------------------------------
def discretise(xs, points_per_unit=POINTS_PER_UNIT, multiple=GRID_LANE_MULTIPLE,
               margin=MARGIN):
    # Data-dependent grid size -> computed on host (shapes must be static in JAX).
    # `multiple` is the lcm of 2**num_halving (=16, required by the UNet) and the TPU
    # lane width (128), so every (.., M)-shaped HBM store in the kernels is lane-dense.
    resolution = 1.0 / points_per_unit
    grid_min = min(float(np.min(np.asarray(x))) for x in xs) - margin - resolution
    grid_max = max(float(np.max(np.asarray(x))) for x in xs) + margin + resolution
    n_raw = (grid_max - grid_min) / resolution + 1.0
    n = int(math.ceil(n_raw / multiple)) * multiple
    extra = (n - n_raw) * resolution
    grid = np.linspace(grid_min - extra / 2.0, grid_max + extra / 2.0, n, dtype=np.float32)
    return jnp.asarray(grid)


# ----------------------------- full forward ---------------------------------
def dual_convcnp_forward(params, batch, x_grid):
    # fused dual-task SetConv encoder -> (B, 4, M) bf16 [dens_c, sig_c, dens_r, sig_r]
    z = setconv_encode_dual(batch["x_context_class"], batch["y_context_class"],
                            batch["x_context_reg"], batch["y_context_reg"], x_grid)
    z = unet_forward(params, z)                                   # (B, 3, M) bf16, one kernel
    z_class, z_reg = setconv_decode_dual(x_grid, z,
                                         batch["x_target_class"], batch["x_target_reg"])
    # (sigmoid(class logits), (regression mean, exp(regression log-noise)))
    return jax.nn.sigmoid(z_class), (z_reg[:, :, :1], jnp.exp(z_reg[:, :, 1:]))


# ---------------------------------- main -------------------------------------
if __name__ == "__main__":
    key = jax.random.PRNGKey(0)
    kp, k1, k2, k3, k4, k5, k6 = jax.random.split(key, 7)
    B, Nc, Nt = 2, 8, 8

    batch = {
        "x_context_class": jax.random.uniform(k1, (B, Nc, 1), jnp.float32, -1.0, 1.0),
        "y_context_class": jax.random.bernoulli(k2, 0.5, (B, Nc, 1)).astype(jnp.float32),
        "x_target_class": jax.random.uniform(k3, (B, Nt, 1), jnp.float32, -1.0, 1.0),
        "x_context_reg": jax.random.uniform(k4, (B, Nc, 1), jnp.float32, -1.0, 1.0),
        "y_context_reg": jax.random.normal(k5, (B, Nc, 1), jnp.float32),
        "x_target_reg": jax.random.uniform(k6, (B, Nt, 1), jnp.float32, -1.0, 1.0),
    }

    params = init_unet_params(kp)
    x_grid = discretise(
        [batch["x_context_class"], batch["x_target_class"],
         batch["x_context_reg"], batch["x_target_reg"]]
    )

    fwd = jax.jit(dual_convcnp_forward)
    probs, (mean, sigma) = fwd(params, batch, x_grid)
    jax.block_until_ready((probs, mean, sigma))

    assert probs.shape == (B, Nt, 1)
    assert mean.shape == (B, Nt, 1)
    assert sigma.shape == (B, Nt, 1)
    assert bool(jnp.all(jnp.isfinite(probs)))
    assert bool(jnp.all(jnp.isfinite(mean)))
    assert bool(jnp.all(jnp.isfinite(sigma)))
    print("KERNEL_OK")
</pallas_src>

<mosaic_0001>
module attributes {stable_mosaic.version = 11 : i64} {
  func.func @_dual_encoder_kernel(%arg0: i32, %arg1: memref<1x8x1xf32, #tpu.memory_space<vmem>>, %arg2: memref<1x1x8xf32, #tpu.memory_space<vmem>>, %arg3: memref<1x8x1xf32, #tpu.memory_space<vmem>>, %arg4: memref<1x1x8xf32, #tpu.memory_space<vmem>>, %arg5: memref<1x128xf32, #tpu.memory_space<vmem>>, %arg6: memref<1x4x128xbf16, #tpu.memory_space<vmem>>) attributes {dimension_semantics = [#tpu.dimension_semantics<parallel>], iteration_bounds = array<i64: 2>, scalar_prefetch = 0 : i64, scratch_operands = 0 : i64, tpu.core_type = #tpu.core_type<tc>, window_params = [{transform_indices = @transform_0, window_bounds = array<i64: 1, 8, 1>}, {transform_indices = @transform_1, window_bounds = array<i64: 1, 1, 8>}, {transform_indices = @transform_2, window_bounds = array<i64: 1, 8, 1>}, {transform_indices = @transform_3, window_bounds = array<i64: 1, 1, 8>}, {pipeline_mode = #tpu.pipeline_mode<synchronous>, transform_indices = @transform_4, window_bounds = array<i64: 1, 128>}, {transform_indices = @transform_5, window_bounds = array<i64: 1, 4, 128>}]} {
    %c0 = arith.constant 0 : index
    %c0_0 = arith.constant 0 : index
    %0 = vector.load %arg5[%c0, %c0_0] : memref<1x128xf32, #tpu.memory_space<vmem>>, vector<1x128xf32>
    %c0_1 = arith.constant 0 : index
    %c0_2 = arith.constant 0 : index
    %c0_3 = arith.constant 0 : index
    %1 = vector.load %arg1[%c0_1, %c0_2, %c0_3] : memref<1x8x1xf32, #tpu.memory_space<vmem>>, vector<1x8x1xf32>
    %2 = vector.shape_cast %1 : vector<1x8x1xf32> to vector<8x1xf32>
    %3 = vector.broadcast %2 : vector<8x1xf32> to vector<8x128xf32>
    %4 = vector.broadcast %0 : vector<1x128xf32> to vector<8x128xf32>
    %5 = arith.subf %3, %4 : vector<8x128xf32>
    %cst = arith.constant -1.280000e+02 : f32
    %6 = vector.broadcast %cst : f32 to vector<8x128xf32>
    %7 = arith.mulf %6, %5 : vector<8x128xf32>
    %8 = arith.mulf %7, %5 : vector<8x128xf32>
    %9 = math.exp %8 : vector<8x128xf32>
    %10 = arith.truncf %9 : vector<8x128xf32> to vector<8x128xbf16>
    %c0_4 = arith.constant 0 : index
    %c0_5 = arith.constant 0 : index
    %c0_6 = arith.constant 0 : index
    %11 = vector.load %arg2[%c0_4, %c0_5, %c0_6] : memref<1x1x8xf32, #tpu.memory_space<vmem>>, vector<1x1x8xf32>
    %12 = vector.shape_cast %11 : vector<1x1x8xf32> to vector<1x8xf32>
    %cst_7 = arith.constant 1.000000e+00 : f32
    %13 = vector.broadcast %cst_7 : f32 to vector<1x8xf32>
    %14 = tpu.concatenate %13, %12 in 0 : vector<1x8xf32>, vector<1x8xf32> -> vector<2x8xf32>
    %15 = arith.truncf %14 : vector<2x8xf32> to vector<2x8xbf16>
    %cst_8 = arith.constant dense<0.000000e+00> : vector<2x128xf32>
    %16 = tpu.matmul %15, %10, %cst_8 {dimension_numbers = #tpu.dot_dimension_numbers<[1], [0], [0], [1], [0, 0, 1, 1], [], []>} : vector<2x8xbf16>, vector<8x128xbf16>, vector<2x128xf32> -> vector<2x128xf32>
    %17 = vector.extract_strided_slice %16 {offsets = [0, 0], sizes = [1, 128], strides = [1, 1]} : vector<2x128xf32> to vector<1x128xf32>
    %18 = vector.extract_strided_slice %16 {offsets = [1, 0], sizes = [1, 128], strides = [1, 1]} : vector<2x128xf32> to vector<1x128xf32>
    %cst_9 = arith.constant 9.99999993E-9 : f32
    %19 = vector.broadcast %cst_9 : f32 to vector<1x128xf32>
    %20 = arith.addf %17, %19 : vector<1x128xf32>
    %21 = tpu.reciprocal %20 {approx = true} : vector<1x128xf32> -> vector<1x128xf32>
    %22 = arith.mulf %18, %21 : vector<1x128xf32>
    %c0_10 = arith.constant 0 : index
    %c0_11 = arith.constant 0 : index
    %c0_12 = arith.constant 0 : index
    %23 = vector.load %arg3[%c0_10, %c0_11, %c0_12] : memref<1x8x1xf32, #tpu.memory_space<vmem>>, vector<1x8x1xf32>
    %24 = vector.shape_cast %23 : vector<1x8x1xf32> to vector<8x1xf32>
    %25 = vector.broadcast %24 : vector<8x1xf32> to vector<8x128xf32>
    %26 = vector.broadcast %0 : vector<1x128xf32> to vector<8x128xf32>
    %27 = arith.subf %25, %26 : vector<8x128xf32>
    %cst_13 = arith.constant -1.280000e+02 : f32
    %28 = vector.broadcast %cst_13 : f32 to vector<8x128xf32>
    %29 = arith.mulf %28, %27 : vector<8x128xf32>
    %30 = arith.mulf %29, %27 : vector<8x128xf32>
    %31 = math.exp %30 : vector<8x128xf32>
    %32 = arith.truncf %31 : vector<8x128xf32> to vector<8x128xbf16>
    %c0_14 = arith.constant 0 : index
    %c0_15 = arith.constant 0 : index
    %c0_16 = arith.constant 0 : index
    %33 = vector.load %arg4[%c0_14, %c0_15, %c0_16] : memref<1x1x8xf32, #tpu.memory_space<vmem>>, vector<1x1x8xf32>
    %34 = vector.shape_cast %33 : vector<1x1x8xf32> to vector<1x8xf32>
    %cst_17 = arith.constant 1.000000e+00 : f32
    %35 = vector.broadcast %cst_17 : f32 to vector<1x8xf32>
    %36 = tpu.concatenate %35, %34 in 0 : vector<1x8xf32>, vector<1x8xf32> -> vector<2x8xf32>
    %37 = arith.truncf %36 : vector<2x8xf32> to vector<2x8xbf16>
    %cst_18 = arith.constant dense<0.000000e+00> : vector<2x128xf32>
    %38 = tpu.matmul %37, %32, %cst_18 {dimension_numbers = #tpu.dot_dimension_numbers<[1], [0], [0], [1], [0, 0, 1, 1], [], []>} : vector<2x8xbf16>, vector<8x128xbf16>, vector<2x128xf32> -> vector<2x128xf32>
    %39 = vector.extract_strided_slice %38 {offsets = [0, 0], sizes = [1, 128], strides = [1, 1]} : vector<2x128xf32> to vector<1x128xf32>
    %40 = vector.extract_strided_slice %38 {offsets = [1, 0], sizes = [1, 128], strides = [1, 1]} : vector<2x128xf32> to vector<1x128xf32>
    %cst_19 = arith.constant 9.99999993E-9 : f32
    %41 = vector.broadcast %cst_19 : f32 to vector<1x128xf32>
    %42 = arith.addf %39, %41 : vector<1x128xf32>
    %43 = tpu.reciprocal %42 {approx = true} : vector<1x128xf32> -> vector<1x128xf32>
    %44 = arith.mulf %40, %43 : vector<1x128xf32>
    %45 = tpu.concatenate %17, %22, %39, %44 in 0 : vector<1x128xf32>, vector<1x128xf32>, vector<1x128xf32>, vector<1x128xf32> -> vector<4x128xf32>
    %46 = arith.truncf %45 : vector<4x128xf32> to vector<4x128xbf16>
    %47 = vector.shape_cast %46 : vector<4x128xbf16> to vector<1x4x128xbf16>
    %c0_20 = arith.constant 0 : index
    %c0_21 = arith.constant 0 : index
    %c0_22 = arith.constant 0 : index
    %48 = vector.load %arg6[%c0_20, %c0_21, %c0_22] : memref<1x4x128xbf16, #tpu.memory_space<vmem>>, vector<1x4x128xbf16>
    tpu.vector_store %arg6[%c0_20, %c0_21, %c0_22], %47 {strides = array<i32>} : memref<1x4x128xbf16, #tpu.memory_space<vmem>>, vector<1x4x128xbf16>,
    return
  }
  func.func @transform_0(%arg0: i32) -> (i32, i32, i32) {
    %c0_i32 = arith.constant 0 : i32
    %c0_i32_0 = arith.constant 0 : i32
    %c0_i32_1 = arith.constant 0 : i32
    return %arg0, %c0_i32, %c0_i32_0 : i32, i32, i32
  }
  func.func @transform_1(%arg0: i32) -> (i32, i32, i32) {
    %c0_i32 = arith.constant 0 : i32
    %c0_i32_0 = arith.constant 0 : i32
    %c0_i32_1 = arith.constant 0 : i32
    return %arg0, %c0_i32, %c0_i32_0 : i32, i32, i32
  }
  func.func @transform_2(%arg0: i32) -> (i32, i32, i32) {
    %c0_i32 = arith.constant 0 : i32
    %c0_i32_0 = arith.constant 0 : i32
    %c0_i32_1 = arith.constant 0 : i32
    return %arg0, %c0_i32, %c0_i32_0 : i32, i32, i32
  }
  func.func @transform_3(%arg0: i32) -> (i32, i32, i32) {
    %c0_i32 = arith.constant 0 : i32
    %c0_i32_0 = arith.constant 0 : i32
    %c0_i32_1 = arith.constant 0 : i32
    return %arg0, %c0_i32, %c0_i32_0 : i32, i32, i32
  }
  func.func @transform_4(%arg0: i32) -> (i32, i32) {
    %c0_i32 = arith.constant 0 : i32
    %c0_i32_0 = arith.constant 0 : i32
    %c0_i32_1 = arith.constant 0 : i32
    return %c0_i32, %c0_i32_0 : i32, i32
  }
  func.func @transform_5(%arg0: i32) -> (i32, i32, i32) {
    %c0_i32 = arith.constant 0 : i32
    %c0_i32_0 = arith.constant 0 : i32
    %c0_i32_1 = arith.constant 0 : i32
    return %arg0, %c0_i32, %c0_i32_0 : i32, i32, i32
  }
}

module attributes {stable_mosaic.version = 11 : i64} {
  func.func @_fused_unet_kernel(%arg0: i32, %arg1: memref<1x4x128xbf16, #tpu.memory_space<vmem>>, %arg2: memref<8x4xbf16, #tpu.memory_space<vmem>>, %arg3: memref<8x1xf32, #tpu.memory_space<vmem>>, %arg4: memref<40x8xbf16, #tpu.memory_space<vmem>>, %arg5: memref<8x1xf32, #tpu.memory_space<vmem>>, %arg6: memref<80x8xbf16, #tpu.memory_space<vmem>>, %arg7: memref<16x1xf32, #tpu.memory_space<vmem>>, %arg8: memref<80x16xbf16, #tpu.memory_space<vmem>>, %arg9: memref<16x1xf32, #tpu.memory_space<vmem>>, %arg10: memref<160x16xbf16, #tpu.memory_space<vmem>>, %arg11: memref<32x1xf32, #tpu.memory_space<vmem>>, %arg12: memref<24x16xbf16, #tpu.memory_space<vmem>>, %arg13: memref<16x16xbf16, #tpu.memory_space<vmem>>, %arg14: memref<8x1xf32, #tpu.memory_space<vmem>>, %arg15: memref<24x32xbf16, #tpu.memory_space<vmem>>, %arg16: memref<16x32xbf16, #tpu.memory_space<vmem>>, %arg17: memref<8x1xf32, #tpu.memory_space<vmem>>, %arg18: memref<48x32xbf16, #tpu.memory_space<vmem>>, %arg19: memref<32x32xbf16, #tpu.memory_space<vmem>>, %arg20: memref<16x1xf32, #tpu.memory_space<vmem>>, %arg21: memref<48x32xbf16, #tpu.memory_space<vmem>>, %arg22: memref<32x32xbf16, #tpu.memory_space<vmem>>, %arg23: memref<16x1xf32, #tpu.memory_space<vmem>>, %arg24: memref<3x8xbf16, #tpu.memory_space<vmem>>, %arg25: memref<3x1xf32, #tpu.memory_space<vmem>>, %arg26: memref<1x3x128xbf16, #tpu.memory_space<vmem>>) attributes {dimension_semantics = [#tpu.dimension_semantics<parallel>], iteration_bounds = array<i64: 2>, scalar_prefetch = 0 : i64, scratch_operands = 0 : i64, tpu.core_type = #tpu.core_type<tc>, window_params = [{transform_indices = @transform_0, window_bounds = array<i64: 1, 4, 128>}, {pipeline_mode = #tpu.pipeline_mode<synchronous>, transform_indices = @transform_1, window_bounds = array<i64: 8, 4>}, {pipeline_mode = #tpu.pipeline_mode<synchronous>, transform_indices = @transform_2, window_bounds = array<i64: 8, 1>}, {pipeline_mode = #tpu.pipeline_mode<synchronous>, transform_indices = @transform_3, window_bounds = array<i64: 40, 8>}, {pipeline_mode = #tpu.pipeline_mode<synchronous>, transform_indices = @transform_4, window_bounds = array<i64: 8, 1>}, {pipeline_mode = #tpu.pipeline_mode<synchronous>, transform_indices = @transform_5, window_bounds = array<i64: 80, 8>}, {pipeline_mode = #tpu.pipeline_mode<synchronous>, transform_indices = @transform_6, window_bounds = array<i64: 16, 1>}, {pipeline_mode = #tpu.pipeline_mode<synchronous>, transform_indices = @transform_7, window_bounds = array<i64: 80, 16>}, {pipeline_mode = #tpu.pipeline_mode<synchronous>, transform_indices = @transform_8, window_bounds = array<i64: 16, 1>}, {pipeline_mode = #tpu.pipeline_mode<synchronous>, transform_indices = @transform_9, window_bounds = array<i64: 160, 16>}, {pipeline_mode = #tpu.pipeline_mode<synchronous>, transform_indices = @transform_10, window_bounds = array<i64: 32, 1>}, {pipeline_mode = #tpu.pipeline_mode<synchronous>, transform_indices = @transform_11, window_bounds = array<i64: 24, 16>}, {pipeline_mode = #tpu.pipeline_mode<synchronous>, transform_indices = @transform_12, window_bounds = array<i64: 16, 16>}, {pipeline_mode = #tpu.pipeline_mode<synchronous>, transform_indices = @transform_13, window_bounds = array<i64: 8, 1>}, {pipeline_mode = #tpu.pipeline_mode<synchronous>, transform_indices = @transform_14, window_bounds = array<i64: 24, 32>}, {pipeline_mode = #tpu.pipeline_mode<synchronous>, transform_indices = @transform_15, window_bounds = array<i64: 16, 32>}, {pipeline_mode = #tpu.pipeline_mode<synchronous>, transform_indices = @transform_16, window_bounds = array<i64: 8, 1>}, {pipeline_mode = #tpu.pipeline_mode<synchronous>, transform_indices = @transform_17, window_bounds = array<i64: 48, 32>}, {pipeline_mode = #tpu.pipeline_mode<synchronous>, transform_indices = @transform_18, window_bounds = array<i64: 32, 32>}, {pipeline_mode = #tpu.pipeline_mode<synchronous>, transform_indices = @transform_19, window_bounds = array<i64: 16, 1>}, {pipeline_mode = #tpu.pipeline_mode<synchronous>, transform_indices = @transform_20, window_bounds = array<i64: 48, 32>}, {pipeline_mode = #tpu.pipeline_mode<synchronous>, transform_indices = @transform_21, window_bounds = array<i64: 32, 32>}, {pipeline_mode = #tpu.pipeline_mode<synchronous>, transform_indices = @transform_22, window_bounds = array<i64: 16, 1>}, {pipeline_mode = #tpu.pipeline_mode<synchronous>, transform_indices = @transform_23, window_bounds = array<i64: 3, 8>}, {pipeline_mode = #tpu.pipeline_mode<synchronous>, transform_indices = @transform_24, window_bounds = array<i64: 3, 1>}, {transform_indices = @transform_25, window_bounds = array<i64: 1, 3, 128>}]} {
    %c0 = arith.constant 0 : index
    %c0_0 = arith.constant 0 : index
    %c0_1 = arith.constant 0 : index
    %0 = vector.load %arg1[%c0, %c0_0, %c0_1] : memref<1x4x128xbf16, #tpu.memory_space<vmem>>, vector<1x4x128xbf16>
    %1 = vector.shape_cast %0 : vector<1x4x128xbf16> to vector<4x128xbf16>
    %c0_2 = arith.constant 0 : index
    %c0_3 = arith.constant 0 : index
    %2 = vector.load %arg2[%c0_2, %c0_3] : memref<8x4xbf16, #tpu.memory_space<vmem>>, vector<8x4xbf16>
    %cst = arith.constant dense<0.000000e+00> : vector<8x128xf32>
    %3 = tpu.matmul %2, %1, %cst {dimension_numbers = #tpu.dot_dimension_numbers<[1], [0], [0], [1], [0, 0, 1, 1], [], []>} : vector<8x4xbf16>, vector<4x128xbf16>, vector<8x128xf32> -> vector<8x128xf32>
    %c0_4 = arith.constant 0 : index
    %c0_5 = arith.constant 0 : index
    %4 = vector.load %arg3[%c0_4, %c0_5] : memref<8x1xf32, #tpu.memory_space<vmem>>, vector<8x1xf32>
    %5 = vector.broadcast %4 : vector<8x1xf32> to vector<8x128xf32>
    %6 = arith.addf %3, %5 : vector<8x128xf32>
    %7 = arith.truncf %6 : vector<8x128xf32> to vector<8x128xbf16>
    %cst_6 = arith.constant 0.000000e+00 : bf16
    %8 = vector.broadcast %cst_6 : bf16 to vector<8x2xbf16>
    %9 = tpu.concatenate %8, %7, %8 in 1 : vector<8x2xbf16>, vector<8x128xbf16>, vector<8x2xbf16> -> vector<8x132xbf16>
    %c0_7 = arith.constant 0 : index
    %c0_8 = arith.constant 0 : index
    %10 = vector.load %arg5[%c0_7, %c0_8] : memref<8x1xf32, #tpu.memory_space<vmem>>, vector<8x1xf32>
    %c0_9 = arith.constant 0 : index
    %c0_10 = arith.constant 0 : index
    %11 = vector.load %arg4[%c0_9, %c0_10] : memref<40x8xbf16, #tpu.memory_space<vmem>>, vector<8x8xbf16>
    %12 = vector.extract_strided_slice %9 {offsets = [0, 0], sizes = [8, 128], strides = [1, 1]} : vector<8x132xbf16> to vector<8x128xbf16>
    %cst_11 = arith.constant dense<0.000000e+00> : vector<8x128xf32>
    %13 = tpu.matmul %11, %12, %cst_11 {dimension_numbers = #tpu.dot_dimension_numbers<[1], [0], [0], [1], [0, 0, 1, 1], [], []>} : vector<8x8xbf16>, vector<8x128xbf16>, vector<8x128xf32> -> vector<8x128xf32>
    %14 = vector.broadcast %10 : vector<8x1xf32> to vector<8x128xf32>
    %15 = arith.addf %14, %13 : vector<8x128xf32>
    %c8 = arith.constant 8 : index
    %c0_12 = arith.constant 0 : index
    %16 = vector.load %arg4[%c8, %c0_12] : memref<40x8xbf16, #tpu.memory_space<vmem>>, vector<8x8xbf16>
    %17 = vector.extract_strided_slice %9 {offsets = [0, 1], sizes = [8, 128], strides = [1, 1]} : vector<8x132xbf16> to vector<8x128xbf16>
    %cst_13 = arith.constant dense<0.000000e+00> : vector<8x128xf32>
    %18 = tpu.matmul %16, %17, %cst_13 {dimension_numbers = #tpu.dot_dimension_numbers<[1], [0], [0], [1], [0, 0, 1, 1], [], []>} : vector<8x8xbf16>, vector<8x128xbf16>, vector<8x128xf32> -> vector<8x128xf32>
    %19 = arith.addf %15, %18 : vector<8x128xf32>
    %c16 = arith.constant 16 : index
    %c0_14 = arith.constant 0 : index
    %20 = vector.load %arg4[%c16, %c0_14] : memref<40x8xbf16, #tpu.memory_space<vmem>>, vector<8x8xbf16>
    %21 = vector.extract_strided_slice %9 {offsets = [0, 2], sizes = [8, 128], strides = [1, 1]} : vector<8x132xbf16> to vector<8x128xbf16>
    %cst_15 = arith.constant dense<0.000000e+00> : vector<8x128xf32>
    %22 = tpu.matmul %20, %21, %cst_15 {dimension_numbers = #tpu.dot_dimension_numbers<[1], [0], [0], [1], [0, 0, 1, 1], [], []>} : vector<8x8xbf16>, vector<8x128xbf16>, vector<8x128xf32> -> vector<8x128xf32>
    %23 = arith.addf %19, %22 : vector<8x128xf32>
    %c24 = arith.constant 24 : index
    %c0_16 = arith.constant 0 : index
    %24 = vector.load %arg4[%c24, %c0_16] : memref<40x8xbf16, #tpu.memory_space<vmem>>, vector<8x8xbf16>
    %25 = vector.extract_strided_slice %9 {offsets = [0, 3], sizes = [8, 128], strides = [1, 1]} : vector<8x132xbf16> to vector<8x128xbf16>
    %cst_17 = arith.constant dense<0.000000e+00> : vector<8x128xf32>
    %26 = tpu.matmul %24, %25, %cst_17 {dimension_numbers = #tpu.dot_dimension_numbers<[1], [0], [0], [1], [0, 0, 1, 1], [], []>} : vector<8x8xbf16>, vector<8x128xbf16>, vector<8x128xf32> -> vector<8x128xf32>
    %27 = arith.addf %23, %26 : vector<8x128xf32>
    %c32 = arith.constant 32 : index
    %c0_18 = arith.constant 0 : index
    %28 = vector.load %arg4[%c32, %c0_18] : memref<40x8xbf16, #tpu.memory_space<vmem>>, vector<8x8xbf16>
    %29 = vector.extract_strided_slice %9 {offsets = [0, 4], sizes = [8, 128], strides = [1, 1]} : vector<8x132xbf16> to vector<8x128xbf16>
    %cst_19 = arith.constant dense<0.000000e+00> : vector<8x128xf32>
    %30 = tpu.matmul %28, %29, %cst_19 {dimension_numbers = #tpu.dot_dimension_numbers<[1], [0], [0], [1], [0, 0, 1, 1], [], []>} : vector<8x8xbf16>, vector<8x128xbf16>, vector<8x128xf32> -> vector<8x128xf32>
    %31 = arith.addf %27, %30 : vector<8x128xf32>
    %cst_20 = arith.constant 0.000000e+00 : f32
    %32 = vector.broadcast %cst_20 : f32 to vector<8x128xf32>
    %33 = arith.maximumf %31, %32 : vector<8x128xf32>
    %34 = arith.truncf %33 : vector<8x128xf32> to vector<8x128xbf16>
    %35 = tpu.iota {dimensions = array<i32: 0>} : vector<128x64xi32>
    %36 = tpu.iota {dimensions = array<i32: 1>} : vector<128x64xi32>
    %c2_i32 = arith.constant 2 : i32
    %37 = vector.broadcast %c2_i32 : i32 to vector<128x64xi32>
    %38 = arith.muli %37, %36 : vector<128x64xi32>
    %39 = arith.cmpi eq, %35, %38 : vector<128x64xi32>
    %cst_21 = arith.constant 1.000000e+00 : f32
    %cst_22 = arith.constant 0.000000e+00 : f32
    %40 = vector.broadcast %cst_21 : f32 to vector<128x64xf32>
    %41 = vector.broadcast %cst_22 : f32 to vector<128x64xf32>
    %42 = arith.select %39, %40, %41 : vector<128x64xi1>, vector<128x64xf32>
    %43 = arith.truncf %42 : vector<128x64xf32> to vector<128x64xbf16>
    %cst_23 = arith.constant dense<0.000000e+00> : vector<8x64xf32>
    %44 = tpu.matmul %34, %43, %cst_23 {dimension_numbers = #tpu.dot_dimension_numbers<[1], [0], [0], [1], [0, 0, 1, 1], [], []>} : vector<8x128xbf16>, vector<128x64xbf16>, vector<8x64xf32> -> vector<8x64xf32>
    %45 = arith.truncf %44 : vector<8x64xf32> to vector<8x64xbf16>
    %cst_24 = arith.constant 0.000000e+00 : bf16
    %46 = vector.broadcast %cst_24 : bf16 to vector<8x2xbf16>
    %47 = tpu.concatenate %46, %45, %46 in 1 : vector<8x2xbf16>, vector<8x64xbf16>, vector<8x2xbf16> -> vector<8x68xbf16>
    %c0_25 = arith.constant 0 : index
    %c0_26 = arith.constant 0 : index
    %48 = vector.load %arg7[%c0_25, %c0_26] : memref<16x1xf32, #tpu.memory_space<vmem>>, vector<16x1xf32>
    %c0_27 = arith.constant 0 : index
    %c0_28 = arith.constant 0 : index
    %49 = vector.load %arg6[%c0_27, %c0_28] : memref<80x8xbf16, #tpu.memory_space<vmem>>, vector<16x8xbf16>
    %50 = vector.extract_strided_slice %47 {offsets = [0, 0], sizes = [8, 64], strides = [1, 1]} : vector<8x68xbf16> to vector<8x64xbf16>
    %cst_29 = arith.constant dense<0.000000e+00> : vector<16x64xf32>
    %51 = tpu.matmul %49, %50, %cst_29 {dimension_numbers = #tpu.dot_dimension_numbers<[1], [0], [0], [1], [0, 0, 1, 1], [], []>} : vector<16x8xbf16>, vector<8x64xbf16>, vector<16x64xf32> -> vector<16x64xf32>
    %52 = vector.broadcast %48 : vector<16x1xf32> to vector<16x64xf32>
    %53 = arith.addf %52, %51 : vector<16x64xf32>
    %c16_30 = arith.constant 16 : index
    %c0_31 = arith.constant 0 : index
    %54 = vector.load %arg6[%c16_30, %c0_31] : memref<80x8xbf16, #tpu.memory_space<vmem>>, vector<16x8xbf16>
    %55 = vector.extract_strided_slice %47 {offsets = [0, 1], sizes = [8, 64], strides = [1, 1]} : vector<8x68xbf16> to vector<8x64xbf16>
    %cst_32 = arith.constant dense<0.000000e+00> : vector<16x64xf32>
    %56 = tpu.matmul %54, %55, %cst_32 {dimension_numbers = #tpu.dot_dimension_numbers<[1], [0], [0], [1], [0, 0, 1, 1], [], []>} : vector<16x8xbf16>, vector<8x64xbf16>, vector<16x64xf32> -> vector<16x64xf32>
    %57 = arith.addf %53, %56 : vector<16x64xf32>
    %c32_33 = arith.constant 32 : index
    %c0_34 = arith.constant 0 : index
    %58 = vector.load %arg6[%c32_33, %c0_34] : memref<80x8xbf16, #tpu.memory_space<vmem>>, vector<16x8xbf16>
    %59 = vector.extract_strided_slice %47 {offsets = [0, 2], sizes = [8, 64], strides = [1, 1]} : vector<8x68xbf16> to vector<8x64xbf16>
    %cst_35 = arith.constant dense<0.000000e+00> : vector<16x64xf32>
    %60 = tpu.matmul %58, %59, %cst_35 {dimension_numbers = #tpu.dot_dimension_numbers<[1], [0], [0], [1], [0, 0, 1, 1], [], []>} : vector<16x8xbf16>, vector<8x64xbf16>, vector<16x64xf32> -> vector<16x64xf32>
    %61 = arith.addf %57, %60 : vector<16x64xf32>
    %c48 = arith.constant 48 : index
    %c0_36 = arith.constant 0 : index
    %62 = vector.load %arg6[%c48, %c0_36] : memref<80x8xbf16, #tpu.memory_space<vmem>>, vector<16x8xbf16>
    %63 = vector.extract_strided_slice %47 {offsets = [0, 3], sizes = [8, 64], strides = [1, 1]} : vector<8x68xbf16> to vector<8x64xbf16>
    %cst_37 = arith.constant dense<0.000000e+00> : vector<16x64xf32>
    %64 = tpu.matmul %62, %63, %cst_37 {dimension_numbers = #tpu.dot_dimension_numbers<[1], [0], [0], [1], [0, 0, 1, 1], [], []>} : vector<16x8xbf16>, vector<8x64xbf16>, vector<16x64xf32> -> vector<16x64xf32>
    %65 = arith.addf %61, %64 : vector<16x64xf32>
    %c64 = arith.constant 64 : index
    %c0_38 = arith.constant 0 : index
    %66 = vector.load %arg6[%c64, %c0_38] : memref<80x8xbf16, #tpu.memory_space<vmem>>, vector<16x8xbf16>
    %67 = vector.extract_strided_slice %47 {offsets = [0, 4], sizes = [8, 64], strides = [1, 1]} : vector<8x68xbf16> to vector<8x64xbf16>
    %cst_39 = arith.constant dense<0.000000e+00> : vector<16x64xf32>
    %68 = tpu.matmul %66, %67, %cst_39 {dimension_numbers = #tpu.dot_dimension_numbers<[1], [0], [0], [1], [0, 0, 1, 1], [], []>} : vector<16x8xbf16>, vector<8x64xbf16>, vector<16x64xf32> -> vector<16x64xf32>
    %69 = arith.addf %65, %68 : vector<16x64xf32>
    %cst_40 = arith.constant 0.000000e+00 : f32
    %70 = vector.broadcast %cst_40 : f32 to vector<16x64xf32>
    %71 = arith.maximumf %69, %70 : vector<16x64xf32>
    %72 = arith.truncf %71 : vector<16x64xf32> to vector<16x64xbf16>
    %73 = tpu.iota {dimensions = array<i32: 0>} : vector<64x32xi32>
    %74 = tpu.iota {dimensions = array<i32: 1>} : vector<64x32xi32>
    %c2_i32_41 = arith.constant 2 : i32
    %75 = vector.broadcast %c2_i32_41 : i32 to vector<64x32xi32>
    %76 = arith.muli %75, %74 : vector<64x32xi32>
    %77 = arith.cmpi eq, %73, %76 : vector<64x32xi32>
    %cst_42 = arith.constant 1.000000e+00 : f32
    %cst_43 = arith.constant 0.000000e+00 : f32
    %78 = vector.broadcast %cst_42 : f32 to vector<64x32xf32>
    %79 = vector.broadcast %cst_43 : f32 to vector<64x32xf32>
    %80 = arith.select %77, %78, %79 : vector<64x32xi1>, vector<64x32xf32>
    %81 = arith.truncf %80 : vector<64x32xf32> to vector<64x32xbf16>
    %cst_44 = arith.constant dense<0.000000e+00> : vector<16x32xf32>
    %82 = tpu.matmul %72, %81, %cst_44 {dimension_numbers = #tpu.dot_dimension_numbers<[1], [0], [0], [1], [0, 0, 1, 1], [], []>} : vector<16x64xbf16>, vector<64x32xbf16>, vector<16x32xf32> -> vector<16x32xf32>
    %83 = arith.truncf %82 : vector<16x32xf32> to vector<16x32xbf16>
    %cst_45 = arith.constant 0.000000e+00 : bf16
    %84 = vector.broadcast %cst_45 : bf16 to vector<16x2xbf16>
    %85 = tpu.concatenate %84, %83, %84 in 1 : vector<16x2xbf16>, vector<16x32xbf16>, vector<16x2xbf16> -> vector<16x36xbf16>
    %c0_46 = arith.constant 0 : index
    %c0_47 = arith.constant 0 : index
    %86 = vector.load %arg9[%c0_46, %c0_47] : memref<16x1xf32, #tpu.memory_space<vmem>>, vector<16x1xf32>
    %c0_48 = arith.constant 0 : index
    %c0_49 = arith.constant 0 : index
    %87 = vector.load %arg8[%c0_48, %c0_49] : memref<80x16xbf16, #tpu.memory_space<vmem>>, vector<16x16xbf16>
    %88 = vector.extract_strided_slice %85 {offsets = [0, 0], sizes = [16, 32], strides = [1, 1]} : vector<16x36xbf16> to vector<16x32xbf16>
    %cst_50 = arith.constant dense<0.000000e+00> : vector<16x32xf32>
    %89 = tpu.matmul %87, %88, %cst_50 {dimension_numbers = #tpu.dot_dimension_numbers<[1], [0], [0], [1], [0, 0, 1, 1], [], []>} : vector<16x16xbf16>, vector<16x32xbf16>, vector<16x32xf32> -> vector<16x32xf32>
    %90 = vector.broadcast %86 : vector<16x1xf32> to vector<16x32xf32>
    %91 = arith.addf %90, %89 : vector<16x32xf32>
    %c16_51 = arith.constant 16 : index
    %c0_52 = arith.constant 0 : index
    %92 = vector.load %arg8[%c16_51, %c0_52] : memref<80x16xbf16, #tpu.memory_space<vmem>>, vector<16x16xbf16>
    %93 = vector.extract_strided_slice %85 {offsets = [0, 1], sizes = [16, 32], strides = [1, 1]} : vector<16x36xbf16> to vector<16x32xbf16>
    %cst_53 = arith.constant dense<0.000000e+00> : vector<16x32xf32>
    %94 = tpu.matmul %92, %93, %cst_53 {dimension_numbers = #tpu.dot_dimension_numbers<[1], [0], [0], [1], [0, 0, 1, 1], [], []>} : vector<16x16xbf16>, vector<16x32xbf16>, vector<16x32xf32> -> vector<16x32xf32>
    %95 = arith.addf %91, %94 : vector<16x32xf32>
    %c32_54 = arith.constant 32 : index
    %c0_55 = arith.constant 0 : index
    %96 = vector.load %arg8[%c32_54, %c0_55] : memref<80x16xbf16, #tpu.memory_space<vmem>>, vector<16x16xbf16>
    %97 = vector.extract_strided_slice %85 {offsets = [0, 2], sizes = [16, 32], strides = [1, 1]} : vector<16x36xbf16> to vector<16x32xbf16>
    %cst_56 = arith.constant dense<0.000000e+00> : vector<16x32xf32>
    %98 = tpu.matmul %96, %97, %cst_56 {dimension_numbers = #tpu.dot_dimension_numbers<[1], [0], [0], [1], [0, 0, 1, 1], [], []>} : vector<16x16xbf16>, vector<16x32xbf16>, vector<16x32xf32> -> vector<16x32xf32>
    %99 = arith.addf %95, %98 : vector<16x32xf32>
    %c48_57 = arith.constant 48 : index
    %c0_58 = arith.constant 0 : index
    %100 = vector.load %arg8[%c48_57, %c0_58] : memref<80x16xbf16, #tpu.memory_space<vmem>>, vector<16x16xbf16>
    %101 = vector.extract_strided_slice %85 {offsets = [0, 3], sizes = [16, 32], strides = [1, 1]} : vector<16x36xbf16> to vector<16x32xbf16>
    %cst_59 = arith.constant dense<0.000000e+00> : vector<16x32xf32>
    %102 = tpu.matmul %100, %101, %cst_59 {dimension_numbers = #tpu.dot_dimension_numbers<[1], [0], [0], [1], [0, 0, 1, 1], [], []>} : vector<16x16xbf16>, vector<16x32xbf16>, vector<16x32xf32> -> vector<16x32xf32>
    %103 = arith.addf %99, %102 : vector<16x32xf32>
    %c64_60 = arith.constant 64 : index
    %c0_61 = arith.constant 0 : index
    %104 = vector.load %arg8[%c64_60, %c0_61] : memref<80x16xbf16, #tpu.memory_space<vmem>>, vector<16x16xbf16>
    %105 = vector.extract_strided_slice %85 {offsets = [0, 4], sizes = [16, 32], strides = [1, 1]} : vector<16x36xbf16> to vector<16x32xbf16>
    %cst_62 = arith.constant dense<0.000000e+00> : vector<16x32xf32>
    %106 = tpu.matmul %104, %105, %cst_62 {dimension_numbers = #tpu.dot_dimension_numbers<[1], [0], [0], [1], [0, 0, 1, 1], [], []>} : vector<16x16xbf16>, vector<16x32xbf16>, vector<16x32xf32> -> vector<16x32xf32>
    %107 = arith.addf %103, %106 : vector<16x32xf32>
    %cst_63 = arith.constant 0.000000e+00 : f32
    %108 = vector.broadcast %cst_63 : f32 to vector<16x32xf32>
    %109 = arith.maximumf %107, %108 : vector<16x32xf32>
    %110 = arith.truncf %109 : vector<16x32xf32> to vector<16x32xbf16>
    %111 = tpu.iota {dimensions = array<i32: 0>} : vector<32x16xi32>
    %112 = tpu.iota {dimensions = array<i32: 1>} : vector<32x16xi32>
    %c2_i32_64 = arith.constant 2 : i32
    %113 = vector.broadcast %c2_i32_64 : i32 to vector<32x16xi32>
    %114 = arith.muli %113, %112 : vector<32x16xi32>
    %115 = arith.cmpi eq, %111, %114 : vector<32x16xi32>
    %cst_65 = arith.constant 1.000000e+00 : f32
    %cst_66 = arith.constant 0.000000e+00 : f32
    %116 = vector.broadcast %cst_65 : f32 to vector<32x16xf32>
    %117 = vector.broadcast %cst_66 : f32 to vector<32x16xf32>
    %118 = arith.select %115, %116, %117 : vector<32x16xi1>, vector<32x16xf32>
    %119 = arith.truncf %118 : vector<32x16xf32> to vector<32x16xbf16>
    %cst_67 = arith.constant dense<0.000000e+00> : vector<16x16xf32>
    %120 = tpu.matmul %110, %119, %cst_67 {dimension_numbers = #tpu.dot_dimension_numbers<[1], [0], [0], [1], [0, 0, 1, 1], [], []>} : vector<16x32xbf16>, vector<32x16xbf16>, vector<16x16xf32> -> vector<16x16xf32>
    %121 = arith.truncf %120 : vector<16x16xf32> to vector<16x16xbf16>
    %cst_68 = arith.constant 0.000000e+00 : bf16
    %122 = vector.broadcast %cst_68 : bf16 to vector<16x2xbf16>
    %123 = tpu.concatenate %122, %121, %122 in 1 : vector<16x2xbf16>, vector<16x16xbf16>, vector<16x2xbf16> -> vector<16x20xbf16>
    %c0_69 = arith.constant 0 : index
    %c0_70 = arith.constant 0 : index
    %124 = vector.load %arg11[%c0_69, %c0_70] : memref<32x1xf32, #tpu.memory_space<vmem>>, vector<32x1xf32>
    %c0_71 = arith.constant 0 : index
    %c0_72 = arith.constant 0 : index
    %125 = vector.load %arg10[%c0_71, %c0_72] : memref<160x16xbf16, #tpu.memory_space<vmem>>, vector<32x16xbf16>
    %126 = vector.extract_strided_slice %123 {offsets = [0, 0], sizes = [16, 16], strides = [1, 1]} : vector<16x20xbf16> to vector<16x16xbf16>
    %cst_73 = arith.constant dense<0.000000e+00> : vector<32x16xf32>
    %127 = tpu.matmul %125, %126, %cst_73 {dimension_numbers = #tpu.dot_dimension_numbers<[1], [0], [0], [1], [0, 0, 1, 1], [], []>} : vector<32x16xbf16>, vector<16x16xbf16>, vector<32x16xf32> -> vector<32x16xf32>
    %128 = vector.broadcast %124 : vector<32x1xf32> to vector<32x16xf32>
    %129 = arith.addf %128, %127 : vector<32x16xf32>
    %c32_74 = arith.constant 32 : index
    %c0_75 = arith.constant 0 : index
    %130 = vector.load %arg10[%c32_74, %c0_75] : memref<160x16xbf16, #tpu.memory_space<vmem>>, vector<32x16xbf16>
    %131 = vector.extract_strided_slice %123 {offsets = [0, 1], sizes = [16, 16], strides = [1, 1]} : vector<16x20xbf16> to vector<16x16xbf16>
    %cst_76 = arith.constant dense<0.000000e+00> : vector<32x16xf32>
    %132 = tpu.matmul %130, %131, %cst_76 {dimension_numbers = #tpu.dot_dimension_numbers<[1], [0], [0], [1], [0, 0, 1, 1], [], []>} : vector<32x16xbf16>, vector<16x16xbf16>, vector<32x16xf32> -> vector<32x16xf32>
    %133 = arith.addf %129, %132 : vector<32x16xf32>
    %c64_77 = arith.constant 64 : index
    %c0_78 = arith.constant 0 : index
    %134 = vector.load %arg10[%c64_77, %c0_78] : memref<160x16xbf16, #tpu.memory_space<vmem>>, vector<32x16xbf16>
    %135 = vector.extract_strided_slice %123 {offsets = [0, 2], sizes = [16, 16], strides = [1, 1]} : vector<16x20xbf16> to vector<16x16xbf16>
    %cst_79 = arith.constant dense<0.000000e+00> : vector<32x16xf32>
    %136 = tpu.matmul %134, %135, %cst_79 {dimension_numbers = #tpu.dot_dimension_numbers<[1], [0], [0], [1], [0, 0, 1, 1], [], []>} : vector<32x16xbf16>, vector<16x16xbf16>, vector<32x16xf32> -> vector<32x16xf32>
    %137 = arith.addf %133, %136 : vector<32x16xf32>
    %c96 = arith.constant 96 : index
    %c0_80 = arith.constant 0 : index
    %138 = vector.load %arg10[%c96, %c0_80] : memref<160x16xbf16, #tpu.memory_space<vmem>>, vector<32x16xbf16>
    %139 = vector.extract_strided_slice %123 {offsets = [0, 3], sizes = [16, 16], strides = [1, 1]} : vector<16x20xbf16> to vector<16x16xbf16>
    %cst_81 = arith.constant dense<0.000000e+00> : vector<32x16xf32>
    %140 = tpu.matmul %138, %139, %cst_81 {dimension_numbers = #tpu.dot_dimension_numbers<[1], [0], [0], [1], [0, 0, 1, 1], [], []>} : vector<32x16xbf16>, vector<16x16xbf16>, vector<32x16xf32> -> vector<32x16xf32>
    %141 = arith.addf %137, %140 : vector<32x16xf32>
    %c128 = arith.constant 128 : index
    %c0_82 = arith.constant 0 : index
    %142 = vector.load %arg10[%c128, %c0_82] : memref<160x16xbf16, #tpu.memory_space<vmem>>, vector<32x16xbf16>
    %143 = vector.extract_strided_slice %123 {offsets = [0, 4], sizes = [16, 16], strides = [1, 1]} : vector<16x20xbf16> to vector<16x16xbf16>
    %cst_83 = arith.constant dense<0.000000e+00> : vector<32x16xf32>
    %144 = tpu.matmul %142, %143, %cst_83 {dimension_numbers = #tpu.dot_dimension_numbers<[1], [0], [0], [1], [0, 0, 1, 1], [], []>} : vector<32x16xbf16>, vector<16x16xbf16>, vector<32x16xf32> -> vector<32x16xf32>
    %145 = arith.addf %141, %144 : vector<32x16xf32>
    %cst_84 = arith.constant 0.000000e+00 : f32
    %146 = vector.broadcast %cst_84 : f32 to vector<32x16xf32>
    %147 = arith.maximumf %145, %146 : vector<32x16xf32>
    %148 = arith.truncf %147 : vector<32x16xf32> to vector<32x16xbf16>
    %149 = tpu.iota {dimensions = array<i32: 0>} : vector<16x8xi32>
    %150 = tpu.iota {dimensions = array<i32: 1>} : vector<16x8xi32>
    %c2_i32_85 = arith.constant 2 : i32
    %151 = vector.broadcast %c2_i32_85 : i32 to vector<16x8xi32>
    %152 = arith.muli %151, %150 : vector<16x8xi32>
    %153 = arith.cmpi eq, %149, %152 : vector<16x8xi32>
    %cst_86 = arith.constant 1.000000e+00 : f32
    %cst_87 = arith.constant 0.000000e+00 : f32
    %154 = vector.broadcast %cst_86 : f32 to vector<16x8xf32>
    %155 = vector.broadcast %cst_87 : f32 to vector<16x8xf32>
    %156 = arith.select %153, %154, %155 : vector<16x8xi1>, vector<16x8xf32>
    %157 = arith.truncf %156 : vector<16x8xf32> to vector<16x8xbf16>
    %cst_88 = arith.constant dense<0.000000e+00> : vector<32x8xf32>
    %158 = tpu.matmul %148, %157, %cst_88 {dimension_numbers = #tpu.dot_dimension_numbers<[1], [0], [0], [1], [0, 0, 1, 1], [], []>} : vector<32x16xbf16>, vector<16x8xbf16>, vector<32x8xf32> -> vector<32x8xf32>
    %159 = arith.truncf %158 : vector<32x8xf32> to vector<32x8xbf16>
    %cst_89 = arith.constant 0.000000e+00 : bf16
    %160 = vector.broadcast %cst_89 : bf16 to vector<32x1xbf16>
    %161 = tpu.concatenate %160, %159, %160 in 1 : vector<32x1xbf16>, vector<32x8xbf16>, vector<32x1xbf16> -> vector<32x10xbf16>
    %162 = vector.extract_strided_slice %161 {offsets = [0, 0], sizes = [32, 8], strides = [1, 1]} : vector<32x10xbf16> to vector<32x8xbf16>
    %163 = vector.extract_strided_slice %161 {offsets = [0, 1], sizes = [32, 8], strides = [1, 1]} : vector<32x10xbf16> to vector<32x8xbf16>
    %164 = vector.extract_strided_slice %161 {offsets = [0, 2], sizes = [32, 8], strides = [1, 1]} : vector<32x10xbf16> to vector<32x8xbf16>
    %c0_90 = arith.constant 0 : index
    %c0_91 = arith.constant 0 : index
    %165 = vector.load %arg23[%c0_90, %c0_91] : memref<16x1xf32, #tpu.memory_space<vmem>>, vector<16x1xf32>
    %c0_92 = arith.constant 0 : index
    %c0_93 = arith.constant 0 : index
    %166 = vector.load %arg21[%c0_92, %c0_93] : memref<48x32xbf16, #tpu.memory_space<vmem>>, vector<16x32xbf16>
    %cst_94 = arith.constant dense<0.000000e+00> : vector<16x8xf32>
    %167 = tpu.matmul %166, %162, %cst_94 {dimension_numbers = #tpu.dot_dimension_numbers<[1], [0], [0], [1], [0, 0, 1, 1], [], []>} : vector<16x32xbf16>, vector<32x8xbf16>, vector<16x8xf32> -> vector<16x8xf32>
    %168 = vector.broadcast %165 : vector<16x1xf32> to vector<16x8xf32>
    %169 = arith.addf %168, %167 : vector<16x8xf32>
    %c16_95 = arith.constant 16 : index
    %c0_96 = arith.constant 0 : index
    %170 = vector.load %arg21[%c16_95, %c0_96] : memref<48x32xbf16, #tpu.memory_space<vmem>>, vector<16x32xbf16>
    %cst_97 = arith.constant dense<0.000000e+00> : vector<16x8xf32>
    %171 = tpu.matmul %170, %163, %cst_97 {dimension_numbers = #tpu.dot_dimension_numbers<[1], [0], [0], [1], [0, 0, 1, 1], [], []>} : vector<16x32xbf16>, vector<32x8xbf16>, vector<16x8xf32> -> vector<16x8xf32>
    %172 = arith.addf %169, %171 : vector<16x8xf32>
    %c32_98 = arith.constant 32 : index
    %c0_99 = arith.constant 0 : index
    %173 = vector.load %arg21[%c32_98, %c0_99] : memref<48x32xbf16, #tpu.memory_space<vmem>>, vector<16x32xbf16>
    %cst_100 = arith.constant dense<0.000000e+00> : vector<16x8xf32>
    %174 = tpu.matmul %173, %164, %cst_100 {dimension_numbers = #tpu.dot_dimension_numbers<[1], [0], [0], [1], [0, 0, 1, 1], [], []>} : vector<16x32xbf16>, vector<32x8xbf16>, vector<16x8xf32> -> vector<16x8xf32>
    %175 = arith.addf %172, %174 : vector<16x8xf32>
    %c0_101 = arith.constant 0 : index
    %c0_102 = arith.constant 0 : index
    %176 = vector.load %arg23[%c0_101, %c0_102] : memref<16x1xf32, #tpu.memory_space<vmem>>, vector<16x1xf32>
    %c0_103 = arith.constant 0 : index
    %c0_104 = arith.constant 0 : index
    %177 = vector.load %arg22[%c0_103, %c0_104] : memref<32x32xbf16, #tpu.memory_space<vmem>>, vector<16x32xbf16>
    %cst_105 = arith.constant dense<0.000000e+00> : vector<16x8xf32>
    %178 = tpu.matmul %177, %163, %cst_105 {dimension_numbers = #tpu.dot_dimension_numbers<[1], [0], [0], [1], [0, 0, 1, 1], [], []>} : vector<16x32xbf16>, vector<32x8xbf16>, vector<16x8xf32> -> vector<16x8xf32>
    %179 = vector.broadcast %176 : vector<16x1xf32> to vector<16x8xf32>
    %180 = arith.addf %179, %178 : vector<16x8xf32>
    %c16_106 = arith.constant 16 : index
    %c0_107 = arith.constant 0 : index
    %181 = vector.load %arg22[%c16_106, %c0_107] : memref<32x32xbf16, #tpu.memory_space<vmem>>, vector<16x32xbf16>
    %cst_108 = arith.constant dense<0.000000e+00> : vector<16x8xf32>
    %182 = tpu.matmul %181, %164, %cst_108 {dimension_numbers = #tpu.dot_dimension_numbers<[1], [0], [0], [1], [0, 0, 1, 1], [], []>} : vector<16x32xbf16>, vector<32x8xbf16>, vector<16x8xf32> -> vector<16x8xf32>
    %183 = arith.addf %180, %182 : vector<16x8xf32>
    %cst_109 = arith.constant 0.000000e+00 : f32
    %184 = vector.broadcast %cst_109 : f32 to vector<16x8xf32>
    %185 = arith.maximumf %175, %184 : vector<16x8xf32>
    %186 = arith.truncf %185 : vector<16x8xf32> to vector<16x8xbf16>
    %cst_110 = arith.constant 0.000000e+00 : f32
    %187 = vector.broadcast %cst_110 : f32 to vector<16x8xf32>
    %188 = arith.maximumf %183, %187 : vector<16x8xf32>
    %189 = arith.truncf %188 : vector<16x8xf32> to vector<16x8xbf16>
    %190 = tpu.iota {dimensions = array<i32: 0>} : vector<8x16xi32>
    %191 = tpu.iota {dimensions = array<i32: 1>} : vector<8x16xi32>
    %c2_i32_111 = arith.constant 2 : i32
    %192 = vector.broadcast %c2_i32_111 : i32 to vector<8x16xi32>
    %193 = arith.muli %192, %190 : vector<8x16xi32>
    %194 = arith.cmpi eq, %191, %193 : vector<8x16xi32>
    %cst_112 = arith.constant 1.000000e+00 : f32
    %cst_113 = arith.constant 0.000000e+00 : f32
    %195 = vector.broadcast %cst_112 : f32 to vector<8x16xf32>
    %196 = vector.broadcast %cst_113 : f32 to vector<8x16xf32>
    %197 = arith.select %194, %195, %196 : vector<8x16xi1>, vector<8x16xf32>
    %198 = arith.truncf %197 : vector<8x16xf32> to vector<8x16xbf16>
    %c2_i32_114 = arith.constant 2 : i32
    %199 = vector.broadcast %c2_i32_114 : i32 to vector<8x16xi32>
    %200 = arith.muli %199, %190 : vector<8x16xi32>
    %c1_i32 = arith.constant 1 : i32
    %201 = vector.broadcast %c1_i32 : i32 to vector<8x16xi32>
    %202 = arith.addi %200, %201 : vector<8x16xi32>
    %203 = arith.cmpi eq, %191, %202 : vector<8x16xi32>
    %cst_115 = arith.constant 1.000000e+00 : f32
    %cst_116 = arith.constant 0.000000e+00 : f32
    %204 = vector.broadcast %cst_115 : f32 to vector<8x16xf32>
    %205 = vector.broadcast %cst_116 : f32 to vector<8x16xf32>
    %206 = arith.select %203, %204, %205 : vector<8x16xi1>, vector<8x16xf32>
    %207 = arith.truncf %206 : vector<8x16xf32> to vector<8x16xbf16>
    %cst_117 = arith.constant dense<0.000000e+00> : vector<16x16xf32>
    %208 = tpu.matmul %186, %198, %cst_117 {dimension_numbers = #tpu.dot_dimension_numbers<[1], [0], [0], [1], [0, 0, 1, 1], [], []>} : vector<16x8xbf16>, vector<8x16xbf16>, vector<16x16xf32> -> vector<16x16xf32>
    %cst_118 = arith.constant dense<0.000000e+00> : vector<16x16xf32>
    %209 = tpu.matmul %189, %207, %cst_118 {dimension_numbers = #tpu.dot_dimension_numbers<[1], [0], [0], [1], [0, 0, 1, 1], [], []>} : vector<16x8xbf16>, vector<8x16xbf16>, vector<16x16xf32> -> vector<16x16xf32>
    %210 = arith.addf %208, %209 : vector<16x16xf32>
    %211 = arith.truncf %210 : vector<16x16xf32> to vector<16x16xbf16>
    %212 = tpu.concatenate %121, %211 in 0 : vector<16x16xbf16>, vector<16x16xbf16> -> vector<32x16xbf16>
    %cst_119 = arith.constant 0.000000e+00 : bf16
    %213 = vector.broadcast %cst_119 : bf16 to vector<32x1xbf16>
    %214 = tpu.concatenate %213, %212, %213 in 1 : vector<32x1xbf16>, vector<32x16xbf16>, vector<32x1xbf16> -> vector<32x18xbf16>
    %215 = vector.extract_strided_slice %214 {offsets = [0, 0], sizes = [32, 16], strides = [1, 1]} : vector<32x18xbf16> to vector<32x16xbf16>
    %216 = vector.extract_strided_slice %214 {offsets = [0, 1], sizes = [32, 16], strides = [1, 1]} : vector<32x18xbf16> to vector<32x16xbf16>
    %217 = vector.extract_strided_slice %214 {offsets = [0, 2], sizes = [32, 16], strides = [1, 1]} : vector<32x18xbf16> to vector<32x16xbf16>
    %c0_120 = arith.constant 0 : index
    %c0_121 = arith.constant 0 : index
    %218 = vector.load %arg20[%c0_120, %c0_121] : memref<16x1xf32, #tpu.memory_space<vmem>>, vector<16x1xf32>
    %c0_122 = arith.constant 0 : index
    %c0_123 = arith.constant 0 : index
    %219 = vector.load %arg18[%c0_122, %c0_123] : memref<48x32xbf16, #tpu.memory_space<vmem>>, vector<16x32xbf16>
    %cst_124 = arith.constant dense<0.000000e+00> : vector<16x16xf32>
    %220 = tpu.matmul %219, %215, %cst_124 {dimension_numbers = #tpu.dot_dimension_numbers<[1], [0], [0], [1], [0, 0, 1, 1], [], []>} : vector<16x32xbf16>, vector<32x16xbf16>, vector<16x16xf32> -> vector<16x16xf32>
    %221 = vector.broadcast %218 : vector<16x1xf32> to vector<16x16xf32>
    %222 = arith.addf %221, %220 : vector<16x16xf32>
    %c16_125 = arith.constant 16 : index
    %c0_126 = arith.constant 0 : index
    %223 = vector.load %arg18[%c16_125, %c0_126] : memref<48x32xbf16, #tpu.memory_space<vmem>>, vector<16x32xbf16>
    %cst_127 = arith.constant dense<0.000000e+00> : vector<16x16xf32>
    %224 = tpu.matmul %223, %216, %cst_127 {dimension_numbers = #tpu.dot_dimension_numbers<[1], [0], [0], [1], [0, 0, 1, 1], [], []>} : vector<16x32xbf16>, vector<32x16xbf16>, vector<16x16xf32> -> vector<16x16xf32>
    %225 = arith.addf %222, %224 : vector<16x16xf32>
    %c32_128 = arith.constant 32 : index
    %c0_129 = arith.constant 0 : index
    %226 = vector.load %arg18[%c32_128, %c0_129] : memref<48x32xbf16, #tpu.memory_space<vmem>>, vector<16x32xbf16>
    %cst_130 = arith.constant dense<0.000000e+00> : vector<16x16xf32>
    %227 = tpu.matmul %226, %217, %cst_130 {dimension_numbers = #tpu.dot_dimension_numbers<[1], [0], [0], [1], [0, 0, 1, 1], [], []>} : vector<16x32xbf16>, vector<32x16xbf16>, vector<16x16xf32> -> vector<16x16xf32>
    %228 = arith.addf %225, %227 : vector<16x16xf32>
    %c0_131 = arith.constant 0 : index
    %c0_132 = arith.constant 0 : index
    %229 = vector.load %arg20[%c0_131, %c0_132] : memref<16x1xf32, #tpu.memory_space<vmem>>, vector<16x1xf32>
    %c0_133 = arith.constant 0 : index
    %c0_134 = arith.constant 0 : index
    %230 = vector.load %arg19[%c0_133, %c0_134] : memref<32x32xbf16, #tpu.memory_space<vmem>>, vector<16x32xbf16>
    %cst_135 = arith.constant dense<0.000000e+00> : vector<16x16xf32>
    %231 = tpu.matmul %230, %216, %cst_135 {dimension_numbers = #tpu.dot_dimension_numbers<[1], [0], [0], [1], [0, 0, 1, 1], [], []>} : vector<16x32xbf16>, vector<32x16xbf16>, vector<16x16xf32> -> vector<16x16xf32>
    %232 = vector.broadcast %229 : vector<16x1xf32> to vector<16x16xf32>
    %233 = arith.addf %232, %231 : vector<16x16xf32>
    %c16_136 = arith.constant 16 : index
    %c0_137 = arith.constant 0 : index
    %234 = vector.load %arg19[%c16_136, %c0_137] : memref<32x32xbf16, #tpu.memory_space<vmem>>, vector<16x32xbf16>
    %cst_138 = arith.constant dense<0.000000e+00> : vector<16x16xf32>
    %235 = tpu.matmul %234, %217, %cst_138 {dimension_numbers = #tpu.dot_dimension_numbers<[1], [0], [0], [1], [0, 0, 1, 1], [], []>} : vector<16x32xbf16>, vector<32x16xbf16>, vector<16x16xf32> -> vector<16x16xf32>
    %236 = arith.addf %233, %235 : vector<16x16xf32>
    %cst_139 = arith.constant 0.000000e+00 : f32
    %237 = vector.broadcast %cst_139 : f32 to vector<16x16xf32>
    %238 = arith.maximumf %228, %237 : vector<16x16xf32>
    %239 = arith.truncf %238 : vector<16x16xf32> to vector<16x16xbf16>
    %cst_140 = arith.constant 0.000000e+00 : f32
    %240 = vector.broadcast %cst_140 : f32 to vector<16x16xf32>
    %241 = arith.maximumf %236, %240 : vector<16x16xf32>
    %242 = arith.truncf %241 : vector<16x16xf32> to vector<16x16xbf16>
    %243 = tpu.iota {dimensions = array<i32: 0>} : vector<16x32xi32>
    %244 = tpu.iota {dimensions = array<i32: 1>} : vector<16x32xi32>
    %c2_i32_141 = arith.constant 2 : i32
    %245 = vector.broadcast %c2_i32_141 : i32 to vector<16x32xi32>
    %246 = arith.muli %245, %243 : vector<16x32xi32>
    %247 = arith.cmpi eq, %244, %246 : vector<16x32xi32>
    %cst_142 = arith.constant 1.000000e+00 : f32
    %cst_143 = arith.constant 0.000000e+00 : f32
    %248 = vector.broadcast %cst_142 : f32 to vector<16x32xf32>
    %249 = vector.broadcast %cst_143 : f32 to vector<16x32xf32>
    %250 = arith.select %247, %248, %249 : vector<16x32xi1>, vector<16x32xf32>
    %251 = arith.truncf %250 : vector<16x32xf32> to vector<16x32xbf16>
    %c2_i32_144 = arith.constant 2 : i32
    %252 = vector.broadcast %c2_i32_144 : i32 to vector<16x32xi32>
    %253 = arith.muli %252, %243 : vector<16x32xi32>
    %c1_i32_145 = arith.constant 1 : i32
    %254 = vector.broadcast %c1_i32_145 : i32 to vector<16x32xi32>
    %255 = arith.addi %253, %254 : vector<16x32xi32>
    %256 = arith.cmpi eq, %244, %255 : vector<16x32xi32>
    %cst_146 = arith.constant 1.000000e+00 : f32
    %cst_147 = arith.constant 0.000000e+00 : f32
    %257 = vector.broadcast %cst_146 : f32 to vector<16x32xf32>
    %258 = vector.broadcast %cst_147 : f32 to vector<16x32xf32>
    %259 = arith.select %256, %257, %258 : vector<16x32xi1>, vector<16x32xf32>
    %260 = arith.truncf %259 : vector<16x32xf32> to vector<16x32xbf16>
    %cst_148 = arith.constant dense<0.000000e+00> : vector<16x32xf32>
    %261 = tpu.matmul %239, %251, %cst_148 {dimension_numbers = #tpu.dot_dimension_numbers<[1], [0], [0], [1], [0, 0, 1, 1], [], []>} : vector<16x16xbf16>, vector<16x32xbf16>, vector<16x32xf32> -> vector<16x32xf32>
    %cst_149 = arith.constant dense<0.000000e+00> : vector<16x32xf32>
    %262 = tpu.matmul %242, %260, %cst_149 {dimension_numbers = #tpu.dot_dimension_numbers<[1], [0], [0], [1], [0, 0, 1, 1], [], []>} : vector<16x16xbf16>, vector<16x32xbf16>, vector<16x32xf32> -> vector<16x32xf32>
    %263 = arith.addf %261, %262 : vector<16x32xf32>
    %264 = arith.truncf %263 : vector<16x32xf32> to vector<16x32xbf16>
    %265 = tpu.concatenate %83, %264 in 0 : vector<16x32xbf16>, vector<16x32xbf16> -> vector<32x32xbf16>
    %cst_150 = arith.constant 0.000000e+00 : bf16
    %266 = vector.broadcast %cst_150 : bf16 to vector<32x1xbf16>
    %267 = tpu.concatenate %266, %265, %266 in 1 : vector<32x1xbf16>, vector<32x32xbf16>, vector<32x1xbf16> -> vector<32x34xbf16>
    %268 = vector.extract_strided_slice %267 {offsets = [0, 0], sizes = [32, 32], strides = [1, 1]} : vector<32x34xbf16> to vector<32x32xbf16>
    %269 = vector.extract_strided_slice %267 {offsets = [0, 1], sizes = [32, 32], strides = [1, 1]} : vector<32x34xbf16> to vector<32x32xbf16>
    %270 = vector.extract_strided_slice %267 {offsets = [0, 2], sizes = [32, 32], strides = [1, 1]} : vector<32x34xbf16> to vector<32x32xbf16>
    %c0_151 = arith.constant 0 : index
    %c0_152 = arith.constant 0 : index
    %271 = vector.load %arg17[%c0_151, %c0_152] : memref<8x1xf32, #tpu.memory_space<vmem>>, vector<8x1xf32>
    %c0_153 = arith.constant 0 : index
    %c0_154 = arith.constant 0 : index
    %272 = vector.load %arg15[%c0_153, %c0_154] : memref<24x32xbf16, #tpu.memory_space<vmem>>, vector<8x32xbf16>
    %cst_155 = arith.constant dense<0.000000e+00> : vector<8x32xf32>
    %273 = tpu.matmul %272, %268, %cst_155 {dimension_numbers = #tpu.dot_dimension_numbers<[1], [0], [0], [1], [0, 0, 1, 1], [], []>} : vector<8x32xbf16>, vector<32x32xbf16>, vector<8x32xf32> -> vector<8x32xf32>
    %274 = vector.broadcast %271 : vector<8x1xf32> to vector<8x32xf32>
    %275 = arith.addf %274, %273 : vector<8x32xf32>
    %c8_156 = arith.constant 8 : index
    %c0_157 = arith.constant 0 : index
    %276 = vector.load %arg15[%c8_156, %c0_157] : memref<24x32xbf16, #tpu.memory_space<vmem>>, vector<8x32xbf16>
    %cst_158 = arith.constant dense<0.000000e+00> : vector<8x32xf32>
    %277 = tpu.matmul %276, %269, %cst_158 {dimension_numbers = #tpu.dot_dimension_numbers<[1], [0], [0], [1], [0, 0, 1, 1], [], []>} : vector<8x32xbf16>, vector<32x32xbf16>, vector<8x32xf32> -> vector<8x32xf32>
    %278 = arith.addf %275, %277 : vector<8x32xf32>
    %c16_159 = arith.constant 16 : index
    %c0_160 = arith.constant 0 : index
    %279 = vector.load %arg15[%c16_159, %c0_160] : memref<24x32xbf16, #tpu.memory_space<vmem>>, vector<8x32xbf16>
    %cst_161 = arith.constant dense<0.000000e+00> : vector<8x32xf32>
    %280 = tpu.matmul %279, %270, %cst_161 {dimension_numbers = #tpu.dot_dimension_numbers<[1], [0], [0], [1], [0, 0, 1, 1], [], []>} : vector<8x32xbf16>, vector<32x32xbf16>, vector<8x32xf32> -> vector<8x32xf32>
    %281 = arith.addf %278, %280 : vector<8x32xf32>
    %c0_162 = arith.constant 0 : index
    %c0_163 = arith.constant 0 : index
    %282 = vector.load %arg17[%c0_162, %c0_163] : memref<8x1xf32, #tpu.memory_space<vmem>>, vector<8x1xf32>
    %c0_164 = arith.constant 0 : index
    %c0_165 = arith.constant 0 : index
    %283 = vector.load %arg16[%c0_164, %c0_165] : memref<16x32xbf16, #tpu.memory_space<vmem>>, vector<8x32xbf16>
    %cst_166 = arith.constant dense<0.000000e+00> : vector<8x32xf32>
    %284 = tpu.matmul %283, %269, %cst_166 {dimension_numbers = #tpu.dot_dimension_numbers<[1], [0], [0], [1], [0, 0, 1, 1], [], []>} : vector<8x32xbf16>, vector<32x32xbf16>, vector<8x32xf32> -> vector<8x32xf32>
    %285 = vector.broadcast %282 : vector<8x1xf32> to vector<8x32xf32>
    %286 = arith.addf %285, %284 : vector<8x32xf32>
    %c8_167 = arith.constant 8 : index
    %c0_168 = arith.constant 0 : index
    %287 = vector.load %arg16[%c8_167, %c0_168] : memref<16x32xbf16, #tpu.memory_space<vmem>>, vector<8x32xbf16>
    %cst_169 = arith.constant dense<0.000000e+00> : vector<8x32xf32>
    %288 = tpu.matmul %287, %270, %cst_169 {dimension_numbers = #tpu.dot_dimension_numbers<[1], [0], [0], [1], [0, 0, 1, 1], [], []>} : vector<8x32xbf16>, vector<32x32xbf16>, vector<8x32xf32> -> vector<8x32xf32>
    %289 = arith.addf %286, %288 : vector<8x32xf32>
    %cst_170 = arith.constant 0.000000e+00 : f32
    %290 = vector.broadcast %cst_170 : f32 to vector<8x32xf32>
    %291 = arith.maximumf %281, %290 : vector<8x32xf32>
    %292 = arith.truncf %291 : vector<8x32xf32> to vector<8x32xbf16>
    %cst_171 = arith.constant 0.000000e+00 : f32
    %293 = vector.broadcast %cst_171 : f32 to vector<8x32xf32>
    %294 = arith.maximumf %289, %293 : vector<8x32xf32>
    %295 = arith.truncf %294 : vector<8x32xf32> to vector<8x32xbf16>
    %296 = tpu.iota {dimensions = array<i32: 0>} : vector<32x64xi32>
    %297 = tpu.iota {dimensions = array<i32: 1>} : vector<32x64xi32>
    %c2_i32_172 = arith.constant 2 : i32
    %298 = vector.broadcast %c2_i32_172 : i32 to vector<32x64xi32>
    %299 = arith.muli %298, %296 : vector<32x64xi32>
    %300 = arith.cmpi eq, %297, %299 : vector<32x64xi32>
    %cst_173 = arith.constant 1.000000e+00 : f32
    %cst_174 = arith.constant 0.000000e+00 : f32
    %301 = vector.broadcast %cst_173 : f32 to vector<32x64xf32>
    %302 = vector.broadcast %cst_174 : f32 to vector<32x64xf32>
    %303 = arith.select %300, %301, %302 : vector<32x64xi1>, vector<32x64xf32>
    %304 = arith.truncf %303 : vector<32x64xf32> to vector<32x64xbf16>
    %c2_i32_175 = arith.constant 2 : i32
    %305 = vector.broadcast %c2_i32_175 : i32 to vector<32x64xi32>
    %306 = arith.muli %305, %296 : vector<32x64xi32>
    %c1_i32_176 = arith.constant 1 : i32
    %307 = vector.broadcast %c1_i32_176 : i32 to vector<32x64xi32>
    %308 = arith.addi %306, %307 : vector<32x64xi32>
    %309 = arith.cmpi eq, %297, %308 : vector<32x64xi32>
    %cst_177 = arith.constant 1.000000e+00 : f32
    %cst_178 = arith.constant 0.000000e+00 : f32
    %310 = vector.broadcast %cst_177 : f32 to vector<32x64xf32>
    %311 = vector.broadcast %cst_178 : f32 to vector<32x64xf32>
    %312 = arith.select %309, %310, %311 : vector<32x64xi1>, vector<32x64xf32>
    %313 = arith.truncf %312 : vector<32x64xf32> to vector<32x64xbf16>
    %cst_179 = arith.constant dense<0.000000e+00> : vector<8x64xf32>
    %314 = tpu.matmul %292, %304, %cst_179 {dimension_numbers = #tpu.dot_dimension_numbers<[1], [0], [0], [1], [0, 0, 1, 1], [], []>} : vector<8x32xbf16>, vector<32x64xbf16>, vector<8x64xf32> -> vector<8x64xf32>
    %cst_180 = arith.constant dense<0.000000e+00> : vector<8x64xf32>
    %315 = tpu.matmul %295, %313, %cst_180 {dimension_numbers = #tpu.dot_dimension_numbers<[1], [0], [0], [1], [0, 0, 1, 1], [], []>} : vector<8x32xbf16>, vector<32x64xbf16>, vector<8x64xf32> -> vector<8x64xf32>
    %316 = arith.addf %314, %315 : vector<8x64xf32>
    %317 = arith.truncf %316 : vector<8x64xf32> to vector<8x64xbf16>
    %318 = tpu.concatenate %45, %317 in 0 : vector<8x64xbf16>, vector<8x64xbf16> -> vector<16x64xbf16>
    %cst_181 = arith.constant 0.000000e+00 : bf16
    %319 = vector.broadcast %cst_181 : bf16 to vector<16x1xbf16>
    %320 = tpu.concatenate %319, %318, %319 in 1 : vector<16x1xbf16>, vector<16x64xbf16>, vector<16x1xbf16> -> vector<16x66xbf16>
    %321 = vector.extract_strided_slice %320 {offsets = [0, 0], sizes = [16, 64], strides = [1, 1]} : vector<16x66xbf16> to vector<16x64xbf16>
    %322 = vector.extract_strided_slice %320 {offsets = [0, 1], sizes = [16, 64], strides = [1, 1]} : vector<16x66xbf16> to vector<16x64xbf16>
    %323 = vector.extract_strided_slice %320 {offsets = [0, 2], sizes = [16, 64], strides = [1, 1]} : vector<16x66xbf16> to vector<16x64xbf16>
    %c0_182 = arith.constant 0 : index
    %c0_183 = arith.constant 0 : index
    %324 = vector.load %arg14[%c0_182, %c0_183] : memref<8x1xf32, #tpu.memory_space<vmem>>, vector<8x1xf32>
    %c0_184 = arith.constant 0 : index
    %c0_185 = arith.constant 0 : index
    %325 = vector.load %arg12[%c0_184, %c0_185] : memref<24x16xbf16, #tpu.memory_space<vmem>>, vector<8x16xbf16>
    %cst_186 = arith.constant dense<0.000000e+00> : vector<8x64xf32>
    %326 = tpu.matmul %325, %321, %cst_186 {dimension_numbers = #tpu.dot_dimension_numbers<[1], [0], [0], [1], [0, 0, 1, 1], [], []>} : vector<8x16xbf16>, vector<16x64xbf16>, vector<8x64xf32> -> vector<8x64xf32>
    %327 = vector.broadcast %324 : vector<8x1xf32> to vector<8x64xf32>
    %328 = arith.addf %327, %326 : vector<8x64xf32>
    %c8_187 = arith.constant 8 : index
    %c0_188 = arith.constant 0 : index
    %329 = vector.load %arg12[%c8_187, %c0_188] : memref<24x16xbf16, #tpu.memory_space<vmem>>, vector<8x16xbf16>
    %cst_189 = arith.constant dense<0.000000e+00> : vector<8x64xf32>
    %330 = tpu.matmul %329, %322, %cst_189 {dimension_numbers = #tpu.dot_dimension_numbers<[1], [0], [0], [1], [0, 0, 1, 1], [], []>} : vector<8x16xbf16>, vector<16x64xbf16>, vector<8x64xf32> -> vector<8x64xf32>
    %331 = arith.addf %328, %330 : vector<8x64xf32>
    %c16_190 = arith.constant 16 : index
    %c0_191 = arith.constant 0 : index
    %332 = vector.load %arg12[%c16_190, %c0_191] : memref<24x16xbf16, #tpu.memory_space<vmem>>, vector<8x16xbf16>
    %cst_192 = arith.constant dense<0.000000e+00> : vector<8x64xf32>
    %333 = tpu.matmul %332, %323, %cst_192 {dimension_numbers = #tpu.dot_dimension_numbers<[1], [0], [0], [1], [0, 0, 1, 1], [], []>} : vector<8x16xbf16>, vector<16x64xbf16>, vector<8x64xf32> -> vector<8x64xf32>
    %334 = arith.addf %331, %333 : vector<8x64xf32>
    %c0_193 = arith.constant 0 : index
    %c0_194 = arith.constant 0 : index
    %335 = vector.load %arg14[%c0_193, %c0_194] : memref<8x1xf32, #tpu.memory_space<vmem>>, vector<8x1xf32>
    %c0_195 = arith.constant 0 : index
    %c0_196 = arith.constant 0 : index
    %336 = vector.load %arg13[%c0_195, %c0_196] : memref<16x16xbf16, #tpu.memory_space<vmem>>, vector<8x16xbf16>
    %cst_197 = arith.constant dense<0.000000e+00> : vector<8x64xf32>
    %337 = tpu.matmul %336, %322, %cst_197 {dimension_numbers = #tpu.dot_dimension_numbers<[1], [0], [0], [1], [0, 0, 1, 1], [], []>} : vector<8x16xbf16>, vector<16x64xbf16>, vector<8x64xf32> -> vector<8x64xf32>
    %338 = vector.broadcast %335 : vector<8x1xf32> to vector<8x64xf32>
    %339 = arith.addf %338, %337 : vector<8x64xf32>
    %c8_198 = arith.constant 8 : index
    %c0_199 = arith.constant 0 : index
    %340 = vector.load %arg13[%c8_198, %c0_199] : memref<16x16xbf16, #tpu.memory_space<vmem>>, vector<8x16xbf16>
    %cst_200 = arith.constant dense<0.000000e+00> : vector<8x64xf32>
    %341 = tpu.matmul %340, %323, %cst_200 {dimension_numbers = #tpu.dot_dimension_numbers<[1], [0], [0], [1], [0, 0, 1, 1], [], []>} : vector<8x16xbf16>, vector<16x64xbf16>, vector<8x64xf32> -> vector<8x64xf32>
    %342 = arith.addf %339, %341 : vector<8x64xf32>
    %cst_201 = arith.constant 0.000000e+00 : f32
    %343 = vector.broadcast %cst_201 : f32 to vector<8x64xf32>
    %344 = arith.maximumf %334, %343 : vector<8x64xf32>
    %345 = arith.truncf %344 : vector<8x64xf32> to vector<8x64xbf16>
    %cst_202 = arith.constant 0.000000e+00 : f32
    %346 = vector.broadcast %cst_202 : f32 to vector<8x64xf32>
    %347 = arith.maximumf %342, %346 : vector<8x64xf32>
    %348 = arith.truncf %347 : vector<8x64xf32> to vector<8x64xbf16>
    %349 = tpu.iota {dimensions = array<i32: 0>} : vector<64x128xi32>
    %350 = tpu.iota {dimensions = array<i32: 1>} : vector<64x128xi32>
    %c2_i32_203 = arith.constant 2 : i32
    %351 = vector.broadcast %c2_i32_203 : i32 to vector<64x128xi32>
    %352 = arith.muli %351, %349 : vector<64x128xi32>
    %353 = arith.cmpi eq, %350, %352 : vector<64x128xi32>
    %cst_204 = arith.constant 1.000000e+00 : f32
    %cst_205 = arith.constant 0.000000e+00 : f32
    %354 = vector.broadcast %cst_204 : f32 to vector<64x128xf32>
    %355 = vector.broadcast %cst_205 : f32 to vector<64x128xf32>
    %356 = arith.select %353, %354, %355 : vector<64x128xi1>, vector<64x128xf32>
    %357 = arith.truncf %356 : vector<64x128xf32> to vector<64x128xbf16>
    %c2_i32_206 = arith.constant 2 : i32
    %358 = vector.broadcast %c2_i32_206 : i32 to vector<64x128xi32>
    %359 = arith.muli %358, %349 : vector<64x128xi32>
    %c1_i32_207 = arith.constant 1 : i32
    %360 = vector.broadcast %c1_i32_207 : i32 to vector<64x128xi32>
    %361 = arith.addi %359, %360 : vector<64x128xi32>
    %362 = arith.cmpi eq, %350, %361 : vector<64x128xi32>
    %cst_208 = arith.constant 1.000000e+00 : f32
    %cst_209 = arith.constant 0.000000e+00 : f32
    %363 = vector.broadcast %cst_208 : f32 to vector<64x128xf32>
    %364 = vector.broadcast %cst_209 : f32 to vector<64x128xf32>
    %365 = arith.select %362, %363, %364 : vector<64x128xi1>, vector<64x128xf32>
    %366 = arith.truncf %365 : vector<64x128xf32> to vector<64x128xbf16>
    %cst_210 = arith.constant dense<0.000000e+00> : vector<8x128xf32>
    %367 = tpu.matmul %345, %357, %cst_210 {dimension_numbers = #tpu.dot_dimension_numbers<[1], [0], [0], [1], [0, 0, 1, 1], [], []>} : vector<8x64xbf16>, vector<64x128xbf16>, vector<8x128xf32> -> vector<8x128xf32>
    %cst_211 = arith.constant dense<0.000000e+00> : vector<8x128xf32>
    %368 = tpu.matmul %348, %366, %cst_211 {dimension_numbers = #tpu.dot_dimension_numbers<[1], [0], [0], [1], [0, 0, 1, 1], [], []>} : vector<8x64xbf16>, vector<64x128xbf16>, vector<8x128xf32> -> vector<8x128xf32>
    %369 = arith.addf %367, %368 : vector<8x128xf32>
    %370 = arith.truncf %369 : vector<8x128xf32> to vector<8x128xbf16>
    %c0_212 = arith.constant 0 : index
    %c0_213 = arith.constant 0 : index
    %371 = vector.load %arg24[%c0_212, %c0_213] : memref<3x8xbf16, #tpu.memory_space<vmem>>, vector<3x8xbf16>
    %cst_214 = arith.constant dense<0.000000e+00> : vector<3x128xf32>
    %372 = tpu.matmul %371, %370, %cst_214 {dimension_numbers = #tpu.dot_dimension_numbers<[1], [0], [0], [1], [0, 0, 1, 1], [], []>} : vector<3x8xbf16>, vector<8x128xbf16>, vector<3x128xf32> -> vector<3x128xf32>
    %c0_215 = arith.constant 0 : index
    %c0_216 = arith.constant 0 : index
    %373 = vector.load %arg25[%c0_215, %c0_216] : memref<3x1xf32, #tpu.memory_space<vmem>>, vector<3x1xf32>
    %374 = vector.broadcast %373 : vector<3x1xf32> to vector<3x128xf32>
    %375 = arith.addf %372, %374 : vector<3x128xf32>
    %376 = vector.shape_cast %375 : vector<3x128xf32> to vector<1x3x128xf32>
    %377 = arith.truncf %376 : vector<1x3x128xf32> to vector<1x3x128xbf16>
    %c0_217 = arith.constant 0 : index
    %c0_218 = arith.constant 0 : index
    %c0_219 = arith.constant 0 : index
    %378 = vector.load %arg26[%c0_217, %c0_218, %c0_219] : memref<1x3x128xbf16, #tpu.memory_space<vmem>>, vector<1x3x128xbf16>
    tpu.vector_store %arg26[%c0_217, %c0_218, %c0_219], %377 {strides = array<i32>} : memref<1x3x128xbf16, #tpu.memory_space<vmem>>, vector<1x3x128xbf16>,
    return
  }
  func.func @transform_0(%arg0: i32) -> (i32, i32, i32) {
    %c0_i32 = arith.constant 0 : i32
    %c0_i32_0 = arith.constant 0 : i32
    %c0_i32_1 = arith.constant 0 : i32
    return %arg0, %c0_i32, %c0_i32_0 : i32, i32, i32
  }
  func.func @transform_1(%arg0: i32) -> (i32, i32) {
    %c0_i32 = arith.constant 0 : i32
    %c0_i32_0 = arith.constant 0 : i32
    %c0_i32_1 = arith.constant 0 : i32
    return %c0_i32, %c0_i32_0 : i32, i32
  }
  func.func @transform_2(%arg0: i32) -> (i32, i32) {
    %c0_i32 = arith.constant 0 : i32
    %c0_i32_0 = arith.constant 0 : i32
    %c0_i32_1 = arith.constant 0 : i32
    return %c0_i32, %c0_i32_0 : i32, i32
  }
  func.func @transform_3(%arg0: i32) -> (i32, i32) {
    %c0_i32 = arith.constant 0 : i32
    %c0_i32_0 = arith.constant 0 : i32
    %c0_i32_1 = arith.constant 0 : i32
    return %c0_i32, %c0_i32_0 : i32, i32
  }
  func.func @transform_4(%arg0: i32) -> (i32, i32) {
    %c0_i32 = arith.constant 0 : i32
    %c0_i32_0 = arith.constant 0 : i32
    %c0_i32_1 = arith.constant 0 : i32
    return %c0_i32, %c0_i32_0 : i32, i32
  }
  func.func @transform_5(%arg0: i32) -> (i32, i32) {
    %c0_i32 = arith.constant 0 : i32
    %c0_i32_0 = arith.constant 0 : i32
    %c0_i32_1 = arith.constant 0 : i32
    return %c0_i32, %c0_i32_0 : i32, i32
  }
  func.func @transform_6(%arg0: i32) -> (i32, i32) {
    %c0_i32 = arith.constant 0 : i32
    %c0_i32_0 = arith.constant 0 : i32
    %c0_i32_1 = arith.constant 0 : i32
    return %c0_i32, %c0_i32_0 : i32, i32
  }
  func.func @transform_7(%arg0: i32) -> (i32, i32) {
    %c0_i32 = arith.constant 0 : i32
    %c0_i32_0 = arith.constant 0 : i32
    %c0_i32_1 = arith.constant 0 : i32
    return %c0_i32, %c0_i32_0 : i32, i32
  }
  func.func @transform_8(%arg0: i32) -> (i32, i32) {
    %c0_i32 = arith.constant 0 : i32
    %c0_i32_0 = arith.constant 0 : i32
    %c0_i32_1 = arith.constant 0 : i32
    return %c0_i32, %c0_i32_0 : i32, i32
  }
  func.func @transform_9(%arg0: i32) -> (i32, i32) {
    %c0_i32 = arith.constant 0 : i32
    %c0_i32_0 = arith.constant 0 : i32
    %c0_i32_1 = arith.constant 0 : i32
    return %c0_i32, %c0_i32_0 : i32, i32
  }
  func.func @transform_10(%arg0: i32) -> (i32, i32) {
    %c0_i32 = arith.constant 0 : i32
    %c0_i32_0 = arith.constant 0 : i32
    %c0_i32_1 = arith.constant 0 : i32
    return %c0_i32, %c0_i32_0 : i32, i32
  }
  func.func @transform_11(%arg0: i32) -> (i32, i32) {
    %c0_i32 = arith.constant 0 : i32
    %c0_i32_0 = arith.constant 0 : i32
    %c0_i32_1 = arith.constant 0 : i32
    return %c0_i32, %c0_i32_0 : i32, i32
  }
  func.func @transform_12(%arg0: i32) -> (i32, i32) {
    %c0_i32 = arith.constant 0 : i32
    %c0_i32_0 = arith.constant 0 : i32
    %c0_i32_1 = arith.constant 0 : i32
    return %c0_i32, %c0_i32_0 : i32, i32
  }
  func.func @transform_13(%arg0: i32) -> (i32, i32) {
    %c0_i32 = arith.constant 0 : i32
    %c0_i32_0 = arith.constant 0 : i32
    %c0_i32_1 = arith.constant 0 : i32
    return %c0_i32, %c0_i32_0 : i32, i32
  }
  func.func @transform_14(%arg0: i32) -> (i32, i32) {
    %c0_i32 = arith.constant 0 : i32
    %c0_i32_0 = arith.constant 0 : i32
    %c0_i32_1 = arith.constant 0 : i32
    return %c0_i32, %c0_i32_0 : i32, i32
  }
  func.func @transform_15(%arg0: i32) -> (i32, i32) {
    %c0_i32 = arith.constant 0 : i32
    %c0_i32_0 = arith.constant 0 : i32
    %c0_i32_1 = arith.constant 0 : i32
    return %c0_i32, %c0_i32_0 : i32, i32
  }
  func.func @transform_16(%arg0: i32) -> (i32, i32) {
    %c0_i32 = arith.constant 0 : i32
    %c0_i32_0 = arith.constant 0 : i32
    %c0_i32_1 = arith.constant 0 : i32
    return %c0_i32, %c0_i32_0 : i32, i32
  }
  func.func @transform_17(%arg0: i32) -> (i32, i32) {
    %c0_i32 = arith.constant 0 : i32
    %c0_i32_0 = arith.constant 0 : i32
    %c0_i32_1 = arith.constant 0 : i32
    return %c0_i32, %c0_i32_0 : i32, i32
  }
  func.func @transform_18(%arg0: i32) -> (i32, i32) {
    %c0_i32 = arith.constant 0 : i32
    %c0_i32_0 = arith.constant 0 : i32
    %c0_i32_1 = arith.constant 0 : i32
    return %c0_i32, %c0_i32_0 : i32, i32
  }
  func.func @transform_19(%arg0: i32) -> (i32, i32) {
    %c0_i32 = arith.constant 0 : i32
    %c0_i32_0 = arith.constant 0 : i32
    %c0_i32_1 = arith.constant 0 : i32
    return %c0_i32, %c0_i32_0 : i32, i32
  }
  func.func @transform_20(%arg0: i32) -> (i32, i32) {
    %c0_i32 = arith.constant 0 : i32
    %c0_i32_0 = arith.constant 0 : i32
    %c0_i32_1 = arith.constant 0 : i32
    return %c0_i32, %c0_i32_0 : i32, i32
  }
  func.func @transform_21(%arg0: i32) -> (i32, i32) {
    %c0_i32 = arith.constant 0 : i32
    %c0_i32_0 = arith.constant 0 : i32
    %c0_i32_1 = arith.constant 0 : i32
    return %c0_i32, %c0_i32_0 : i32, i32
  }
  func.func @transform_22(%arg0: i32) -> (i32, i32) {
    %c0_i32 = arith.constant 0 : i32
    %c0_i32_0 = arith.constant 0 : i32
    %c0_i32_1 = arith.constant 0 : i32
    return %c0_i32, %c0_i32_0 : i32, i32
  }
  func.func @transform_23(%arg0: i32) -> (i32, i32) {
    %c0_i32 = arith.constant 0 : i32
    %c0_i32_0 = arith.constant 0 : i32
    %c0_i32_1 = arith.constant 0 : i32
    return %c0_i32, %c0_i32_0 : i32, i32
  }
  func.func @transform_24(%arg0: i32) -> (i32, i32) {
    %c0_i32 = arith.constant 0 : i32
    %c0_i32_0 = arith.constant 0 : i32
    %c0_i32_1 = arith.constant 0 : i32
    return %c0_i32, %c0_i32_0 : i32, i32
  }
  func.func @transform_25(%arg0: i32) -> (i32, i32, i32) {
    %c0_i32 = arith.constant 0 : i32
    %c0_i32_0 = arith.constant 0 : i32
    %c0_i32_1 = arith.constant 0 : i32
    return %arg0, %c0_i32, %c0_i32_0 : i32, i32, i32
  }
}

module attributes {stable_mosaic.version = 11 : i64} {
  func.func @_dual_decoder_kernel(%arg0: i32, %arg1: memref<1x128xf32, #tpu.memory_space<vmem>>, %arg2: memref<1x3x128xbf16, #tpu.memory_space<vmem>>, %arg3: memref<1x8x1xf32, #tpu.memory_space<vmem>>, %arg4: memref<1x8x1xf32, #tpu.memory_space<vmem>>, %arg5: memref<1x8x1xf32, #tpu.memory_space<vmem>>, %arg6: memref<1x8x2xf32, #tpu.memory_space<vmem>>) attributes {dimension_semantics = [#tpu.dimension_semantics<parallel>], iteration_bounds = array<i64: 2>, scalar_prefetch = 0 : i64, scratch_operands = 0 : i64, tpu.core_type = #tpu.core_type<tc>, window_params = [{pipeline_mode = #tpu.pipeline_mode<synchronous>, transform_indices = @transform_0, window_bounds = array<i64: 1, 128>}, {transform_indices = @transform_1, window_bounds = array<i64: 1, 3, 128>}, {transform_indices = @transform_2, window_bounds = array<i64: 1, 8, 1>}, {transform_indices = @transform_3, window_bounds = array<i64: 1, 8, 1>}, {transform_indices = @transform_4, window_bounds = array<i64: 1, 8, 1>}, {transform_indices = @transform_5, window_bounds = array<i64: 1, 8, 2>}]} {
    %c0 = arith.constant 0 : index
    %c0_0 = arith.constant 0 : index
    %0 = vector.load %arg1[%c0, %c0_0] : memref<1x128xf32, #tpu.memory_space<vmem>>, vector<1x128xf32>
    %c0_1 = arith.constant 0 : index
    %c0_2 = arith.constant 0 : index
    %c0_3 = arith.constant 0 : index
    %1 = vector.load %arg2[%c0_1, %c0_2, %c0_3] : memref<1x3x128xbf16, #tpu.memory_space<vmem>>, vector<1x3x128xbf16>
    %2 = vector.shape_cast %1 : vector<1x3x128xbf16> to vector<3x128xbf16>
    %c0_4 = arith.constant 0 : index
    %c0_5 = arith.constant 0 : index
    %c0_6 = arith.constant 0 : index
    %3 = vector.load %arg3[%c0_4, %c0_5, %c0_6] : memref<1x8x1xf32, #tpu.memory_space<vmem>>, vector<1x8x1xf32>
    %4 = vector.shape_cast %3 : vector<1x8x1xf32> to vector<8x1xf32>
    %5 = vector.broadcast %4 : vector<8x1xf32> to vector<8x128xf32>
    %6 = vector.broadcast %0 : vector<1x128xf32> to vector<8x128xf32>
    %7 = arith.subf %5, %6 : vector<8x128xf32>
    %cst = arith.constant -1.280000e+02 : f32
    %8 = vector.broadcast %cst : f32 to vector<8x128xf32>
    %9 = arith.mulf %8, %7 : vector<8x128xf32>
    %10 = arith.mulf %9, %7 : vector<8x128xf32>
    %11 = math.exp %10 : vector<8x128xf32>
    %12 = arith.truncf %11 : vector<8x128xf32> to vector<8x128xbf16>
    %cst_7 = arith.constant dense<0.000000e+00> : vector<8x3xf32>
    %13 = tpu.matmul %12, %2, %cst_7 {dimension_numbers = #tpu.dot_dimension_numbers<[1], [1], [0], [0], [0, 0, 1, 0], [], []>} : vector<8x128xbf16>, vector<3x128xbf16>, vector<8x3xf32> -> vector<8x3xf32>
    %14 = vector.extract_strided_slice %13 {offsets = [0, 0], sizes = [8, 1], strides = [1, 1]} : vector<8x3xf32> to vector<8x1xf32>
    %15 = vector.shape_cast %14 : vector<8x1xf32> to vector<1x8x1xf32>
    %c0_8 = arith.constant 0 : index
    %c0_9 = arith.constant 0 : index
    %c0_10 = arith.constant 0 : index
    %16 = vector.load %arg5[%c0_8, %c0_9, %c0_10] : memref<1x8x1xf32, #tpu.memory_space<vmem>>, vector<1x8x1xf32>
    tpu.vector_store %arg5[%c0_8, %c0_9, %c0_10], %15 {strides = array<i32>} : memref<1x8x1xf32, #tpu.memory_space<vmem>>, vector<1x8x1xf32>,
    %c0_11 = arith.constant 0 : index
    %c0_12 = arith.constant 0 : index
    %c0_13 = arith.constant 0 : index
    %17 = vector.load %arg4[%c0_11, %c0_12, %c0_13] : memref<1x8x1xf32, #tpu.memory_space<vmem>>, vector<1x8x1xf32>
    %18 = vector.shape_cast %17 : vector<1x8x1xf32> to vector<8x1xf32>
    %19 = vector.broadcast %18 : vector<8x1xf32> to vector<8x128xf32>
    %20 = vector.broadcast %0 : vector<1x128xf32> to vector<8x128xf32>
    %21 = arith.subf %19, %20 : vector<8x128xf32>
    %cst_14 = arith.constant -1.280000e+02 : f32
    %22 = vector.broadcast %cst_14 : f32 to vector<8x128xf32>
    %23 = arith.mulf %22, %21 : vector<8x128xf32>
    %24 = arith.mulf %23, %21 : vector<8x128xf32>
    %25 = math.exp %24 : vector<8x128xf32>
    %26 = arith.truncf %25 : vector<8x128xf32> to vector<8x128xbf16>
    %cst_15 = arith.constant dense<0.000000e+00> : vector<8x3xf32>
    %27 = tpu.matmul %26, %2, %cst_15 {dimension_numbers = #tpu.dot_dimension_numbers<[1], [1], [0], [0], [0, 0, 1, 0], [], []>} : vector<8x128xbf16>, vector<3x128xbf16>, vector<8x3xf32> -> vector<8x3xf32>
    %28 = vector.extract_strided_slice %27 {offsets = [0, 1], sizes = [8, 2], strides = [1, 1]} : vector<8x3xf32> to vector<8x2xf32>
    %29 = vector.shape_cast %28 : vector<8x2xf32> to vector<1x8x2xf32>
    %c0_16 = arith.constant 0 : index
    %c0_17 = arith.constant 0 : index
    %c0_18 = arith.constant 0 : index
    %30 = vector.load %arg6[%c0_16, %c0_17, %c0_18] : memref<1x8x2xf32, #tpu.memory_space<vmem>>, vector<1x8x2xf32>
    tpu.vector_store %arg6[%c0_16, %c0_17, %c0_18], %29 {strides = array<i32>} : memref<1x8x2xf32, #tpu.memory_space<vmem>>, vector<1x8x2xf32>,
    return
  }
  func.func @transform_0(%arg0: i32) -> (i32, i32) {
    %c0_i32 = arith.constant 0 : i32
    %c0_i32_0 = arith.constant 0 : i32
    %c0_i32_1 = arith.constant 0 : i32
    return %c0_i32, %c0_i32_0 : i32, i32
  }
  func.func @transform_1(%arg0: i32) -> (i32, i32, i32) {
    %c0_i32 = arith.constant 0 : i32
    %c0_i32_0 = arith.constant 0 : i32
    %c0_i32_1 = arith.constant 0 : i32
    return %arg0, %c0_i32, %c0_i32_0 : i32, i32, i32
  }
  func.func @transform_2(%arg0: i32) -> (i32, i32, i32) {
    %c0_i32 = arith.constant 0 : i32
    %c0_i32_0 = arith.constant 0 : i32
    %c0_i32_1 = arith.constant 0 : i32
    return %arg0, %c0_i32, %c0_i32_0 : i32, i32, i32
  }
  func.func @transform_3(%arg0: i32) -> (i32, i32, i32) {
    %c0_i32 = arith.constant 0 : i32
    %c0_i32_0 = arith.constant 0 : i32
    %c0_i32_1 = arith.constant 0 : i32
    return %arg0, %c0_i32, %c0_i32_0 : i32, i32, i32
  }
  func.func @transform_4(%arg0: i32) -> (i32, i32, i32) {
    %c0_i32 = arith.constant 0 : i32
    %c0_i32_0 = arith.constant 0 : i32
    %c0_i32_1 = arith.constant 0 : i32
    return %arg0, %c0_i32, %c0_i32_0 : i32, i32, i32
  }
  func.func @transform_5(%arg0: i32) -> (i32, i32, i32) {
    %c0_i32 = arith.constant 0 : i32
    %c0_i32_0 = arith.constant 0 : i32
    %c0_i32_1 = arith.constant 0 : i32
    return %arg0, %c0_i32, %c0_i32_0 : i32, i32, i32
  }
}

</mosaic_0001>

<llo_original>
// kernel: dual_convcnp_forward.3
$region0: #{dual_convcnp_forward.3}
  #allocation0 [shape = 'u32[]', space=smem, size = 0x4, offset = 0x4, fixed_abs, tag = 'smem constant byte address 0x4 - core index']
  #allocation1 [shape = 'u32[72,128]{1,0:T(1,128)}', space=vmem, size = 0x9000, scoped, tag = 'internal scratch']
  %s0 = inlined_call_operand.vmem [shape: f32[2,8,1], index: 0, kind: input, shape index: {}]
  %s1 = inlined_call_operand.vmem [shape: f32[2,1,8], index: 1, kind: input, shape index: {}]
  %s2 = inlined_call_operand.vmem [shape: f32[2,8,1], index: 2, kind: input, shape index: {}]
  %s3 = inlined_call_operand.vmem [shape: f32[2,1,8], index: 3, kind: input, shape index: {}]
  %s4 = inlined_call_operand.vmem [shape: f32[1,128], index: 4, kind: input, shape index: {}]
  %s5 = inlined_call_operand.vmem [shape: bf16[2,4,128], index: 5, kind: output, shape index: {}]
  %s6 = sld [smem:[#allocation0]]
  $region53: #{dual_convcnp_forward.3} parent=0
    _
  %s8 = ssub.s32 1, %s6
  %s9 = scalar_select 0, %s8, %s6
  loop: start=0, step=1, limit=4
  $region2: #{dual_convcnp_forward.3} parent=0 // loop_pre_header
    _
  $region3: #{dual_convcnp_forward.3} parent=0 // loop_header
    %s11 = sphi 0, %s15
    %p12 = scmp.ge.s32.totalorder %s11, 4
    %s21 = sphi 0, %s23
    %s24 = sphi 0, %s21
    %s25 = sphi 0, %s24
    %s41 = sphi 0, %s25
    %s47 = sphi 0, %s49
    %s50 = sphi 0, %s47
    %s51 = sphi 0, %s50
    %s67 = sphi 0, %s51
    %s73 = sphi 0, %s75
    %s76 = sphi 0, %s73
    %s77 = sphi 0, %s76
    %s93 = sphi 0, %s77
    %s99 = sphi 0, %s101
    %s102 = sphi 0, %s99
    %s103 = sphi 0, %s102
    %s119 = sphi 0, %s103
    %s123 = sphi 0, %s123
    %s125 = sphi 0, %s123
    %s126 = sphi 0, %s125
    %s140 = sphi 0, %s126
    %s146 = sphi 0, %s148
    %s149 = sphi 0, %s146
    %s150 = sphi 0, %s149
    %s166 = sphi 0, %s150
  $region4: #{dual_convcnp_forward.3} parent=0 // loop_header_branch
    %14 = sbr.rel (%p12) target = $region8
  $region5: #{dual_convcnp_forward.3} parent=0 // loop_body
    %s16 = ssub.s32 %s11, 1
    %s17 = ssub.s32 %s11, 2
    %s18 = sadd.s32 %s11, 1
    %s19 = ssub.s32 %s11, %s18
    %p20 = scmp.eq.s32.totalorder %s19, 0
    %s22 = sadd.s32 %s21, 1
    %s23 = scalar_select %p20, %s21, %s22
    %p26 = pneg %p20
    %p27 = scmp.eq.s32.totalorder %s11, 1
    %p28 = por %p26, %p27
    %p29 = scmp.ne.s32.totalorder %s21, %s24
    %p30 = scmp.eq.s32.totalorder %s11, 0
    %p31 = por %p29, %p30
    %p32 = scmp.ne.s32.totalorder %s21, %s24
    %p33 = scmp.eq.s32.totalorder %s16, 1
    %p34 = por %p32, %p33
    %p35 = scmp.ne.s32.totalorder %s24, %s25
    %p36 = scmp.eq.s32.totalorder %s16, 0
    %p37 = por %p35, %p36
    %p38 = scmp.ne.s32.totalorder %s24, %s25
    %p39 = scmp.eq.s32.totalorder %s17, 1
    %p40 = por %p38, %p39
    %p42 = scmp.ne.s32.totalorder %s25, %s41
    %p43 = scmp.eq.s32.totalorder %s17, 0
    %p44 = por %p42, %p43
    %s45 = ssub.s32 %s11, %s18
    %p46 = scmp.eq.s32.totalorder %s45, 0
    %s48 = sadd.s32 %s47, 1
    %s49 = scalar_select %p46, %s47, %s48
    %p52 = pneg %p46
    %p53 = scmp.eq.s32.totalorder %s11, 1
    %p54 = por %p52, %p53
    %p55 = scmp.ne.s32.totalorder %s47, %s50
    %p56 = scmp.eq.s32.totalorder %s11, 0
    %p57 = por %p55, %p56
    %p58 = scmp.ne.s32.totalorder %s47, %s50
    %p59 = scmp.eq.s32.totalorder %s16, 1
    %p60 = por %p58, %p59
    %p61 = scmp.ne.s32.totalorder %s50, %s51
    %p62 = scmp.eq.s32.totalorder %s16, 0
    %p63 = por %p61, %p62
    %p64 = scmp.ne.s32.totalorder %s50, %s51
    %p65 = scmp.eq.s32.totalorder %s17, 1
    %p66 = por %p64, %p65
    %p68 = scmp.ne.s32.totalorder %s51, %s67
    %p69 = scmp.eq.s32.totalorder %s17, 0
    %p70 = por %p68, %p69
    %s71 = ssub.s32 %s11, %s18
    %p72 = scmp.eq.s32.totalorder %s71, 0
    %s74 = sadd.s32 %s73, 1
    %s75 = scalar_select %p72, %s73, %s74
    %p78 = pneg %p72
    %p79 = scmp.eq.s32.totalorder %s11, 1
    %p80 = por %p78, %p79
    %p81 = scmp.ne.s32.totalorder %s73, %s76
    %p82 = scmp.eq.s32.totalorder %s11, 0
    %p83 = por %p81, %p82
    %p84 = scmp.ne.s32.totalorder %s73, %s76
    %p85 = scmp.eq.s32.totalorder %s16, 1
    %p86 = por %p84, %p85
    %p87 = scmp.ne.s32.totalorder %s76, %s77
    %p88 = scmp.eq.s32.totalorder %s16, 0
    %p89 = por %p87, %p88
    %p90 = scmp.ne.s32.totalorder %s76, %s77
    %p91 = scmp.eq.s32.totalorder %s17, 1
    %p92 = por %p90, %p91
    %p94 = scmp.ne.s32.totalorder %s77, %s93
    %p95 = scmp.eq.s32.totalorder %s17, 0
    %p96 = por %p94, %p95
    %s97 = ssub.s32 %s11, %s18
    %p98 = scmp.eq.s32.totalorder %s97, 0
    %s100 = sadd.s32 %s99, 1
    %s101 = scalar_select %p98, %s99, %s100
    %p104 = pneg %p98
    %p105 = scmp.eq.s32.totalorder %s11, 1
    %p106 = por %p104, %p105
    %p107 = scmp.ne.s32.totalorder %s99, %s102
    %p108 = scmp.eq.s32.totalorder %s11, 0
    %p109 = por %p107, %p108
    %p110 = scmp.ne.s32.totalorder %s99, %s102
    %p111 = scmp.eq.s32.totalorder %s16, 1
    %p112 = por %p110, %p111
    %p113 = scmp.ne.s32.totalorder %s102, %s103
    %p114 = scmp.eq.s32.totalorder %s16, 0
    %p115 = por %p113, %p114
    %p116 = scmp.ne.s32.totalorder %s102, %s103
    %p117 = scmp.eq.s32.totalorder %s17, 1
    %p118 = por %p116, %p117
    %p120 = scmp.ne.s32.totalorder %s103, %s119
    %p121 = scmp.eq.s32.totalorder %s17, 0
    %p122 = por %p120, %p121
    %s124 = sadd.s32 %s123, 1
    %p127 = scmp.eq.s32.totalorder %s11, 1
    %p128 = scmp.ne.s32.totalorder %s123, %s125
    %p129 = scmp.eq.s32.totalorder %s11, 0
    %p130 = por %p128, %p129
    %p131 = scmp.ne.s32.totalorder %s123, %s125
    %p132 = scmp.eq.s32.totalorder %s16, 1
    %p133 = por %p131, %p132
    %p134 = scmp.ne.s32.totalorder %s125, %s126
    %p135 = scmp.eq.s32.totalorder %s16, 0
    %p136 = por %p134, %p135
    %p137 = scmp.ne.s32.totalorder %s125, %s126
    %p138 = scmp.eq.s32.totalorder %s17, 1
    %p139 = por %p137, %p138
    %p141 = scmp.ne.s32.totalorder %s126, %s140
    %p142 = scmp.eq.s32.totalorder %s17, 0
    %p143 = por %p141, %p142
    %s144 = ssub.s32 %s11, %s18
    %p145 = scmp.eq.s32.totalorder %s144, 0
    %s147 = sadd.s32 %s146, 1
    %s148 = scalar_select %p145, %s146, %s147
    %p151 = pneg %p145
    %p152 = scmp.eq.s32.totalorder %s11, 1
    %p153 = por %p151, %p152
    %p154 = scmp.ne.s32.totalorder %s146, %s149
    %p155 = scmp.eq.s32.totalorder %s11, 0
    %p156 = por %p154, %p155
    %p157 = scmp.ne.s32.totalorder %s146, %s149
    %p158 = scmp.eq.s32.totalorder %s16, 1
    %p159 = por %p157, %p158
    %p160 = scmp.ne.s32.totalorder %s149, %s150
    %p161 = scmp.eq.s32.totalorder %s16, 0
    %p162 = por %p160, %p161
    %p163 = scmp.ne.s32.totalorder %s149, %s150
    %p164 = scmp.eq.s32.totalorder %s17, 1
    %p165 = por %p163, %p164
    %p167 = scmp.ne.s32.totalorder %s150, %s166
    %p168 = scmp.eq.s32.totalorder %s17, 0
    %p169 = por %p167, %p168
    %p170 = scmp.le.s32.totalorder 1, %s11
    %p171 = scmp.lt.s32.totalorder %s11, 3
    %p172 = pnand %p170, %p171
    %p173 = pneg %p172
    // Predicated region
    $region9: #{dual_convcnp_forward.3} parent=5 // pred_check
      _
    $region10: #{dual_convcnp_forward.3} parent=5 // pred_check_branch
      %175 = sbr.rel (%p172) target = $region12
    $region11: #{dual_convcnp_forward.3} parent=5 // pred_region
      %s176 = ssub.s32 %s11, 1
      // Predicated region
      $region13: #{dual_convcnp_forward.3} parent=11 // pred_check
        %p177 = pneg %p136
      $region14: #{dual_convcnp_forward.3} parent=11 // pred_check_branch
        %179 = sbr.rel (%p177) target = $region16
      $region15: #{dual_convcnp_forward.3} parent=11 // pred_region
        _
      $region16: #{dual_convcnp_forward.3} parent=11 // pred_fallthru
        _
    $region12: #{dual_convcnp_forward.3} parent=5 // pred_fallthru
      _
    %p180 = scmp.lt.s32.totalorder %s11, 2
    // Predicated region
    $region17: #{dual_convcnp_forward.3} parent=5 // pred_check
      %p181 = pneg %p180
    $region18: #{dual_convcnp_forward.3} parent=5 // pred_check_branch
      %183 = sbr.rel (%p181) target = $region20
    $region19: #{dual_convcnp_forward.3} parent=5 // pred_region
      // Predicated region
      $region21: #{dual_convcnp_forward.3} parent=19 // pred_check
        %p184 = pneg %p31
      $region22: #{dual_convcnp_forward.3} parent=19 // pred_check_branch
        %186 = sbr.rel (%p184) target = $region24
      $region23: #{dual_convcnp_forward.3} parent=19 // pred_region
        %p187 = scmp.lt.s32.totalorder %s11, 1
        %s188 = scalar_select %p187, %s11, 1
        %s189 = smul.addr %s188, 8
        %s190 = scalar_lea.vmem %s0, %s189
      $region24: #{dual_convcnp_forward.3} parent=19 // pred_fallthru
        _
      // Predicated region
      $region25: #{dual_convcnp_forward.3} parent=19 // pred_check
        %p191 = pneg %p57
      $region26: #{dual_convcnp_forward.3} parent=19 // pred_check_branch
        %193 = sbr.rel (%p191) target = $region28
      $region27: #{dual_convcnp_forward.3} parent=19 // pred_region
        %p194 = scmp.lt.s32.totalorder %s11, 1
        %s195 = scalar_select %p194, %s11, 1
        %s196 = scalar_lea.vmem %s1, %s195
      $region28: #{dual_convcnp_forward.3} parent=19 // pred_fallthru
        _
      // Predicated region
      $region29: #{dual_convcnp_forward.3} parent=19 // pred_check
        %p197 = pneg %p83
      $region30: #{dual_convcnp_forward.3} parent=19 // pred_check_branch
        %199 = sbr.rel (%p197) target = $region32
      $region31: #{dual_convcnp_forward.3} parent=19 // pred_region
        %p200 = scmp.lt.s32.totalorder %s11, 1
        %s201 = scalar_select %p200, %s11, 1
        %s202 = smul.addr %s201, 8
        %s203 = scalar_lea.vmem %s2, %s202
      $region32: #{dual_convcnp_forward.3} parent=19 // pred_fallthru
        _
      // Predicated region
      $region33: #{dual_convcnp_forward.3} parent=19 // pred_check
        %p204 = pneg %p109
      $region34: #{dual_convcnp_forward.3} parent=19 // pred_check_branch
        %206 = sbr.rel (%p204) target = $region36
      $region35: #{dual_convcnp_forward.3} parent=19 // pred_region
        %p207 = scmp.lt.s32.totalorder %s11, 1
        %s208 = scalar_select %p207, %s11, 1
        %s209 = scalar_lea.vmem %s3, %s208
      $region36: #{dual_convcnp_forward.3} parent=19 // pred_fallthru
        _
    $region20: #{dual_convcnp_forward.3} parent=5 // pred_fallthru
      _
    %p210 = scmp.le.s32.totalorder 1, %s11
    %p211 = scmp.lt.s32.totalorder %s11, 3
    %p212 = pnand %p210, %p211
    %p213 = pneg %p212
    // Predicated region
    $region37: #{dual_convcnp_forward.3} parent=5 // pred_check
      _
    $region38: #{dual_convcnp_forward.3} parent=5 // pred_check_branch
      %215 = sbr.rel (%p212) target = $region40
    $region39: #{dual_convcnp_forward.3} parent=5 // pred_region
      %s216 = ssub.s32 %s11, 1
      %p217 = scmp.lt.s32.totalorder %s16, 1
      %s218 = scalar_select %p217, %s16, 1
      %s219 = smul.addr %s218, 8
      %s220 = scalar_lea.vmem %s0, %s219
      %p221 = pneg %p37
      %p222 = pneg %p34
      %p223 = scmp.lt.s32.totalorder %s16, 1
      %s224 = scalar_select %p223, %s16, 1
      %s225 = scalar_lea.vmem %s1, %s224
      %p226 = pneg %p63
      %p227 = pneg %p60
      %p228 = scmp.lt.s32.totalorder %s16, 1
      %s229 = scalar_select %p228, %s16, 1
      %s230 = smul.addr %s229, 8
      %s231 = scalar_lea.vmem %s2, %s230
      %p232 = pneg %p89
      %p233 = pneg %p86
      %p234 = scmp.lt.s32.totalorder %s16, 1
      %s235 = scalar_select %p234, %s16, 1
      %s236 = scalar_lea.vmem %s3, %s235
      %p237 = pneg %p115
      %p238 = pneg %p112
      %p239 = pneg %p136
      %p240 = pneg %p133
      %p241 = pneg %p162
      %p242 = pneg %p159
      %p243 = scmp.lt.s32.totalorder %s16, 1
      %s244 = scalar_select %p243, %s16, 1
      %s245 = smul.addr %s244, 2
      %s246 = scalar_lea.vmem %s5, %s245
      %p247 = scmp.lt.s32.totalorder %s16, 1
      %s248 = scalar_select %p247, %s16, 1
      %s249 = smul.addr %s248, 8
      %s250 = scalar_lea.vmem %s0, %s249
      %p251 = scmp.lt.s32.totalorder %s16, 1
      %s252 = scalar_select %p251, %s16, 1
      %s253 = scalar_lea.vmem %s1, %s252
      %p254 = scmp.lt.s32.totalorder %s16, 1
      %s255 = scalar_select %p254, %s16, 1
      %s256 = smul.addr %s255, 8
      %s257 = scalar_lea.vmem %s2, %s256
      %p258 = scmp.lt.s32.totalorder %s16, 1
      %s259 = scalar_select %p258, %s16, 1
      %s260 = scalar_lea.vmem %s3, %s259
      %p261 = scmp.lt.s32.totalorder %s16, 1
      %s262 = scalar_select %p261, %s16, 1
      %s263 = smul.addr %s262, 2
      %s264 = scalar_lea.vmem %s5, %s263
      %v266 = vld [vmem:[%s4] sm:$0x1]
      %v267 = vld [vmem:[%s250] sm:$0xff]
      %269 = vset.pattern.permute.xlu0 0
      %270 = vperm.xlu0 %269, %v267
      %v271 = vpop.permute.xlu0 %270
      %v274 = vperm.slane %v266, 0
      %v276 = vsub.f32 %v271, %v274
      %v277 = vmul.f32 %v276, -128.0
      %v278 = vmul.f32 %v277, %v276
      %v279 = vmul.f32 %v278, 1.442695
      %v280 = vpow.pop %v279
      %v281 = vpack.c.bf16 %v280, %v280
      %v282 = vld [vmem:[%s253] sm:$0x1]
      %v284 = vperm.slane %v282, 0
      %vm286 = vcmask 1040384
      %v287 = vsel %vm286, 1.0, %v284
      %v288 = vpack.c.bf16 %v287, %v287
      %vm289 = vcmask 64512
      %v291 = vsel %vm289, %v288, 0
      %vm293 = vcmask 1043456
      %v295 = vsel %vm293, %v281, 0
      %297 = vmatpush.bf16.msra.mxu0 0
      %298 = vmatpush.bf16.msra.mxu0 0
      %299 = vmatpush.bf16.msra.mxu0 0
      %300 = vmatpush.bf16.msra.mxu0 0
      %301 = vmatpush.bf16.msra.mxu0 0
      %302 = vmatpush.bf16.msra.mxu0 0
      %303 = vmatpush.bf16.msra.mxu0 0
      %304 = vmatpush.bf16.msra.mxu0 %v295
      %305 = vmatmul.bf16.gmra.mxu0 %v291
      %v306 = vpop.f32.mrf.mxu0
      %v307 = vadd.f32 0.0, %v306
      %v308 = vpop.f32.mrf.mxu0
      %309 = vdwg.mxu0
      %v310 = vadd.f32 %v307, 1e-08
      %v311 = vrcp.pop %v310
      %v313 = vrot.slane %v311, 7
      %v315 = vmul.f32 %v307, %v313
      %v316 = vld [vmem:[%s257] sm:$0xff]
      %318 = vset.pattern.permute.xlu0 0
      %319 = vperm.xlu0 %318, %v316
      %v320 = vpop.permute.xlu0 %319
      %v322 = vsub.f32 %v320, %v274
      %v323 = vmul.f32 %v322, -128.0
      %v324 = vmul.f32 %v323, %v322
      %v325 = vmul.f32 %v324, 1.442695
      %v326 = vpow.pop %v325
      %v327 = vpack.c.bf16 %v326, %v326
      %v328 = vld [vmem:[%s260] sm:$0x1]
      %v330 = vperm.slane %v328, 0
      %v332 = vsel %vm286, 1.0, %v330
      %v333 = vpack.c.bf16 %v332, %v332
      %v335 = vsel %vm289, %v333, 0
      %v338 = vsel %vm293, %v327, 0
      %340 = vmatpush.bf16.msra.mxu0 0
      %341 = vmatpush.bf16.msra.mxu0 0
      %342 = vmatpush.bf16.msra.mxu0 0
      %343 = vmatpush.bf16.msra.mxu0 0
      %344 = vmatpush.bf16.msra.mxu0 0
      %345 = vmatpush.bf16.msra.mxu0 0
      %346 = vmatpush.bf16.msra.mxu0 0
      %347 = vmatpush.bf16.msra.mxu0 %v338
      %348 = vmatmul.bf16.gmra.mxu0 %v335
      %v349 = vpop.f32.mrf.mxu0
      %v350 = vadd.f32 0.0, %v349
      %v351 = vpop.f32.mrf.mxu0
      %352 = vdwg.mxu0
      %v353 = vadd.f32 %v350, 1e-08
      %v354 = vrcp.pop %v353
      %v356 = vrot.slane %v354, 7
      %v358 = vmul.f32 %v350, %v356
      %v360 = vrot.slane %v350, 6
      %v363 = vrot.slane %v358, 6
      %v365 = vsel %vm286, %v307, %v315
      %vm366 = vcmask 1041408
      %v367 = vsel %vm366, %v365, %v360
      %vm368 = vcmask 1042432
      %v369 = vsel %vm368, %v367, %v363
      %v370 = vpack.c.bf16 %v369, %v369
      %371 = vst [vmem:[%s264] sm:$0x3] %v370
      %p372 = scmp.lt.s32.totalorder %s16, 1
      %s373 = scalar_select %p372, %s16, 1
      %s374 = smul.addr %s373, 2
      %s375 = scalar_lea.vmem %s5, %s374
      // Predicated region
      $region41: #{dual_convcnp_forward.3} parent=39 // pred_check
        %p376 = pneg %p159
      $region42: #{dual_convcnp_forward.3} parent=39 // pred_check_branch
        %378 = sbr.rel (%p376) target = $region44
      $region43: #{dual_convcnp_forward.3} parent=39 // pred_region
        _
      $region44: #{dual_convcnp_forward.3} parent=39 // pred_fallthru
        _
    $region40: #{dual_convcnp_forward.3} parent=5 // pred_fallthru
      _
    %p379 = scmp.le.s32.totalorder 2, %s11
    // Predicated region
    $region45: #{dual_convcnp_forward.3} parent=5 // pred_check
      %p380 = pneg %p379
    $region46: #{dual_convcnp_forward.3} parent=5 // pred_check_branch
      %382 = sbr.rel (%p380) target = $region48
    $region47: #{dual_convcnp_forward.3} parent=5 // pred_region
      %s383 = ssub.s32 %s11, 2
      // Predicated region
      $region49: #{dual_convcnp_forward.3} parent=47 // pred_check
        %p384 = pneg %p165
      $region50: #{dual_convcnp_forward.3} parent=47 // pred_check_branch
        %386 = sbr.rel (%p384) target = $region52
      $region51: #{dual_convcnp_forward.3} parent=47 // pred_region
        %p387 = scmp.lt.s32.totalorder %s17, 1
        %s388 = scalar_select %p387, %s17, 1
        %s389 = smul.addr %s388, 2
        %s390 = scalar_lea.vmem %s5, %s389
      $region52: #{dual_convcnp_forward.3} parent=47 // pred_fallthru
        _
    $region48: #{dual_convcnp_forward.3} parent=5 // pred_fallthru
      _
  $region6: #{dual_convcnp_forward.3} parent=0 // loop_footer
    %s15 = sadd.s32 1, %s11
  $region7: #{dual_convcnp_forward.3} parent=0 // loop_footer_branch
    %10 = sbr.rel target = $region3
  $region8: #{dual_convcnp_forward.3} parent=0 // loop_exit
    _

// kernel: dual_convcnp_forward.5
$region0: #{dual_convcnp_forward.5}
  #allocation0 [shape = 'u32[]', space=smem, size = 0x4, offset = 0x4, fixed_abs, tag = 'smem constant byte address 0x4 - core index']
  #allocation1 [shape = 'u32[72,128]{1,0:T(1,128)}', space=vmem, size = 0x9000, scoped, tag = 'internal scratch']
  %s0 = inlined_call_operand.vmem [shape: f32[1,128], index: 0, kind: input, shape index: {}]
  %s1 = inlined_call_operand.vmem [shape: bf16[2,3,128], index: 1, kind: input, shape index: {}]
  %s2 = inlined_call_operand.vmem [shape: f32[2,8,1], index: 2, kind: input, shape index: {}]
  %s3 = inlined_call_operand.vmem [shape: f32[2,8,1], index: 3, kind: input, shape index: {}]
  %s4 = inlined_call_operand.vmem [shape: f32[2,8,1], index: 4, kind: output, shape index: {0}]
  %s5 = inlined_call_operand.vmem [shape: f32[2,8,2], index: 5, kind: output, shape index: {1}]
  %6 = xla_tuple %s4, %s5
  %s7 = sld [smem:[#allocation0]]
  $region57: #{dual_convcnp_forward.5} parent=0
    _
  %s9 = ssub.s32 1, %s7
  %s10 = scalar_select 0, %s9, %s7
  loop: start=0, step=1, limit=4
  $region2: #{dual_convcnp_forward.5} parent=0 // loop_pre_header
    _
  $region3: #{dual_convcnp_forward.5} parent=0 // loop_header
    %s12 = sphi 0, %s16
    %p13 = scmp.ge.s32.totalorder %s12, 4
    %s20 = sphi 0, %s20
    %s22 = sphi 0, %s20
    %s23 = sphi 0, %s22
    %s37 = sphi 0, %s23
    %s43 = sphi 0, %s45
    %s46 = sphi 0, %s43
    %s47 = sphi 0, %s46
    %s63 = sphi 0, %s47
    %s69 = sphi 0, %s71
    %s72 = sphi 0, %s69
    %s73 = sphi 0, %s72
    %s89 = sphi 0, %s73
    %s95 = sphi 0, %s97
    %s98 = sphi 0, %s95
    %s99 = sphi 0, %s98
    %s115 = sphi 0, %s99
    %s121 = sphi 0, %s123
    %s124 = sphi 0, %s121
    %s125 = sphi 0, %s124
    %s141 = sphi 0, %s125
    %s147 = sphi 0, %s149
    %s150 = sphi 0, %s147
    %s151 = sphi 0, %s150
    %s167 = sphi 0, %s151
  $region4: #{dual_convcnp_forward.5} parent=0 // loop_header_branch
    %15 = sbr.rel (%p13) target = $region8
  $region5: #{dual_convcnp_forward.5} parent=0 // loop_body
    %s17 = ssub.s32 %s12, 1
    %s18 = ssub.s32 %s12, 2
    %s19 = sadd.s32 %s12, 1
    %s21 = sadd.s32 %s20, 1
    %p24 = scmp.eq.s32.totalorder %s12, 1
    %p25 = scmp.ne.s32.totalorder %s20, %s22
    %p26 = scmp.eq.s32.totalorder %s12, 0
    %p27 = por %p25, %p26
    %p28 = scmp.ne.s32.totalorder %s20, %s22
    %p29 = scmp.eq.s32.totalorder %s17, 1
    %p30 = por %p28, %p29
    %p31 = scmp.ne.s32.totalorder %s22, %s23
    %p32 = scmp.eq.s32.totalorder %s17, 0
    %p33 = por %p31, %p32
    %p34 = scmp.ne.s32.totalorder %s22, %s23
    %p35 = scmp.eq.s32.totalorder %s18, 1
    %p36 = por %p34, %p35
    %p38 = scmp.ne.s32.totalorder %s23, %s37
    %p39 = scmp.eq.s32.totalorder %s18, 0
    %p40 = por %p38, %p39
    %s41 = ssub.s32 %s12, %s19
    %p42 = scmp.eq.s32.totalorder %s41, 0
    %s44 = sadd.s32 %s43, 1
    %s45 = scalar_select %p42, %s43, %s44
    %p48 = pneg %p42
    %p49 = scmp.eq.s32.totalorder %s12, 1
    %p50 = por %p48, %p49
    %p51 = scmp.ne.s32.totalorder %s43, %s46
    %p52 = scmp.eq.s32.totalorder %s12, 0
    %p53 = por %p51, %p52
    %p54 = scmp.ne.s32.totalorder %s43, %s46
    %p55 = scmp.eq.s32.totalorder %s17, 1
    %p56 = por %p54, %p55
    %p57 = scmp.ne.s32.totalorder %s46, %s47
    %p58 = scmp.eq.s32.totalorder %s17, 0
    %p59 = por %p57, %p58
    %p60 = scmp.ne.s32.totalorder %s46, %s47
    %p61 = scmp.eq.s32.totalorder %s18, 1
    %p62 = por %p60, %p61
    %p64 = scmp.ne.s32.totalorder %s47, %s63
    %p65 = scmp.eq.s32.totalorder %s18, 0
    %p66 = por %p64, %p65
    %s67 = ssub.s32 %s12, %s19
    %p68 = scmp.eq.s32.totalorder %s67, 0
    %s70 = sadd.s32 %s69, 1
    %s71 = scalar_select %p68, %s69, %s70
    %p74 = pneg %p68
    %p75 = scmp.eq.s32.totalorder %s12, 1
    %p76 = por %p74, %p75
    %p77 = scmp.ne.s32.totalorder %s69, %s72
    %p78 = scmp.eq.s32.totalorder %s12, 0
    %p79 = por %p77, %p78
    %p80 = scmp.ne.s32.totalorder %s69, %s72
    %p81 = scmp.eq.s32.totalorder %s17, 1
    %p82 = por %p80, %p81
    %p83 = scmp.ne.s32.totalorder %s72, %s73
    %p84 = scmp.eq.s32.totalorder %s17, 0
    %p85 = por %p83, %p84
    %p86 = scmp.ne.s32.totalorder %s72, %s73
    %p87 = scmp.eq.s32.totalorder %s18, 1
    %p88 = por %p86, %p87
    %p90 = scmp.ne.s32.totalorder %s73, %s89
    %p91 = scmp.eq.s32.totalorder %s18, 0
    %p92 = por %p90, %p91
    %s93 = ssub.s32 %s12, %s19
    %p94 = scmp.eq.s32.totalorder %s93, 0
    %s96 = sadd.s32 %s95, 1
    %s97 = scalar_select %p94, %s95, %s96
    %p100 = pneg %p94
    %p101 = scmp.eq.s32.totalorder %s12, 1
    %p102 = por %p100, %p101
    %p103 = scmp.ne.s32.totalorder %s95, %s98
    %p104 = scmp.eq.s32.totalorder %s12, 0
    %p105 = por %p103, %p104
    %p106 = scmp.ne.s32.totalorder %s95, %s98
    %p107 = scmp.eq.s32.totalorder %s17, 1
    %p108 = por %p106, %p107
    %p109 = scmp.ne.s32.totalorder %s98, %s99
    %p110 = scmp.eq.s32.totalorder %s17, 0
    %p111 = por %p109, %p110
    %p112 = scmp.ne.s32.totalorder %s98, %s99
    %p113 = scmp.eq.s32.totalorder %s18, 1
    %p114 = por %p112, %p113
    %p116 = scmp.ne.s32.totalorder %s99, %s115
    %p117 = scmp.eq.s32.totalorder %s18, 0
    %p118 = por %p116, %p117
    %s119 = ssub.s32 %s12, %s19
    %p120 = scmp.eq.s32.totalorder %s119, 0
    %s122 = sadd.s32 %s121, 1
    %s123 = scalar_select %p120, %s121, %s122
    %p126 = pneg %p120
    %p127 = scmp.eq.s32.totalorder %s12, 1
    %p128 = por %p126, %p127
    %p129 = scmp.ne.s32.totalorder %s121, %s124
    %p130 = scmp.eq.s32.totalorder %s12, 0
    %p131 = por %p129, %p130
    %p132 = scmp.ne.s32.totalorder %s121, %s124
    %p133 = scmp.eq.s32.totalorder %s17, 1
    %p134 = por %p132, %p133
    %p135 = scmp.ne.s32.totalorder %s124, %s125
    %p136 = scmp.eq.s32.totalorder %s17, 0
    %p137 = por %p135, %p136
    %p138 = scmp.ne.s32.totalorder %s124, %s125
    %p139 = scmp.eq.s32.totalorder %s18, 1
    %p140 = por %p138, %p139
    %p142 = scmp.ne.s32.totalorder %s125, %s141
    %p143 = scmp.eq.s32.totalorder %s18, 0
    %p144 = por %p142, %p143
    %s145 = ssub.s32 %s12, %s19
    %p146 = scmp.eq.s32.totalorder %s145, 0
    %s148 = sadd.s32 %s147, 1
    %s149 = scalar_select %p146, %s147, %s148
    %p152 = pneg %p146
    %p153 = scmp.eq.s32.totalorder %s12, 1
    %p154 = por %p152, %p153
    %p155 = scmp.ne.s32.totalorder %s147, %s150
    %p156 = scmp.eq.s32.totalorder %s12, 0
    %p157 = por %p155, %p156
    %p158 = scmp.ne.s32.totalorder %s147, %s150
    %p159 = scmp.eq.s32.totalorder %s17, 1
    %p160 = por %p158, %p159
    %p161 = scmp.ne.s32.totalorder %s150, %s151
    %p162 = scmp.eq.s32.totalorder %s17, 0
    %p163 = por %p161, %p162
    %p164 = scmp.ne.s32.totalorder %s150, %s151
    %p165 = scmp.eq.s32.totalorder %s18, 1
    %p166 = por %p164, %p165
    %p168 = scmp.ne.s32.totalorder %s151, %s167
    %p169 = scmp.eq.s32.totalorder %s18, 0
    %p170 = por %p168, %p169
    %p171 = scmp.le.s32.totalorder 1, %s12
    %p172 = scmp.lt.s32.totalorder %s12, 3
    %p173 = pnand %p171, %p172
    %p174 = pneg %p173
    // Predicated region
    $region9: #{dual_convcnp_forward.5} parent=5 // pred_check
      _
    $region10: #{dual_convcnp_forward.5} parent=5 // pred_check_branch
      %176 = sbr.rel (%p173) target = $region12
    $region11: #{dual_convcnp_forward.5} parent=5 // pred_region
      %s177 = ssub.s32 %s12, 1
      // Predicated region
      $region13: #{dual_convcnp_forward.5} parent=11 // pred_check
        %p178 = pneg %p33
      $region14: #{dual_convcnp_forward.5} parent=11 // pred_check_branch
        %180 = sbr.rel (%p178) target = $region16
      $region15: #{dual_convcnp_forward.5} parent=11 // pred_region
        _
      $region16: #{dual_convcnp_forward.5} parent=11 // pred_fallthru
        _
    $region12: #{dual_convcnp_forward.5} parent=5 // pred_fallthru
      _
    %p181 = scmp.lt.s32.totalorder %s12, 2
    // Predicated region
    $region17: #{dual_convcnp_forward.5} parent=5 // pred_check
      %p182 = pneg %p181
    $region18: #{dual_convcnp_forward.5} parent=5 // pred_check_branch
      %184 = sbr.rel (%p182) target = $region20
    $region19: #{dual_convcnp_forward.5} parent=5 // pred_region
      // Predicated region
      $region21: #{dual_convcnp_forward.5} parent=19 // pred_check
        %p185 = pneg %p53
      $region22: #{dual_convcnp_forward.5} parent=19 // pred_check_branch
        %187 = sbr.rel (%p185) target = $region24
      $region23: #{dual_convcnp_forward.5} parent=19 // pred_region
        %p188 = scmp.lt.s32.totalorder %s12, 1
        %s189 = scalar_select %p188, %s12, 1
        %s190 = smul.addr %s189, 2
        %s191 = scalar_lea.vmem %s1, %s190
      $region24: #{dual_convcnp_forward.5} parent=19 // pred_fallthru
        _
      // Predicated region
      $region25: #{dual_convcnp_forward.5} parent=19 // pred_check
        %p192 = pneg %p79
      $region26: #{dual_convcnp_forward.5} parent=19 // pred_check_branch
        %194 = sbr.rel (%p192) target = $region28
      $region27: #{dual_convcnp_forward.5} parent=19 // pred_region
        %p195 = scmp.lt.s32.totalorder %s12, 1
        %s196 = scalar_select %p195, %s12, 1
        %s197 = smul.addr %s196, 8
        %s198 = scalar_lea.vmem %s2, %s197
      $region28: #{dual_convcnp_forward.5} parent=19 // pred_fallthru
        _
      // Predicated region
      $region29: #{dual_convcnp_forward.5} parent=19 // pred_check
        %p199 = pneg %p105
      $region30: #{dual_convcnp_forward.5} parent=19 // pred_check_branch
        %201 = sbr.rel (%p199) target = $region32
      $region31: #{dual_convcnp_forward.5} parent=19 // pred_region
        %p202 = scmp.lt.s32.totalorder %s12, 1
        %s203 = scalar_select %p202, %s12, 1
        %s204 = smul.addr %s203, 8
        %s205 = scalar_lea.vmem %s3, %s204
      $region32: #{dual_convcnp_forward.5} parent=19 // pred_fallthru
        _
    $region20: #{dual_convcnp_forward.5} parent=5 // pred_fallthru
      _
    %p206 = scmp.le.s32.totalorder 1, %s12
    %p207 = scmp.lt.s32.totalorder %s12, 3
    %p208 = pnand %p206, %p207
    %p209 = pneg %p208
    // Predicated region
    $region33: #{dual_convcnp_forward.5} parent=5 // pred_check
      _
    $region34: #{dual_convcnp_forward.5} parent=5 // pred_check_branch
      %211 = sbr.rel (%p208) target = $region36
    $region35: #{dual_convcnp_forward.5} parent=5 // pred_region
      %s212 = ssub.s32 %s12, 1
      %p213 = pneg %p33
      %p214 = pneg %p30
      %p215 = scmp.lt.s32.totalorder %s17, 1
      %s216 = scalar_select %p215, %s17, 1
      %s217 = smul.addr %s216, 2
      %s218 = scalar_lea.vmem %s1, %s217
      %p219 = pneg %p59
      %p220 = pneg %p56
      %p221 = scmp.lt.s32.totalorder %s17, 1
      %s222 = scalar_select %p221, %s17, 1
      %s223 = smul.addr %s222, 8
      %s224 = scalar_lea.vmem %s2, %s223
      %p225 = pneg %p85
      %p226 = pneg %p82
      %p227 = scmp.lt.s32.totalorder %s17, 1
      %s228 = scalar_select %p227, %s17, 1
      %s229 = smul.addr %s228, 8
      %s230 = scalar_lea.vmem %s3, %s229
      %p231 = pneg %p111
      %p232 = pneg %p108
      %p233 = pneg %p137
      %p234 = pneg %p134
      %p235 = scmp.lt.s32.totalorder %s17, 1
      %s236 = scalar_select %p235, %s17, 1
      %s237 = smul.addr %s236, 8
      %s238 = scalar_lea.vmem %s4, %s237
      %p239 = pneg %p163
      %p240 = pneg %p160
      %p241 = scmp.lt.s32.totalorder %s17, 1
      %s242 = scalar_select %p241, %s17, 1
      %s243 = smul.addr %s242, 8
      %s244 = scalar_lea.vmem %s5, %s243
      %p245 = scmp.lt.s32.totalorder %s17, 1
      %s246 = scalar_select %p245, %s17, 1
      %s247 = smul.addr %s246, 2
      %s248 = scalar_lea.vmem %s1, %s247
      %p249 = scmp.lt.s32.totalorder %s17, 1
      %s250 = scalar_select %p249, %s17, 1
      %s251 = smul.addr %s250, 8
      %s252 = scalar_lea.vmem %s2, %s251
      %p253 = scmp.lt.s32.totalorder %s17, 1
      %s254 = scalar_select %p253, %s17, 1
      %s255 = smul.addr %s254, 8
      %s256 = scalar_lea.vmem %s3, %s255
      %p257 = scmp.lt.s32.totalorder %s17, 1
      %s258 = scalar_select %p257, %s17, 1
      %s259 = smul.addr %s258, 8
      %s260 = scalar_lea.vmem %s4, %s259
      %p261 = scmp.lt.s32.totalorder %s17, 1
      %s262 = scalar_select %p261, %s17, 1
      %s263 = smul.addr %s262, 8
      %s264 = scalar_lea.vmem %s5, %s263
      %v266 = vld [vmem:[%s0] sm:$0x1]
      %v267 = vld [vmem:[%s248] sm:$0x3]
      %v268 = vld [vmem:[%s252] sm:$0xff]
      %270 = vset.pattern.permute.xlu0 0
      %271 = vperm.xlu0 %270, %v268
      %v272 = vpop.permute.xlu0 %271
      %v275 = vperm.slane %v266, 0
      %v277 = vsub.f32 %v272, %v275
      %v278 = vmul.f32 %v277, -128.0
      %v279 = vmul.f32 %v278, %v277
      %v280 = vmul.f32 %v279, 1.442695
      %v281 = vpow.pop %v280
      %v282 = vpack.c.bf16 %v281, %v281
      %283 = vmatpush.bf16.xpose.msra.mxu0 0
      %284 = vmatpush.bf16.xpose.msra.mxu0 0
      %285 = vmatpush.bf16.xpose.msra.mxu0 0
      %286 = vmatpush.bf16.xpose.msra.mxu0 0
      %287 = vmatpush.bf16.xpose.msra.mxu0 0
      %288 = vmatpush.bf16.xpose.msra.mxu0 0
      %289 = vmatpush.bf16.xpose.msra.mxu0 0
      %290 = vmatpush.bf16.xpose.msra.mxu0 %v267
      %291 = vmatmul.bf16.gmra.mxu0 %v282
      %v292 = vpop.f32.mrf.mxu0
      %v293 = vadd.f32 0.0, %v292
      %v294 = vpop.f32.mrf.mxu0
      %295 = vdwg.mxu0
      %vm296 = vcmask 7168
      %297 = vst.msk [vmem:[%s260] sm:$0xff] %vm296, %v293
      %v298 = vld [vmem:[%s256] sm:$0xff]
      %300 = vset.pattern.permute.xlu0 0
      %301 = vperm.xlu0 %300, %v298
      %v302 = vpop.permute.xlu0 %301
      %v304 = vsub.f32 %v302, %v275
      %v305 = vmul.f32 %v304, -128.0
      %v306 = vmul.f32 %v305, %v304
      %v307 = vmul.f32 %v306, 1.442695
      %v308 = vpow.pop %v307
      %v309 = vpack.c.bf16 %v308, %v308
      %310 = vmatpush.bf16.xpose.msra.mxu0 0
      %311 = vmatpush.bf16.xpose.msra.mxu0 0
      %312 = vmatpush.bf16.xpose.msra.mxu0 0
      %313 = vmatpush.bf16.xpose.msra.mxu0 0
      %314 = vmatpush.bf16.xpose.msra.mxu0 0
      %315 = vmatpush.bf16.xpose.msra.mxu0 0
      %316 = vmatpush.bf16.xpose.msra.mxu0 0
      %317 = vmatpush.bf16.xpose.msra.mxu0 %v267
      %318 = vmatmul.bf16.gmra.mxu0 %v309
      %v319 = vpop.f32.mrf.mxu0
      %v320 = vadd.f32 0.0, %v319
      %v321 = vpop.f32.mrf.mxu0
      %322 = vdwg.mxu0
      %324 = vrot.lane.b32.xlu0 %v320, 127
      %v325 = vpop.permute.xlu0 %324
      %vm327 = vcmask 15360
      %328 = vst.msk [vmem:[%s264] sm:$0xff] %vm327, %v325
      %p329 = scmp.lt.s32.totalorder %s17, 1
      %s330 = scalar_select %p329, %s17, 1
      %s331 = smul.addr %s330, 8
      %s332 = scalar_lea.vmem %s4, %s331
      %p333 = scmp.lt.s32.totalorder %s17, 1
      %s334 = scalar_select %p333, %s17, 1
      %s335 = smul.addr %s334, 8
      %s336 = scalar_lea.vmem %s5, %s335
      // Predicated region
      $region37: #{dual_convcnp_forward.5} parent=35 // pred_check
        %p337 = pneg %p134
      $region38: #{dual_convcnp_forward.5} parent=35 // pred_check_branch
        %339 = sbr.rel (%p337) target = $region40
      $region39: #{dual_convcnp_forward.5} parent=35 // pred_region
        _
      $region40: #{dual_convcnp_forward.5} parent=35 // pred_fallthru
        _
      // Predicated region
      $region41: #{dual_convcnp_forward.5} parent=35 // pred_check
        %p340 = pneg %p160
      $region42: #{dual_convcnp_forward.5} parent=35 // pred_check_branch
        %342 = sbr.rel (%p340) target = $region44
      $region43: #{dual_convcnp_forward.5} parent=35 // pred_region
        _
      $region44: #{dual_convcnp_forward.5} parent=35 // pred_fallthru
        _
    $region36: #{dual_convcnp_forward.5} parent=5 // pred_fallthru
      _
    %p343 = scmp.le.s32.totalorder 2, %s12
    // Predicated region
    $region45: #{dual_convcnp_forward.5} parent=5 // pred_check
      %p344 = pneg %p343
    $region46: #{dual_convcnp_forward.5} parent=5 // pred_check_branch
      %346 = sbr.rel (%p344) target = $region48
    $region47: #{dual_convcnp_forward.5} parent=5 // pred_region
      %s347 = ssub.s32 %s12, 2
      // Predicated region
      $region49: #{dual_convcnp_forward.5} parent=47 // pred_check
        %p348 = pneg %p140
      $region50: #{dual_convcnp_forward.5} parent=47 // pred_check_branch
        %350 = sbr.rel (%p348) target = $region52
      $region51: #{dual_convcnp_forward.5} parent=47 // pred_region
        %p351 = scmp.lt.s32.totalorder %s18, 1
        %s352 = scalar_select %p351, %s18, 1
        %s353 = smul.addr %s352, 8
        %s354 = scalar_lea.vmem %s4, %s353
      $region52: #{dual_convcnp_forward.5} parent=47 // pred_fallthru
        _
      // Predicated region
      $region53: #{dual_convcnp_forward.5} parent=47 // pred_check
        %p355 = pneg %p166
      $region54: #{dual_convcnp_forward.5} parent=47 // pred_check_branch
        %357 = sbr.rel (%p355) target = $region56
      $region55: #{dual_convcnp_forward.5} parent=47 // pred_region
        %p358 = scmp.lt.s32.totalorder %s18, 1
        %s359 = scalar_select %p358, %s18, 1
        %s360 = smul.addr %s359, 8
        %s361 = scalar_lea.vmem %s5, %s360
      $region56: #{dual_convcnp_forward.5} parent=47 // pred_fallthru
        _
    $region48: #{dual_convcnp_forward.5} parent=5 // pred_fallthru
      _
  $region6: #{dual_convcnp_forward.5} parent=0 // loop_footer
    %s16 = sadd.s32 1, %s12
  $region7: #{dual_convcnp_forward.5} parent=0 // loop_footer_branch
    %11 = sbr.rel target = $region3
  $region8: #{dual_convcnp_forward.5} parent=0 // loop_exit
    _

// kernel: dual_convcnp_forward.4
$region0: #{dual_convcnp_forward.4}
  #allocation0 [shape = 'u32[]', space=smem, size = 0x4, offset = 0x4, fixed_abs, tag = 'smem constant byte address 0x4 - core index']
  #allocation1 [shape = 'u32[72,128]{1,0:T(1,128)}', space=vmem, size = 0x9000, scoped, tag = 'internal scratch']
  %s0 = inlined_call_operand.vmem [shape: bf16[2,4,128], index: 0, kind: input, shape index: {}]
  %s1 = inlined_call_operand.vmem [shape: bf16[8,4], index: 1, kind: input, shape index: {}]
  %s2 = inlined_call_operand.vmem [shape: f32[8,1], index: 2, kind: input, shape index: {}]
  %s3 = inlined_call_operand.vmem [shape: bf16[40,8], index: 3, kind: input, shape index: {}]
  %s4 = inlined_call_operand.vmem [shape: f32[8,1], index: 4, kind: input, shape index: {}]
  %s5 = inlined_call_operand.vmem [shape: bf16[80,8], index: 5, kind: input, shape index: {}]
  %s6 = inlined_call_operand.vmem [shape: f32[16,1], index: 6, kind: input, shape index: {}]
  %s7 = inlined_call_operand.vmem [shape: bf16[80,16], index: 7, kind: input, shape index: {}]
  %s8 = inlined_call_operand.vmem [shape: f32[16,1], index: 8, kind: input, shape index: {}]
  %s9 = inlined_call_operand.vmem [shape: bf16[160,16], index: 9, kind: input, shape index: {}]
  %s10 = inlined_call_operand.vmem [shape: f32[32,1], index: 10, kind: input, shape index: {}]
  %s11 = inlined_call_operand.vmem [shape: bf16[24,16], index: 11, kind: input, shape index: {}]
  %s12 = inlined_call_operand.vmem [shape: bf16[16,16], index: 12, kind: input, shape index: {}]
  %s13 = inlined_call_operand.vmem [shape: f32[8,1], index: 13, kind: input, shape index: {}]
  %s14 = inlined_call_operand.vmem [shape: bf16[24,32], index: 14, kind: input, shape index: {}]
  %s15 = inlined_call_operand.vmem [shape: bf16[16,32], index: 15, kind: input, shape index: {}]
  %s16 = inlined_call_operand.vmem [shape: f32[8,1], index: 16, kind: input, shape index: {}]
  %s17 = inlined_call_operand.vmem [shape: bf16[48,32], index: 17, kind: input, shape index: {}]
  %s18 = inlined_call_operand.vmem [shape: bf16[32,32], index: 18, kind: input, shape index: {}]
  %s19 = inlined_call_operand.vmem [shape: f32[16,1], index: 19, kind: input, shape index: {}]
  %s20 = inlined_call_operand.vmem [shape: bf16[48,32], index: 20, kind: input, shape index: {}]
  %s21 = inlined_call_operand.vmem [shape: bf16[32,32], index: 21, kind: input, shape index: {}]
  %s22 = inlined_call_operand.vmem [shape: f32[16,1], index: 22, kind: input, shape index: {}]
  %s23 = inlined_call_operand.vmem [shape: bf16[3,8], index: 23, kind: input, shape index: {}]
  %s24 = inlined_call_operand.vmem [shape: f32[3,1], index: 24, kind: input, shape index: {}]
  %s25 = inlined_call_operand.vmem [shape: bf16[2,3,128], index: 25, kind: output, shape index: {}]
  %s26 = sld [smem:[#allocation0]]
  $region133: #{dual_convcnp_forward.4} parent=0
    _
  %s28 = ssub.s32 1, %s26
  %s29 = scalar_select 0, %s28, %s26
  loop: start=0, step=1, limit=4
  $region2: #{dual_convcnp_forward.4} parent=0 // loop_pre_header
    _
  $region3: #{dual_convcnp_forward.4} parent=0 // loop_header
    %s31 = sphi 0, %s35
    %p32 = scmp.ge.s32.totalorder %s31, 4
    %s41 = sphi 0, %s43
    %s44 = sphi 0, %s41
    %s45 = sphi 0, %s44
    %s61 = sphi 0, %s45
    %s65 = sphi 0, %s65
    %s67 = sphi 0, %s65
    %s68 = sphi 0, %s67
    %s82 = sphi 0, %s68
    %s86 = sphi 0, %s86
    %s88 = sphi 0, %s86
    %s89 = sphi 0, %s88
    %s103 = sphi 0, %s89
    %s107 = sphi 0, %s107
    %s109 = sphi 0, %s107
    %s110 = sphi 0, %s109
    %s124 = sphi 0, %s110
    %s128 = sphi 0, %s128
    %s130 = sphi 0, %s128
    %s131 = sphi 0, %s130
    %s145 = sphi 0, %s131
    %s149 = sphi 0, %s149
    %s151 = sphi 0, %s149
    %s152 = sphi 0, %s151
    %s166 = sphi 0, %s152
    %s170 = sphi 0, %s170
    %s172 = sphi 0, %s170
    %s173 = sphi 0, %s172
    %s187 = sphi 0, %s173
    %s191 = sphi 0, %s191
    %s193 = sphi 0, %s191
    %s194 = sphi 0, %s193
    %s208 = sphi 0, %s194
    %s212 = sphi 0, %s212
    %s214 = sphi 0, %s212
    %s215 = sphi 0, %s214
    %s229 = sphi 0, %s215
    %s233 = sphi 0, %s233
    %s235 = sphi 0, %s233
    %s236 = sphi 0, %s235
    %s250 = sphi 0, %s236
    %s254 = sphi 0, %s254
    %s256 = sphi 0, %s254
    %s257 = sphi 0, %s256
    %s271 = sphi 0, %s257
    %s275 = sphi 0, %s275
    %s277 = sphi 0, %s275
    %s278 = sphi 0, %s277
    %s292 = sphi 0, %s278
    %s296 = sphi 0, %s296
    %s298 = sphi 0, %s296
    %s299 = sphi 0, %s298
    %s313 = sphi 0, %s299
    %s317 = sphi 0, %s317
    %s319 = sphi 0, %s317
    %s320 = sphi 0, %s319
    %s334 = sphi 0, %s320
    %s338 = sphi 0, %s338
    %s340 = sphi 0, %s338
    %s341 = sphi 0, %s340
    %s355 = sphi 0, %s341
    %s359 = sphi 0, %s359
    %s361 = sphi 0, %s359
    %s362 = sphi 0, %s361
    %s376 = sphi 0, %s362
    %s380 = sphi 0, %s380
    %s382 = sphi 0, %s380
    %s383 = sphi 0, %s382
    %s397 = sphi 0, %s383
    %s401 = sphi 0, %s401
    %s403 = sphi 0, %s401
    %s404 = sphi 0, %s403
    %s418 = sphi 0, %s404
    %s422 = sphi 0, %s422
    %s424 = sphi 0, %s422
    %s425 = sphi 0, %s424
    %s439 = sphi 0, %s425
    %s443 = sphi 0, %s443
    %s445 = sphi 0, %s443
    %s446 = sphi 0, %s445
    %s460 = sphi 0, %s446
    %s464 = sphi 0, %s464
    %s466 = sphi 0, %s464
    %s467 = sphi 0, %s466
    %s481 = sphi 0, %s467
    %s485 = sphi 0, %s485
    %s487 = sphi 0, %s485
    %s488 = sphi 0, %s487
    %s502 = sphi 0, %s488
    %s506 = sphi 0, %s506
    %s508 = sphi 0, %s506
    %s509 = sphi 0, %s508
    %s523 = sphi 0, %s509
    %s527 = sphi 0, %s527
    %s529 = sphi 0, %s527
    %s530 = sphi 0, %s529
    %s544 = sphi 0, %s530
    %s548 = sphi 0, %s548
    %s550 = sphi 0, %s548
    %s551 = sphi 0, %s550
    %s565 = sphi 0, %s551
    %s571 = sphi 0, %s573
    %s574 = sphi 0, %s571
    %s575 = sphi 0, %s574
    %s591 = sphi 0, %s575
  $region4: #{dual_convcnp_forward.4} parent=0 // loop_header_branch
    %34 = sbr.rel (%p32) target = $region8
  $region5: #{dual_convcnp_forward.4} parent=0 // loop_body
    %s36 = ssub.s32 %s31, 1
    %s37 = ssub.s32 %s31, 2
    %s38 = sadd.s32 %s31, 1
    %s39 = ssub.s32 %s31, %s38
    %p40 = scmp.eq.s32.totalorder %s39, 0
    %s42 = sadd.s32 %s41, 1
    %s43 = scalar_select %p40, %s41, %s42
    %p46 = pneg %p40
    %p47 = scmp.eq.s32.totalorder %s31, 1
    %p48 = por %p46, %p47
    %p49 = scmp.ne.s32.totalorder %s41, %s44
    %p50 = scmp.eq.s32.totalorder %s31, 0
    %p51 = por %p49, %p50
    %p52 = scmp.ne.s32.totalorder %s41, %s44
    %p53 = scmp.eq.s32.totalorder %s36, 1
    %p54 = por %p52, %p53
    %p55 = scmp.ne.s32.totalorder %s44, %s45
    %p56 = scmp.eq.s32.totalorder %s36, 0
    %p57 = por %p55, %p56
    %p58 = scmp.ne.s32.totalorder %s44, %s45
    %p59 = scmp.eq.s32.totalorder %s37, 1
    %p60 = por %p58, %p59
    %p62 = scmp.ne.s32.totalorder %s45, %s61
    %p63 = scmp.eq.s32.totalorder %s37, 0
    %p64 = por %p62, %p63
    %s66 = sadd.s32 %s65, 1
    %p69 = scmp.eq.s32.totalorder %s31, 1
    %p70 = scmp.ne.s32.totalorder %s65, %s67
    %p71 = scmp.eq.s32.totalorder %s31, 0
    %p72 = por %p70, %p71
    %p73 = scmp.ne.s32.totalorder %s65, %s67
    %p74 = scmp.eq.s32.totalorder %s36, 1
    %p75 = por %p73, %p74
    %p76 = scmp.ne.s32.totalorder %s67, %s68
    %p77 = scmp.eq.s32.totalorder %s36, 0
    %p78 = por %p76, %p77
    %p79 = scmp.ne.s32.totalorder %s67, %s68
    %p80 = scmp.eq.s32.totalorder %s37, 1
    %p81 = por %p79, %p80
    %p83 = scmp.ne.s32.totalorder %s68, %s82
    %p84 = scmp.eq.s32.totalorder %s37, 0
    %p85 = por %p83, %p84
    %s87 = sadd.s32 %s86, 1
    %p90 = scmp.eq.s32.totalorder %s31, 1
    %p91 = scmp.ne.s32.totalorder %s86, %s88
    %p92 = scmp.eq.s32.totalorder %s31, 0
    %p93 = por %p91, %p92
    %p94 = scmp.ne.s32.totalorder %s86, %s88
    %p95 = scmp.eq.s32.totalorder %s36, 1
    %p96 = por %p94, %p95
    %p97 = scmp.ne.s32.totalorder %s88, %s89
    %p98 = scmp.eq.s32.totalorder %s36, 0
    %p99 = por %p97, %p98
    %p100 = scmp.ne.s32.totalorder %s88, %s89
    %p101 = scmp.eq.s32.totalorder %s37, 1
    %p102 = por %p100, %p101
    %p104 = scmp.ne.s32.totalorder %s89, %s103
    %p105 = scmp.eq.s32.totalorder %s37, 0
    %p106 = por %p104, %p105
    %s108 = sadd.s32 %s107, 1
    %p111 = scmp.eq.s32.totalorder %s31, 1
    %p112 = scmp.ne.s32.totalorder %s107, %s109
    %p113 = scmp.eq.s32.totalorder %s31, 0
    %p114 = por %p112, %p113
    %p115 = scmp.ne.s32.totalorder %s107, %s109
    %p116 = scmp.eq.s32.totalorder %s36, 1
    %p117 = por %p115, %p116
    %p118 = scmp.ne.s32.totalorder %s109, %s110
    %p119 = scmp.eq.s32.totalorder %s36, 0
    %p120 = por %p118, %p119
    %p121 = scmp.ne.s32.totalorder %s109, %s110
    %p122 = scmp.eq.s32.totalorder %s37, 1
    %p123 = por %p121, %p122
    %p125 = scmp.ne.s32.totalorder %s110, %s124
    %p126 = scmp.eq.s32.totalorder %s37, 0
    %p127 = por %p125, %p126
    %s129 = sadd.s32 %s128, 1
    %p132 = scmp.eq.s32.totalorder %s31, 1
    %p133 = scmp.ne.s32.totalorder %s128, %s130
    %p134 = scmp.eq.s32.totalorder %s31, 0
    %p135 = por %p133, %p134
    %p136 = scmp.ne.s32.totalorder %s128, %s130
    %p137 = scmp.eq.s32.totalorder %s36, 1
    %p138 = por %p136, %p137
    %p139 = scmp.ne.s32.totalorder %s130, %s131
    %p140 = scmp.eq.s32.totalorder %s36, 0
    %p141 = por %p139, %p140
    %p142 = scmp.ne.s32.totalorder %s130, %s131
    %p143 = scmp.eq.s32.totalorder %s37, 1
    %p144 = por %p142, %p143
    %p146 = scmp.ne.s32.totalorder %s131, %s145
    %p147 = scmp.eq.s32.totalorder %s37, 0
    %p148 = por %p146, %p147
    %s150 = sadd.s32 %s149, 1
    %p153 = scmp.eq.s32.totalorder %s31, 1
    %p154 = scmp.ne.s32.totalorder %s149, %s151
    %p155 = scmp.eq.s32.totalorder %s31, 0
    %p156 = por %p154, %p155
    %p157 = scmp.ne.s32.totalorder %s149, %s151
    %p158 = scmp.eq.s32.totalorder %s36, 1
    %p159 = por %p157, %p158
    %p160 = scmp.ne.s32.totalorder %s151, %s152
    %p161 = scmp.eq.s32.totalorder %s36, 0
    %p162 = por %p160, %p161
    %p163 = scmp.ne.s32.totalorder %s151, %s152
    %p164 = scmp.eq.s32.totalorder %s37, 1
    %p165 = por %p163, %p164
    %p167 = scmp.ne.s32.totalorder %s152, %s166
    %p168 = scmp.eq.s32.totalorder %s37, 0
    %p169 = por %p167, %p168
    %s171 = sadd.s32 %s170, 1
    %p174 = scmp.eq.s32.totalorder %s31, 1
    %p175 = scmp.ne.s32.totalorder %s170, %s172
    %p176 = scmp.eq.s32.totalorder %s31, 0
    %p177 = por %p175, %p176
    %p178 = scmp.ne.s32.totalorder %s170, %s172
    %p179 = scmp.eq.s32.totalorder %s36, 1
    %p180 = por %p178, %p179
    %p181 = scmp.ne.s32.totalorder %s172, %s173
    %p182 = scmp.eq.s32.totalorder %s36, 0
    %p183 = por %p181, %p182
    %p184 = scmp.ne.s32.totalorder %s172, %s173
    %p185 = scmp.eq.s32.totalorder %s37, 1
    %p186 = por %p184, %p185
    %p188 = scmp.ne.s32.totalorder %s173, %s187
    %p189 = scmp.eq.s32.totalorder %s37, 0
    %p190 = por %p188, %p189
    %s192 = sadd.s32 %s191, 1
    %p195 = scmp.eq.s32.totalorder %s31, 1
    %p196 = scmp.ne.s32.totalorder %s191, %s193
    %p197 = scmp.eq.s32.totalorder %s31, 0
    %p198 = por %p196, %p197
    %p199 = scmp.ne.s32.totalorder %s191, %s193
    %p200 = scmp.eq.s32.totalorder %s36, 1
    %p201 = por %p199, %p200
    %p202 = scmp.ne.s32.totalorder %s193, %s194
    %p203 = scmp.eq.s32.totalorder %s36, 0
    %p204 = por %p202, %p203
    %p205 = scmp.ne.s32.totalorder %s193, %s194
    %p206 = scmp.eq.s32.totalorder %s37, 1
    %p207 = por %p205, %p206
    %p209 = scmp.ne.s32.totalorder %s194, %s208
    %p210 = scmp.eq.s32.totalorder %s37, 0
    %p211 = por %p209, %p210
    %s213 = sadd.s32 %s212, 1
    %p216 = scmp.eq.s32.totalorder %s31, 1
    %p217 = scmp.ne.s32.totalorder %s212, %s214
    %p218 = scmp.eq.s32.totalorder %s31, 0
    %p219 = por %p217, %p218
    %p220 = scmp.ne.s32.totalorder %s212, %s214
    %p221 = scmp.eq.s32.totalorder %s36, 1
    %p222 = por %p220, %p221
    %p223 = scmp.ne.s32.totalorder %s214, %s215
    %p224 = scmp.eq.s32.totalorder %s36, 0
    %p225 = por %p223, %p224
    %p226 = scmp.ne.s32.totalorder %s214, %s215
    %p227 = scmp.eq.s32.totalorder %s37, 1
    %p228 = por %p226, %p227
    %p230 = scmp.ne.s32.totalorder %s215, %s229
    %p231 = scmp.eq.s32.totalorder %s37, 0
    %p232 = por %p230, %p231
    %s234 = sadd.s32 %s233, 1
    %p237 = scmp.eq.s32.totalorder %s31, 1
    %p238 = scmp.ne.s32.totalorder %s233, %s235
    %p239 = scmp.eq.s32.totalorder %s31, 0
    %p240 = por %p238, %p239
    %p241 = scmp.ne.s32.totalorder %s233, %s235
    %p242 = scmp.eq.s32.totalorder %s36, 1
    %p243 = por %p241, %p242
    %p244 = scmp.ne.s32.totalorder %s235, %s236
    %p245 = scmp.eq.s32.totalorder %s36, 0
    %p246 = por %p244, %p245
    %p247 = scmp.ne.s32.totalorder %s235, %s236
    %p248 = scmp.eq.s32.totalorder %s37, 1
    %p249 = por %p247, %p248
    %p251 = scmp.ne.s32.totalorder %s236, %s250
    %p252 = scmp.eq.s32.totalorder %s37, 0
    %p253 = por %p251, %p252
    %s255 = sadd.s32 %s254, 1
    %p258 = scmp.eq.s32.totalorder %s31, 1
    %p259 = scmp.ne.s32.totalorder %s254, %s256
    %p260 = scmp.eq.s32.totalorder %s31, 0
    %p261 = por %p259, %p260
    %p262 = scmp.ne.s32.totalorder %s254, %s256
    %p263 = scmp.eq.s32.totalorder %s36, 1
    %p264 = por %p262, %p263
    %p265 = scmp.ne.s32.totalorder %s256, %s257
    %p266 = scmp.eq.s32.totalorder %s36, 0
    %p267 = por %p265, %p266
    %p268 = scmp.ne.s32.totalorder %s256, %s257
    %p269 = scmp.eq.s32.totalorder %s37, 1
    %p270 = por %p268, %p269
    %p272 = scmp.ne.s32.totalorder %s257, %s271
    %p273 = scmp.eq.s32.totalorder %s37, 0
    %p274 = por %p272, %p273
    %s276 = sadd.s32 %s275, 1
    %p279 = scmp.eq.s32.totalorder %s31, 1
    %p280 = scmp.ne.s32.totalorder %s275, %s277
    %p281 = scmp.eq.s32.totalorder %s31, 0
    %p282 = por %p280, %p281
    %p283 = scmp.ne.s32.totalorder %s275, %s277
    %p284 = scmp.eq.s32.totalorder %s36, 1
    %p285 = por %p283, %p284
    %p286 = scmp.ne.s32.totalorder %s277, %s278
    %p287 = scmp.eq.s32.totalorder %s36, 0
    %p288 = por %p286, %p287
    %p289 = scmp.ne.s32.totalorder %s277, %s278
    %p290 = scmp.eq.s32.totalorder %s37, 1
    %p291 = por %p289, %p290
    %p293 = scmp.ne.s32.totalorder %s278, %s292
    %p294 = scmp.eq.s32.totalorder %s37, 0
    %p295 = por %p293, %p294
    %s297 = sadd.s32 %s296, 1
    %p300 = scmp.eq.s32.totalorder %s31, 1
    %p301 = scmp.ne.s32.totalorder %s296, %s298
    %p302 = scmp.eq.s32.totalorder %s31, 0
    %p303 = por %p301, %p302
    %p304 = scmp.ne.s32.totalorder %s296, %s298
    %p305 = scmp.eq.s32.totalorder %s36, 1
    %p306 = por %p304, %p305
    %p307 = scmp.ne.s32.totalorder %s298, %s299
    %p308 = scmp.eq.s32.totalorder %s36, 0
    %p309 = por %p307, %p308
    %p310 = scmp.ne.s32.totalorder %s298, %s299
    %p311 = scmp.eq.s32.totalorder %s37, 1
    %p312 = por %p310, %p311
    %p314 = scmp.ne.s32.totalorder %s299, %s313
    %p315 = scmp.eq.s32.totalorder %s37, 0
    %p316 = por %p314, %p315
    %s318 = sadd.s32 %s317, 1
    %p321 = scmp.eq.s32.totalorder %s31, 1
    %p322 = scmp.ne.s32.totalorder %s317, %s319
    %p323 = scmp.eq.s32.totalorder %s31, 0
    %p324 = por %p322, %p323
    %p325 = scmp.ne.s32.totalorder %s317, %s319
    %p326 = scmp.eq.s32.totalorder %s36, 1
    %p327 = por %p325, %p326
    %p328 = scmp.ne.s32.totalorder %s319, %s320
    %p329 = scmp.eq.s32.totalorder %s36, 0
    %p330 = por %p328, %p329
    %p331 = scmp.ne.s32.totalorder %s319, %s320
    %p332 = scmp.eq.s32.totalorder %s37, 1
    %p333 = por %p331, %p332
    %p335 = scmp.ne.s32.totalorder %s320, %s334
    %p336 = scmp.eq.s32.totalorder %s37, 0
    %p337 = por %p335, %p336
    %s339 = sadd.s32 %s338, 1
    %p342 = scmp.eq.s32.totalorder %s31, 1
    %p343 = scmp.ne.s32.totalorder %s338, %s340
    %p344 = scmp.eq.s32.totalorder %s31, 0
    %p345 = por %p343, %p344
    %p346 = scmp.ne.s32.totalorder %s338, %s340
    %p347 = scmp.eq.s32.totalorder %s36, 1
    %p348 = por %p346, %p347
    %p349 = scmp.ne.s32.totalorder %s340, %s341
    %p350 = scmp.eq.s32.totalorder %s36, 0
    %p351 = por %p349, %p350
    %p352 = scmp.ne.s32.totalorder %s340, %s341
    %p353 = scmp.eq.s32.totalorder %s37, 1
    %p354 = por %p352, %p353
    %p356 = scmp.ne.s32.totalorder %s341, %s355
    %p357 = scmp.eq.s32.totalorder %s37, 0
    %p358 = por %p356, %p357
    %s360 = sadd.s32 %s359, 1
    %p363 = scmp.eq.s32.totalorder %s31, 1
    %p364 = scmp.ne.s32.totalorder %s359, %s361
    %p365 = scmp.eq.s32.totalorder %s31, 0
    %p366 = por %p364, %p365
    %p367 = scmp.ne.s32.totalorder %s359, %s361
    %p368 = scmp.eq.s32.totalorder %s36, 1
    %p369 = por %p367, %p368
    %p370 = scmp.ne.s32.totalorder %s361, %s362
    %p371 = scmp.eq.s32.totalorder %s36, 0
    %p372 = por %p370, %p371
    %p373 = scmp.ne.s32.totalorder %s361, %s362
    %p374 = scmp.eq.s32.totalorder %s37, 1
    %p375 = por %p373, %p374
    %p377 = scmp.ne.s32.totalorder %s362, %s376
    %p378 = scmp.eq.s32.totalorder %s37, 0
    %p379 = por %p377, %p378
    %s381 = sadd.s32 %s380, 1
    %p384 = scmp.eq.s32.totalorder %s31, 1
    %p385 = scmp.ne.s32.totalorder %s380, %s382
    %p386 = scmp.eq.s32.totalorder %s31, 0
    %p387 = por %p385, %p386
    %p388 = scmp.ne.s32.totalorder %s380, %s382
    %p389 = scmp.eq.s32.totalorder %s36, 1
    %p390 = por %p388, %p389
    %p391 = scmp.ne.s32.totalorder %s382, %s383
    %p392 = scmp.eq.s32.totalorder %s36, 0
    %p393 = por %p391, %p392
    %p394 = scmp.ne.s32.totalorder %s382, %s383
    %p395 = scmp.eq.s32.totalorder %s37, 1
    %p396 = por %p394, %p395
    %p398 = scmp.ne.s32.totalorder %s383, %s397
    %p399 = scmp.eq.s32.totalorder %s37, 0
    %p400 = por %p398, %p399
    %s402 = sadd.s32 %s401, 1
    %p405 = scmp.eq.s32.totalorder %s31, 1
    %p406 = scmp.ne.s32.totalorder %s401, %s403
    %p407 = scmp.eq.s32.totalorder %s31, 0
    %p408 = por %p406, %p407
    %p409 = scmp.ne.s32.totalorder %s401, %s403
    %p410 = scmp.eq.s32.totalorder %s36, 1
    %p411 = por %p409, %p410
    %p412 = scmp.ne.s32.totalorder %s403, %s404
    %p413 = scmp.eq.s32.totalorder %s36, 0
    %p414 = por %p412, %p413
    %p415 = scmp.ne.s32.totalorder %s403, %s404
    %p416 = scmp.eq.s32.totalorder %s37, 1
    %p417 = por %p415, %p416
    %p419 = scmp.ne.s32.totalorder %s404, %s418
    %p420 = scmp.eq.s32.totalorder %s37, 0
    %p421 = por %p419, %p420
    %s423 = sadd.s32 %s422, 1
    %p426 = scmp.eq.s32.totalorder %s31, 1
    %p427 = scmp.ne.s32.totalorder %s422, %s424
    %p428 = scmp.eq.s32.totalorder %s31, 0
    %p429 = por %p427, %p428
    %p430 = scmp.ne.s32.totalorder %s422, %s424
    %p431 = scmp.eq.s32.totalorder %s36, 1
    %p432 = por %p430, %p431
    %p433 = scmp.ne.s32.totalorder %s424, %s425
    %p434 = scmp.eq.s32.totalorder %s36, 0
    %p435 = por %p433, %p434
    %p436 = scmp.ne.s32.totalorder %s424, %s425
    %p437 = scmp.eq.s32.totalorder %s37, 1
    %p438 = por %p436, %p437
    %p440 = scmp.ne.s32.totalorder %s425, %s439
    %p441 = scmp.eq.s32.totalorder %s37, 0
    %p442 = por %p440, %p441
    %s444 = sadd.s32 %s443, 1
    %p447 = scmp.eq.s32.totalorder %s31, 1
    %p448 = scmp.ne.s32.totalorder %s443, %s445
    %p449 = scmp.eq.s32.totalorder %s31, 0
    %p450 = por %p448, %p449
    %p451 = scmp.ne.s32.totalorder %s443, %s445
    %p452 = scmp.eq.s32.totalorder %s36, 1
    %p453 = por %p451, %p452
    %p454 = scmp.ne.s32.totalorder %s445, %s446
    %p455 = scmp.eq.s32.totalorder %s36, 0
    %p456 = por %p454, %p455
    %p457 = scmp.ne.s32.totalorder %s445, %s446
    %p458 = scmp.eq.s32.totalorder %s37, 1
    %p459 = por %p457, %p458
    %p461 = scmp.ne.s32.totalorder %s446, %s460
    %p462 = scmp.eq.s32.totalorder %s37, 0
    %p463 = por %p461, %p462
    %s465 = sadd.s32 %s464, 1
    %p468 = scmp.eq.s32.totalorder %s31, 1
    %p469 = scmp.ne.s32.totalorder %s464, %s466
    %p470 = scmp.eq.s32.totalorder %s31, 0
    %p471 = por %p469, %p470
    %p472 = scmp.ne.s32.totalorder %s464, %s466
    %p473 = scmp.eq.s32.totalorder %s36, 1
    %p474 = por %p472, %p473
    %p475 = scmp.ne.s32.totalorder %s466, %s467
    %p476 = scmp.eq.s32.totalorder %s36, 0
    %p477 = por %p475, %p476
    %p478 = scmp.ne.s32.totalorder %s466, %s467
    %p479 = scmp.eq.s32.totalorder %s37, 1
    %p480 = por %p478, %p479
    %p482 = scmp.ne.s32.totalorder %s467, %s481
    %p483 = scmp.eq.s32.totalorder %s37, 0
    %p484 = por %p482, %p483
    %s486 = sadd.s32 %s485, 1
    %p489 = scmp.eq.s32.totalorder %s31, 1
    %p490 = scmp.ne.s32.totalorder %s485, %s487
    %p491 = scmp.eq.s32.totalorder %s31, 0
    %p492 = por %p490, %p491
    %p493 = scmp.ne.s32.totalorder %s485, %s487
    %p494 = scmp.eq.s32.totalorder %s36, 1
    %p495 = por %p493, %p494
    %p496 = scmp.ne.s32.totalorder %s487, %s488
    %p497 = scmp.eq.s32.totalorder %s36, 0
    %p498 = por %p496, %p497
    %p499 = scmp.ne.s32.totalorder %s487, %s488
    %p500 = scmp.eq.s32.totalorder %s37, 1
    %p501 = por %p499, %p500
    %p503 = scmp.ne.s32.totalorder %s488, %s502
    %p504 = scmp.eq.s32.totalorder %s37, 0
    %p505 = por %p503, %p504
    %s507 = sadd.s32 %s506, 1
    %p510 = scmp.eq.s32.totalorder %s31, 1
    %p511 = scmp.ne.s32.totalorder %s506, %s508
    %p512 = scmp.eq.s32.totalorder %s31, 0
    %p513 = por %p511, %p512
    %p514 = scmp.ne.s32.totalorder %s506, %s508
    %p515 = scmp.eq.s32.totalorder %s36, 1
    %p516 = por %p514, %p515
    %p517 = scmp.ne.s32.totalorder %s508, %s509
    %p518 = scmp.eq.s32.totalorder %s36, 0
    %p519 = por %p517, %p518
    %p520 = scmp.ne.s32.totalorder %s508, %s509
    %p521 = scmp.eq.s32.totalorder %s37, 1
    %p522 = por %p520, %p521
    %p524 = scmp.ne.s32.totalorder %s509, %s523
    %p525 = scmp.eq.s32.totalorder %s37, 0
    %p526 = por %p524, %p525
    %s528 = sadd.s32 %s527, 1
    %p531 = scmp.eq.s32.totalorder %s31, 1
    %p532 = scmp.ne.s32.totalorder %s527, %s529
    %p533 = scmp.eq.s32.totalorder %s31, 0
    %p534 = por %p532, %p533
    %p535 = scmp.ne.s32.totalorder %s527, %s529
    %p536 = scmp.eq.s32.totalorder %s36, 1
    %p537 = por %p535, %p536
    %p538 = scmp.ne.s32.totalorder %s529, %s530
    %p539 = scmp.eq.s32.totalorder %s36, 0
    %p540 = por %p538, %p539
    %p541 = scmp.ne.s32.totalorder %s529, %s530
    %p542 = scmp.eq.s32.totalorder %s37, 1
    %p543 = por %p541, %p542
    %p545 = scmp.ne.s32.totalorder %s530, %s544
    %p546 = scmp.eq.s32.totalorder %s37, 0
    %p547 = por %p545, %p546
    %s549 = sadd.s32 %s548, 1
    %p552 = scmp.eq.s32.totalorder %s31, 1
    %p553 = scmp.ne.s32.totalorder %s548, %s550
    %p554 = scmp.eq.s32.totalorder %s31, 0
    %p555 = por %p553, %p554
    %p556 = scmp.ne.s32.totalorder %s548, %s550
    %p557 = scmp.eq.s32.totalorder %s36, 1
    %p558 = por %p556, %p557
    %p559 = scmp.ne.s32.totalorder %s550, %s551
    %p560 = scmp.eq.s32.totalorder %s36, 0
    %p561 = por %p559, %p560
    %p562 = scmp.ne.s32.totalorder %s550, %s551
    %p563 = scmp.eq.s32.totalorder %s37, 1
    %p564 = por %p562, %p563
    %p566 = scmp.ne.s32.totalorder %s551, %s565
    %p567 = scmp.eq.s32.totalorder %s37, 0
    %p568 = por %p566, %p567
    %s569 = ssub.s32 %s31, %s38
    %p570 = scmp.eq.s32.totalorder %s569, 0
    %s572 = sadd.s32 %s571, 1
    %s573 = scalar_select %p570, %s571, %s572
    %p576 = pneg %p570
    %p577 = scmp.eq.s32.totalorder %s31, 1
    %p578 = por %p576, %p577
    %p579 = scmp.ne.s32.totalorder %s571, %s574
    %p580 = scmp.eq.s32.totalorder %s31, 0
    %p581 = por %p579, %p580
    %p582 = scmp.ne.s32.totalorder %s571, %s574
    %p583 = scmp.eq.s32.totalorder %s36, 1
    %p584 = por %p582, %p583
    %p585 = scmp.ne.s32.totalorder %s574, %s575
    %p586 = scmp.eq.s32.totalorder %s36, 0
    %p587 = por %p585, %p586
    %p588 = scmp.ne.s32.totalorder %s574, %s575
    %p589 = scmp.eq.s32.totalorder %s37, 1
    %p590 = por %p588, %p589
    %p592 = scmp.ne.s32.totalorder %s575, %s591
    %p593 = scmp.eq.s32.totalorder %s37, 0
    %p594 = por %p592, %p593
    %p595 = scmp.le.s32.totalorder 1, %s31
    %p596 = scmp.lt.s32.totalorder %s31, 3
    %p597 = pnand %p595, %p596
    %p598 = pneg %p597
    // Predicated region
    $region9: #{dual_convcnp_forward.4} parent=5 // pred_check
      _
    $region10: #{dual_convcnp_forward.4} parent=5 // pred_check_branch
      %600 = sbr.rel (%p597) target = $region12
    $region11: #{dual_convcnp_forward.4} parent=5 // pred_region
      %s601 = ssub.s32 %s31, 1
      // Predicated region
      $region13: #{dual_convcnp_forward.4} parent=11 // pred_check
        %p602 = pneg %p78
      $region14: #{dual_convcnp_forward.4} parent=11 // pred_check_branch
        %604 = sbr.rel (%p602) target = $region16
      $region15: #{dual_convcnp_forward.4} parent=11 // pred_region
        _
      $region16: #{dual_convcnp_forward.4} parent=11 // pred_fallthru
        _
      // Predicated region
      $region17: #{dual_convcnp_forward.4} parent=11 // pred_check
        %p605 = pneg %p99
      $region18: #{dual_convcnp_forward.4} parent=11 // pred_check_branch
        %607 = sbr.rel (%p605) target = $region20
      $region19: #{dual_convcnp_forward.4} parent=11 // pred_region
        _
      $region20: #{dual_convcnp_forward.4} parent=11 // pred_fallthru
        _
      // Predicated region
      $region21: #{dual_convcnp_forward.4} parent=11 // pred_check
        %p608 = pneg %p120
      $region22: #{dual_convcnp_forward.4} parent=11 // pred_check_branch
        %610 = sbr.rel (%p608) target = $region24
      $region23: #{dual_convcnp_forward.4} parent=11 // pred_region
        _
      $region24: #{dual_convcnp_forward.4} parent=11 // pred_fallthru
        _
      // Predicated region
      $region25: #{dual_convcnp_forward.4} parent=11 // pred_check
        %p611 = pneg %p141
      $region26: #{dual_convcnp_forward.4} parent=11 // pred_check_branch
        %613 = sbr.rel (%p611) target = $region28
      $region27: #{dual_convcnp_forward.4} parent=11 // pred_region
        _
      $region28: #{dual_convcnp_forward.4} parent=11 // pred_fallthru
        _
      // Predicated region
      $region29: #{dual_convcnp_forward.4} parent=11 // pred_check
        %p614 = pneg %p162
      $region30: #{dual_convcnp_forward.4} parent=11 // pred_check_branch
        %616 = sbr.rel (%p614) target = $region32
      $region31: #{dual_convcnp_forward.4} parent=11 // pred_region
        _
      $region32: #{dual_convcnp_forward.4} parent=11 // pred_fallthru
        _
      // Predicated region
      $region33: #{dual_convcnp_forward.4} parent=11 // pred_check
        %p617 = pneg %p183
      $region34: #{dual_convcnp_forward.4} parent=11 // pred_check_branch
        %619 = sbr.rel (%p617) target = $region36
      $region35: #{dual_convcnp_forward.4} parent=11 // pred_region
        _
      $region36: #{dual_convcnp_forward.4} parent=11 // pred_fallthru
        _
      // Predicated region
      $region37: #{dual_convcnp_forward.4} parent=11 // pred_check
        %p620 = pneg %p204
      $region38: #{dual_convcnp_forward.4} parent=11 // pred_check_branch
        %622 = sbr.rel (%p620) target = $region40
      $region39: #{dual_convcnp_forward.4} parent=11 // pred_region
        _
      $region40: #{dual_convcnp_forward.4} parent=11 // pred_fallthru
        _
      // Predicated region
      $region41: #{dual_convcnp_forward.4} parent=11 // pred_check
        %p623 = pneg %p225
      $region42: #{dual_convcnp_forward.4} parent=11 // pred_check_branch
        %625 = sbr.rel (%p623) target = $region44
      $region43: #{dual_convcnp_forward.4} parent=11 // pred_region
        _
      $region44: #{dual_convcnp_forward.4} parent=11 // pred_fallthru
        _
      // Predicated region
      $region45: #{dual_convcnp_forward.4} parent=11 // pred_check
        %p626 = pneg %p246
      $region46: #{dual_convcnp_forward.4} parent=11 // pred_check_branch
        %628 = sbr.rel (%p626) target = $region48
      $region47: #{dual_convcnp_forward.4} parent=11 // pred_region
        _
      $region48: #{dual_convcnp_forward.4} parent=11 // pred_fallthru
        _
      // Predicated region
      $region49: #{dual_convcnp_forward.4} parent=11 // pred_check
        %p629 = pneg %p267
      $region50: #{dual_convcnp_forward.4} parent=11 // pred_check_branch
        %631 = sbr.rel (%p629) target = $region52
      $region51: #{dual_convcnp_forward.4} parent=11 // pred_region
        _
      $region52: #{dual_convcnp_forward.4} parent=11 // pred_fallthru
        _
      // Predicated region
      $region53: #{dual_convcnp_forward.4} parent=11 // pred_check
        %p632 = pneg %p288
      $region54: #{dual_convcnp_forward.4} parent=11 // pred_check_branch
        %634 = sbr.rel (%p632) target = $region56
      $region55: #{dual_convcnp_forward.4} parent=11 // pred_region
        _
      $region56: #{dual_convcnp_forward.4} parent=11 // pred_fallthru
        _
      // Predicated region
      $region57: #{dual_convcnp_forward.4} parent=11 // pred_check
        %p635 = pneg %p309
      $region58: #{dual_convcnp_forward.4} parent=11 // pred_check_branch
        %637 = sbr.rel (%p635) target = $region60
      $region59: #{dual_convcnp_forward.4} parent=11 // pred_region
        _
      $region60: #{dual_convcnp_forward.4} parent=11 // pred_fallthru
        _
      // Predicated region
      $region61: #{dual_convcnp_forward.4} parent=11 // pred_check
        %p638 = pneg %p330
      $region62: #{dual_convcnp_forward.4} parent=11 // pred_check_branch
        %640 = sbr.rel (%p638) target = $region64
      $region63: #{dual_convcnp_forward.4} parent=11 // pred_region
        _
      $region64: #{dual_convcnp_forward.4} parent=11 // pred_fallthru
        _
      // Predicated region
      $region65: #{dual_convcnp_forward.4} parent=11 // pred_check
        %p641 = pneg %p351
      $region66: #{dual_convcnp_forward.4} parent=11 // pred_check_branch
        %643 = sbr.rel (%p641) target = $region68
      $region67: #{dual_convcnp_forward.4} parent=11 // pred_region
        _
      $region68: #{dual_convcnp_forward.4} parent=11 // pred_fallthru
        _
      // Predicated region
      $region69: #{dual_convcnp_forward.4} parent=11 // pred_check
        %p644 = pneg %p372
      $region70: #{dual_convcnp_forward.4} parent=11 // pred_check_branch
        %646 = sbr.rel (%p644) target = $region72
      $region71: #{dual_convcnp_forward.4} parent=11 // pred_region
        _
      $region72: #{dual_convcnp_forward.4} parent=11 // pred_fallthru
        _
      // Predicated region
      $region73: #{dual_convcnp_forward.4} parent=11 // pred_check
        %p647 = pneg %p393
      $region74: #{dual_convcnp_forward.4} parent=11 // pred_check_branch
        %649 = sbr.rel (%p647) target = $region76
      $region75: #{dual_convcnp_forward.4} parent=11 // pred_region
        _
      $region76: #{dual_convcnp_forward.4} parent=11 // pred_fallthru
        _
      // Predicated region
      $region77: #{dual_convcnp_forward.4} parent=11 // pred_check
        %p650 = pneg %p414
      $region78: #{dual_convcnp_forward.4} parent=11 // pred_check_branch
        %652 = sbr.rel (%p650) target = $region80
      $region79: #{dual_convcnp_forward.4} parent=11 // pred_region
        _
      $region80: #{dual_convcnp_forward.4} parent=11 // pred_fallthru
        _
      // Predicated region
      $region81: #{dual_convcnp_forward.4} parent=11 // pred_check
        %p653 = pneg %p435
      $region82: #{dual_convcnp_forward.4} parent=11 // pred_check_branch
        %655 = sbr.rel (%p653) target = $region84
      $region83: #{dual_convcnp_forward.4} parent=11 // pred_region
        _
      $region84: #{dual_convcnp_forward.4} parent=11 // pred_fallthru
        _
      // Predicated region
      $region85: #{dual_convcnp_forward.4} parent=11 // pred_check
        %p656 = pneg %p456
      $region86: #{dual_convcnp_forward.4} parent=11 // pred_check_branch
        %658 = sbr.rel (%p656) target = $region88
      $region87: #{dual_convcnp_forward.4} parent=11 // pred_region
        _
      $region88: #{dual_convcnp_forward.4} parent=11 // pred_fallthru
        _
      // Predicated region
      $region89: #{dual_convcnp_forward.4} parent=11 // pred_check
        %p659 = pneg %p477
      $region90: #{dual_convcnp_forward.4} parent=11 // pred_check_branch
        %661 = sbr.rel (%p659) target = $region92
      $region91: #{dual_convcnp_forward.4} parent=11 // pred_region
        _
      $region92: #{dual_convcnp_forward.4} parent=11 // pred_fallthru
        _
      // Predicated region
      $region93: #{dual_convcnp_forward.4} parent=11 // pred_check
        %p662 = pneg %p498
      $region94: #{dual_convcnp_forward.4} parent=11 // pred_check_branch
        %664 = sbr.rel (%p662) target = $region96
      $region95: #{dual_convcnp_forward.4} parent=11 // pred_region
        _
      $region96: #{dual_convcnp_forward.4} parent=11 // pred_fallthru
        _
      // Predicated region
      $region97: #{dual_convcnp_forward.4} parent=11 // pred_check
        %p665 = pneg %p519
      $region98: #{dual_convcnp_forward.4} parent=11 // pred_check_branch
        %667 = sbr.rel (%p665) target = $region100
      $region99: #{dual_convcnp_forward.4} parent=11 // pred_region
        _
      $region100: #{dual_convcnp_forward.4} parent=11 // pred_fallthru
        _
      // Predicated region
      $region101: #{dual_convcnp_forward.4} parent=11 // pred_check
        %p668 = pneg %p540
      $region102: #{dual_convcnp_forward.4} parent=11 // pred_check_branch
        %670 = sbr.rel (%p668) target = $region104
      $region103: #{dual_convcnp_forward.4} parent=11 // pred_region
        _
      $region104: #{dual_convcnp_forward.4} parent=11 // pred_fallthru
        _
      // Predicated region
      $region105: #{dual_convcnp_forward.4} parent=11 // pred_check
        %p671 = pneg %p561
      $region106: #{dual_convcnp_forward.4} parent=11 // pred_check_branch
        %673 = sbr.rel (%p671) target = $region108
      $region107: #{dual_convcnp_forward.4} parent=11 // pred_region
        _
      $region108: #{dual_convcnp_forward.4} parent=11 // pred_fallthru
        _
    $region12: #{dual_convcnp_forward.4} parent=5 // pred_fallthru
      _
    %p674 = scmp.lt.s32.totalorder %s31, 2
    // Predicated region
    $region109: #{dual_convcnp_forward.4} parent=5 // pred_check
      %p675 = pneg %p674
    $region110: #{dual_convcnp_forward.4} parent=5 // pred_check_branch
      %677 = sbr.rel (%p675) target = $region112
    $region111: #{dual_convcnp_forward.4} parent=5 // pred_region
      // Predicated region
      $region113: #{dual_convcnp_forward.4} parent=111 // pred_check
        %p678 = pneg %p51
      $region114: #{dual_convcnp_forward.4} parent=111 // pred_check_branch
        %680 = sbr.rel (%p678) target = $region116
      $region115: #{dual_convcnp_forward.4} parent=111 // pred_region
        %p681 = scmp.lt.s32.totalorder %s31, 1
        %s682 = scalar_select %p681, %s31, 1
        %s683 = smul.addr %s682, 2
        %s684 = scalar_lea.vmem %s0, %s683
      $region116: #{dual_convcnp_forward.4} parent=111 // pred_fallthru
        _
    $region112: #{dual_convcnp_forward.4} parent=5 // pred_fallthru
      _
    %p685 = scmp.le.s32.totalorder 1, %s31
    %p686 = scmp.lt.s32.totalorder %s31, 3
    %p687 = pnand %p685, %p686
    %p688 = pneg %p687
    // Predicated region
    $region117: #{dual_convcnp_forward.4} parent=5 // pred_check
      _
    $region118: #{dual_convcnp_forward.4} parent=5 // pred_check_branch
      %690 = sbr.rel (%p687) target = $region120
    $region119: #{dual_convcnp_forward.4} parent=5 // pred_region
      %s691 = ssub.s32 %s31, 1
      %p692 = scmp.lt.s32.totalorder %s36, 1
      %s693 = scalar_select %p692, %s36, 1
      %s694 = smul.addr %s693, 2
      %s695 = scalar_lea.vmem %s0, %s694
      %p696 = pneg %p57
      %p697 = pneg %p54
      %p698 = pneg %p78
      %p699 = pneg %p75
      %p700 = pneg %p99
      %p701 = pneg %p96
      %p702 = pneg %p120
      %p703 = pneg %p117
      %p704 = pneg %p141
      %p705 = pneg %p138
      %p706 = pneg %p162
      %p707 = pneg %p159
      %p708 = pneg %p183
      %p709 = pneg %p180
      %p710 = pneg %p204
      %p711 = pneg %p201
      %p712 = pneg %p225
      %p713 = pneg %p222
      %p714 = pneg %p246
      %p715 = pneg %p243
      %p716 = pneg %p267
      %p717 = pneg %p264
      %p718 = pneg %p288
      %p719 = pneg %p285
      %p720 = pneg %p309
      %p721 = pneg %p306
      %p722 = pneg %p330
      %p723 = pneg %p327
      %p724 = pneg %p351
      %p725 = pneg %p348
      %p726 = pneg %p372
      %p727 = pneg %p369
      %p728 = pneg %p393
      %p729 = pneg %p390
      %p730 = pneg %p414
      %p731 = pneg %p411
      %p732 = pneg %p435
      %p733 = pneg %p432
      %p734 = pneg %p456
      %p735 = pneg %p453
      %p736 = pneg %p477
      %p737 = pneg %p474
      %p738 = pneg %p498
      %p739 = pneg %p495
      %p740 = pneg %p519
      %p741 = pneg %p516
      %p742 = pneg %p540
      %p743 = pneg %p537
      %p744 = pneg %p561
      %p745 = pneg %p558
      %p746 = pneg %p587
      %p747 = pneg %p584
      %p748 = scmp.lt.s32.totalorder %s36, 1
      %s749 = scalar_select %p748, %s36, 1
      %s750 = smul.addr %s749, 2
      %s751 = scalar_lea.vmem %s25, %s750
      %p752 = scmp.lt.s32.totalorder %s36, 1
      %s753 = scalar_select %p752, %s36, 1
      %s754 = smul.addr %s753, 2
      %s755 = scalar_lea.vmem %s0, %s754
      %p756 = scmp.lt.s32.totalorder %s36, 1
      %s757 = scalar_select %p756, %s36, 1
      %s758 = smul.addr %s757, 2
      %s759 = scalar_lea.vmem %s25, %s758
      %v761 = vld [vmem:[%s755] sm:$0x3]
      %v762 = vld [vmem:[%s1] sm:$0xf]
      %v763 = vld [vmem:[%s2] sm:$0xff]
      %765 = vset.pattern.permute.xlu0 0
      %766 = vperm.xlu0 %765, %v763
      %v767 = vpop.permute.xlu0 %766
      %vm769 = vcmask 31744
      %v771 = vsel %vm769, %v762, 0
      %vm773 = vcmask 1041408
      %v775 = vsel %vm773, %v761, 0
      %777 = vmatpush.bf16.msra.mxu0 0
      %778 = vmatpush.bf16.msra.mxu0 0
      %779 = vmatpush.bf16.msra.mxu0 0
      %780 = vmatpush.bf16.msra.mxu0 0
      %781 = vmatpush.bf16.msra.mxu0 0
      %782 = vmatpush.bf16.msra.mxu0 0
      %783 = vmatpush.bf16.msra.mxu0 0
      %784 = vmatpush.bf16.msra.mxu0 %v775
      %785 = vmatmul.bf16.gmra.mxu0 %v771
      %v786 = vpop.f32.mrf.mxu0
      %v787 = vadd.f32 %v767, %v786
      %v788 = vpop.f32.mrf.mxu0
      %789 = vdwg.mxu0
      %v790 = vpack.c.bf16 %v787, %v787
      %v792 = vunpack.c.l.b16 %v790
      %v793 = vpack.c.b16 %v792, %v792
      %794 = vrot.lane.b32.xlu0 %v793, 2
      %v795 = vpop.permute.xlu0 %794
      %vm796 = vcmask 15360
      %v799 = vsel %vm796, 0, %v795
      %v800 = vsel %vm796, %v795, 0
      %v801 = vld [vmem:[%s4] sm:$0xff]
      %v802 = vld [vmem:[%s3] sm:$0xf]
      %vm803 = vcmask 64512
      %v805 = vsel %vm803, %v802, 0
      %vm807 = vcmask 1043456
      %v808 = vsel %vm807, %v799, 0
      %810 = vmatpush.bf16.msra.mxu0 0
      %811 = vmatpush.bf16.msra.mxu0 0
      %812 = vmatpush.bf16.msra.mxu0 0
      %813 = vmatpush.bf16.msra.mxu0 0
      %814 = vmatpush.bf16.msra.mxu0 0
      %815 = vmatpush.bf16.msra.mxu0 0
      %816 = vmatpush.bf16.msra.mxu0 0
      %817 = vmatpush.bf16.msra.mxu0 %v808
      %818 = vmatmul.bf16.gmra.mxu0 %v805
      %v819 = vpop.f32.mrf.mxu0
      %v820 = vadd.f32 0.0, %v819
      %v821 = vpop.f32.mrf.mxu0
      %822 = vdwg.mxu0
      %824 = vset.pattern.permute.xlu0 0
      %825 = vperm.xlu0 %824, %v801
      %v826 = vpop.permute.xlu0 %825
      %v828 = vadd.f32 %v826, %v820
      %v829 = vld [vmem:[%s3 + $0x4] sm:$0xf]
      %832 = vrot.lane.b32.xlu0 %v799, 127
      %v833 = vpop.permute.xlu0 %832
      %834 = vrot.lane.b32.xlu0 %v800, 127
      %v835 = vpop.permute.xlu0 %834
      %vm836 = vcmask 1039360
      %v837 = vsel %vm836, %v833, %v835
      %v839 = vsel %vm803, %v829, 0
      %v842 = vsel %vm807, %v837, 0
      %844 = vmatpush.bf16.msra.mxu0 0
      %845 = vmatpush.bf16.msra.mxu0 0
      %846 = vmatpush.bf16.msra.mxu0 0
      %847 = vmatpush.bf16.msra.mxu0 0
      %848 = vmatpush.bf16.msra.mxu0 0
      %849 = vmatpush.bf16.msra.mxu0 0
      %850 = vmatpush.bf16.msra.mxu0 0
      %851 = vmatpush.bf16.msra.mxu0 %v842
      %852 = vmatmul.bf16.gmra.mxu0 %v839
      %v853 = vpop.f32.mrf.mxu0
      %v854 = vadd.f32 0.0, %v853
      %v855 = vpop.f32.mrf.mxu0
      %856 = vdwg.mxu0
      %v857 = vadd.f32 %v828, %v854
      %v858 = vld [vmem:[%s3 + $0x8] sm:$0xf]
      %859 = vrot.lane.b32.xlu0 %v799, 126
      %v860 = vpop.permute.xlu0 %859
      %861 = vrot.lane.b32.xlu0 %v800, 126
      %v862 = vpop.permute.xlu0 %861
      %vm863 = vcmask 1031168
      %v864 = vsel %vm863, %v860, %v862
      %v866 = vsel %vm803, %v858, 0
      %v869 = vsel %vm807, %v864, 0
      %871 = vmatpush.bf16.msra.mxu0 0
      %872 = vmatpush.bf16.msra.mxu0 0
      %873 = vmatpush.bf16.msra.mxu0 0
      %874 = vmatpush.bf16.msra.mxu0 0
      %875 = vmatpush.bf16.msra.mxu0 0
      %876 = vmatpush.bf16.msra.mxu0 0
      %877 = vmatpush.bf16.msra.mxu0 0
      %878 = vmatpush.bf16.msra.mxu0 %v869
      %879 = vmatmul.bf16.gmra.mxu0 %v866
      %v880 = vpop.f32.mrf.mxu0
      %v881 = vadd.f32 0.0, %v880
      %v882 = vpop.f32.mrf.mxu0
      %883 = vdwg.mxu0
      %v884 = vadd.f32 %v857, %v881
      %v885 = vld [vmem:[%s3 + $0xc] sm:$0xf]
      %886 = vrot.lane.b32.xlu0 %v799, 125
      %v887 = vpop.permute.xlu0 %886
      %888 = vrot.lane.b32.xlu0 %v800, 125
      %v889 = vpop.permute.xlu0 %888
      %vm890 = vcmask 1022976
      %v891 = vsel %vm890, %v887, %v889
      %v893 = vsel %vm803, %v885, 0
      %v896 = vsel %vm807, %v891, 0
      %898 = vmatpush.bf16.msra.mxu0 0
      %899 = vmatpush.bf16.msra.mxu0 0
      %900 = vmatpush.bf16.msra.mxu0 0
      %901 = vmatpush.bf16.msra.mxu0 0
      %902 = vmatpush.bf16.msra.mxu0 0
      %903 = vmatpush.bf16.msra.mxu0 0
      %904 = vmatpush.bf16.msra.mxu0 0
      %905 = vmatpush.bf16.msra.mxu0 %v896
      %906 = vmatmul.bf16.gmra.mxu0 %v893
      %v907 = vpop.f32.mrf.mxu0
      %v908 = vadd.f32 0.0, %v907
      %v909 = vpop.f32.mrf.mxu0
      %910 = vdwg.mxu0
      %v911 = vadd.f32 %v884, %v908
      %v912 = vld [vmem:[%s3 + $0x10] sm:$0xf]
      %913 = vrot.lane.b32.xlu0 %v799, 124
      %v914 = vpop.permute.xlu0 %913
      %915 = vrot.lane.b32.xlu0 %v800, 124
      %v916 = vpop.permute.xlu0 %915
      %vm917 = vcmask 1014784
      %v918 = vsel %vm917, %v914, %v916
      %v920 = vsel %vm803, %v912, 0
      %v923 = vsel %vm807, %v918, 0
      %925 = vmatpush.bf16.msra.mxu0 0
      %926 = vmatpush.bf16.msra.mxu0 0
      %927 = vmatpush.bf16.msra.mxu0 0
      %928 = vmatpush.bf16.msra.mxu0 0
      %929 = vmatpush.bf16.msra.mxu0 0
      %930 = vmatpush.bf16.msra.mxu0 0
      %931 = vmatpush.bf16.msra.mxu0 0
      %932 = vmatpush.bf16.msra.mxu0 %v923
      %933 = vmatmul.bf16.gmra.mxu0 %v920
      %v934 = vpop.f32.mrf.mxu0
      %v935 = vadd.f32 0.0, %v934
      %v936 = vpop.f32.mrf.mxu0
      %937 = vdwg.mxu0
      %v938 = vadd.f32 %v911, %v935
      %v939 = vmax.f32 %v938, 0.0
      %v940 = vpack.c.bf16 %v939, %v939
      %v941 = vlaneseq
      %v942 = vshrl.u32 %v941, 7
      %v943 = vadd.s32 %v942, 8
      %v944 = vadd.s32 %v942, 16
      %v945 = vadd.s32 %v942, 24
      %v946 = vadd.s32 %v942, 32
      %v947 = vadd.s32 %v942, 40
      %v948 = vadd.s32 %v942, 48
      %v949 = vadd.s32 %v942, 56
      %v950 = vadd.s32 %v942, 64
      %v951 = vadd.s32 %v942, 72
      %v952 = vadd.s32 %v942, 80
      %v953 = vadd.s32 %v942, 88
      %v954 = vadd.s32 %v942, 96
      %v955 = vadd.s32 %v942, 104
      %v956 = vadd.s32 %v942, 112
      %v957 = vadd.s32 %v942, 120
      %v958 = vlaneseq
      %v959 = vand.u32 %v958, 127
      %v960 = vmul.u32 %v959, 2
      %vm961 = vcmp.eq.s32.totalorder %v942, %v960
      %vm962 = vcmp.eq.s32.totalorder %v943, %v960
      %vm963 = vcmp.eq.s32.totalorder %v944, %v960
      %vm964 = vcmp.eq.s32.totalorder %v945, %v960
      %vm965 = vcmp.eq.s32.totalorder %v946, %v960
      %vm966 = vcmp.eq.s32.totalorder %v947, %v960
      %vm967 = vcmp.eq.s32.totalorder %v948, %v960
      %vm968 = vcmp.eq.s32.totalorder %v949, %v960
      %vm969 = vcmp.eq.s32.totalorder %v950, %v960
      %vm970 = vcmp.eq.s32.totalorder %v951, %v960
      %vm971 = vcmp.eq.s32.totalorder %v952, %v960
      %vm972 = vcmp.eq.s32.totalorder %v953, %v960
      %vm973 = vcmp.eq.s32.totalorder %v954, %v960
      %vm974 = vcmp.eq.s32.totalorder %v955, %v960
      %vm975 = vcmp.eq.s32.totalorder %v956, %v960
      %vm976 = vcmp.eq.s32.totalorder %v957, %v960
      %v977 = vsel %vm961, 1.0, 0.0
      %v978 = vsel %vm962, 1.0, 0.0
      %v979 = vsel %vm963, 1.0, 0.0
      %v980 = vsel %vm964, 1.0, 0.0
      %v981 = vsel %vm965, 1.0, 0.0
      %v982 = vsel %vm966, 1.0, 0.0
      %v983 = vsel %vm967, 1.0, 0.0
      %v984 = vsel %vm968, 1.0, 0.0
      %v985 = vsel %vm969, 1.0, 0.0
      %v986 = vsel %vm970, 1.0, 0.0
      %v987 = vsel %vm971, 1.0, 0.0
      %v988 = vsel %vm972, 1.0, 0.0
      %v989 = vsel %vm973, 1.0, 0.0
      %v990 = vsel %vm974, 1.0, 0.0
      %v991 = vsel %vm975, 1.0, 0.0
      %v992 = vsel %vm976, 1.0, 0.0
      %v993 = vpack.c.bf16 %v978, %v977
      %v994 = vpack.c.bf16 %v980, %v979
      %v995 = vpack.c.bf16 %v982, %v981
      %v996 = vpack.c.bf16 %v984, %v983
      %v997 = vpack.c.bf16 %v986, %v985
      %v998 = vpack.c.bf16 %v988, %v987
      %v999 = vpack.c.bf16 %v990, %v989
      %v1000 = vpack.c.bf16 %v992, %v991
      %1001 = vmatpush.bf16.msra.mxu0 %v1000
      %1002 = vmatpush.bf16.msra.mxu0 %v999
      %1003 = vmatpush.bf16.msra.mxu0 %v998
      %1004 = vmatpush.bf16.msra.mxu0 %v997
      %1005 = vmatpush.bf16.msra.mxu0 %v996
      %1006 = vmatpush.bf16.msra.mxu0 %v995
      %1007 = vmatpush.bf16.msra.mxu0 %v994
      %1008 = vmatpush.bf16.msra.mxu0 %v993
      %1009 = vmatmul.bf16.gmra.mxu0 %v940
      %v1010 = vpop.f32.mrf.mxu0
      %v1011 = vadd.f32 0.0, %v1010
      %v1012 = vpop.f32.mrf.mxu0
      %1013 = vdwg.mxu0
      %v1014 = vpack.c.bf16 %v1011, %v1011
      %v1016 = vunpack.c.l.b16 %v1014
      %v1017 = vpack.c.b16 %v1016, %v1016
      %1018 = vrot.lane.b32.xlu0 %v1017, 2
      %v1019 = vpop.permute.xlu0 %1018
      %v1021 = vsel %vm796, 0, %v1019
      %vm1022 = vcmask 539648
      %v1023 = vsel %vm1022, %v1021, 0
      %v1024 = vld [vmem:[%s6] sm:$0xff]
      %v1025 = vld [vmem:[%s6 + $0x8] sm:$0xff]
      %v1026 = vld [vmem:[%s5] sm:$0xf]
      %v1027 = vld [vmem:[%s5 + $0x4] sm:$0xf]
      %v1030 = vunpack.c.l.b16 %v1026
      %v1031 = vunpack.c.l.b16 %v1027
      %v1032 = vpack.c.b16 %v1031, %v1030
      %v1034 = vsel %vm803, %v1032, 0
      %v1036 = vsel %vm807, %v1023, 0
      %1038 = vmatpush.bf16.msra.mxu0 0
      %1039 = vmatpush.bf16.msra.mxu0 0
      %1040 = vmatpush.bf16.msra.mxu0 0
      %1041 = vmatpush.bf16.msra.mxu0 0
      %1042 = vmatpush.bf16.msra.mxu0 0
      %1043 = vmatpush.bf16.msra.mxu0 0
      %1044 = vmatpush.bf16.msra.mxu0 0
      %1045 = vmatpush.bf16.msra.mxu0 %v1036
      %1046 = vmatmul.bf16.gmra.mxu0 %v1034
      %v1047 = vpop.f32.mrf.mxu0
      %v1048 = vadd.f32 0.0, %v1047
      %v1049 = vpop.f32.mrf.mxu0
      %v1050 = vadd.f32 0.0, %v1049
      %1051 = vdwg.mxu0
      %1053 = vset.pattern.permute.xlu0 0
      %1054 = vperm.xlu0 %1053, %v1024
      %v1055 = vpop.permute.xlu0 %1054
      %1058 = vset.pattern.permute.xlu0 0
      %1059 = vperm.xlu0 %1058, %v1025
      %v1060 = vpop.permute.xlu0 %1059
      %v1062 = vadd.f32 %v1055, %v1048
      %v1063 = vadd.f32 %v1060, %v1050
      %v1064 = vld [vmem:[%s5 + $0x8] sm:$0xf]
      %v1065 = vld [vmem:[%s5 + $0xc] sm:$0xf]
      %v1068 = vunpack.c.l.b16 %v1064
      %v1069 = vunpack.c.l.b16 %v1065
      %v1070 = vpack.c.b16 %v1069, %v1068
      %1072 = vrot.lane.b32.xlu0 %v1023, 127
      %v1073 = vpop.permute.xlu0 %1072
      %v1075 = vsel %vm803, %v1070, 0
      %v1078 = vsel %vm807, %v1073, 0
      %1080 = vmatpush.bf16.msra.mxu0 0
      %1081 = vmatpush.bf16.msra.mxu0 0
      %1082 = vmatpush.bf16.msra.mxu0 0
      %1083 = vmatpush.bf16.msra.mxu0 0
      %1084 = vmatpush.bf16.msra.mxu0 0
      %1085 = vmatpush.bf16.msra.mxu0 0
      %1086 = vmatpush.bf16.msra.mxu0 0
      %1087 = vmatpush.bf16.msra.mxu0 %v1078
      %1088 = vmatmul.bf16.gmra.mxu0 %v1075
      %v1089 = vpop.f32.mrf.mxu0
      %v1090 = vadd.f32 0.0, %v1089
      %v1091 = vpop.f32.mrf.mxu0
      %v1092 = vadd.f32 0.0, %v1091
      %1093 = vdwg.mxu0
      %v1094 = vadd.f32 %v1062, %v1090
      %v1095 = vadd.f32 %v1063, %v1092
      %v1096 = vld [vmem:[%s5 + $0x10] sm:$0xf]
      %v1097 = vld [vmem:[%s5 + $0x14] sm:$0xf]
      %v1100 = vunpack.c.l.b16 %v1096
      %v1101 = vunpack.c.l.b16 %v1097
      %v1102 = vpack.c.b16 %v1101, %v1100
      %1103 = vrot.lane.b32.xlu0 %v1023, 126
      %v1104 = vpop.permute.xlu0 %1103
      %v1106 = vsel %vm803, %v1102, 0
      %v1109 = vsel %vm807, %v1104, 0
      %1111 = vmatpush.bf16.msra.mxu0 0
      %1112 = vmatpush.bf16.msra.mxu0 0
      %1113 = vmatpush.bf16.msra.mxu0 0
      %1114 = vmatpush.bf16.msra.mxu0 0
      %1115 = vmatpush.bf16.msra.mxu0 0
      %1116 = vmatpush.bf16.msra.mxu0 0
      %1117 = vmatpush.bf16.msra.mxu0 0
      %1118 = vmatpush.bf16.msra.mxu0 %v1109
      %1119 = vmatmul.bf16.gmra.mxu0 %v1106
      %v1120 = vpop.f32.mrf.mxu0
      %v1121 = vadd.f32 0.0, %v1120
      %v1122 = vpop.f32.mrf.mxu0
      %v1123 = vadd.f32 0.0, %v1122
      %1124 = vdwg.mxu0
      %v1125 = vadd.f32 %v1094, %v1121
      %v1126 = vadd.f32 %v1095, %v1123
      %v1127 = vld [vmem:[%s5 + $0x18] sm:$0xf]
      %v1128 = vld [vmem:[%s5 + $0x1c] sm:$0xf]
      %v1131 = vunpack.c.l.b16 %v1127
      %v1132 = vunpack.c.l.b16 %v1128
      %v1133 = vpack.c.b16 %v1132, %v1131
      %1134 = vrot.lane.b32.xlu0 %v1023, 125
      %v1135 = vpop.permute.xlu0 %1134
      %v1137 = vsel %vm803, %v1133, 0
      %v1140 = vsel %vm807, %v1135, 0
      %1142 = vmatpush.bf16.msra.mxu0 0
      %1143 = vmatpush.bf16.msra.mxu0 0
      %1144 = vmatpush.bf16.msra.mxu0 0
      %1145 = vmatpush.bf16.msra.mxu0 0
      %1146 = vmatpush.bf16.msra.mxu0 0
      %1147 = vmatpush.bf16.msra.mxu0 0
      %1148 = vmatpush.bf16.msra.mxu0 0
      %1149 = vmatpush.bf16.msra.mxu0 %v1140
      %1150 = vmatmul.bf16.gmra.mxu0 %v1137
      %v1151 = vpop.f32.mrf.mxu0
      %v1152 = vadd.f32 0.0, %v1151
      %v1153 = vpop.f32.mrf.mxu0
      %v1154 = vadd.f32 0.0, %v1153
      %1155 = vdwg.mxu0
      %v1156 = vadd.f32 %v1125, %v1152
      %v1157 = vadd.f32 %v1126, %v1154
      %v1158 = vld [vmem:[%s5 + $0x20] sm:$0xf]
      %v1159 = vld [vmem:[%s5 + $0x24] sm:$0xf]
      %v1162 = vunpack.c.l.b16 %v1158
      %v1163 = vunpack.c.l.b16 %v1159
      %v1164 = vpack.c.b16 %v1163, %v1162
      %1165 = vrot.lane.b32.xlu0 %v1023, 124
      %v1166 = vpop.permute.xlu0 %1165
      %v1168 = vsel %vm803, %v1164, 0
      %v1171 = vsel %vm807, %v1166, 0
      %1173 = vmatpush.bf16.msra.mxu0 0
      %1174 = vmatpush.bf16.msra.mxu0 0
      %1175 = vmatpush.bf16.msra.mxu0 0
      %1176 = vmatpush.bf16.msra.mxu0 0
      %1177 = vmatpush.bf16.msra.mxu0 0
      %1178 = vmatpush.bf16.msra.mxu0 0
      %1179 = vmatpush.bf16.msra.mxu0 0
      %1180 = vmatpush.bf16.msra.mxu0 %v1171
      %1181 = vmatmul.bf16.gmra.mxu0 %v1168
      %v1182 = vpop.f32.mrf.mxu0
      %v1183 = vadd.f32 0.0, %v1182
      %v1184 = vpop.f32.mrf.mxu0
      %v1185 = vadd.f32 0.0, %v1184
      %1186 = vdwg.mxu0
      %v1187 = vadd.f32 %v1156, %v1183
      %v1188 = vadd.f32 %v1157, %v1185
      %v1189 = vmax.f32 %v1187, 0.0
      %v1190 = vmax.f32 %v1188, 0.0
      %v1191 = vpack.c.bf16 %v1190, %v1189
      %vm1192 = vcmask 523264
      %v1194 = vsel %vm1192, %v1191, 0
      %1196 = vmatpush.bf16.msra.mxu0 0
      %1197 = vmatpush.bf16.msra.mxu0 0
      %1198 = vmatpush.bf16.msra.mxu0 0
      %1199 = vmatpush.bf16.msra.mxu0 0
      %1200 = vmatpush.bf16.msra.mxu0 %v996
      %1201 = vmatpush.bf16.msra.mxu0 %v995
      %1202 = vmatpush.bf16.msra.mxu0 %v994
      %1203 = vmatpush.bf16.msra.mxu0 %v993
      %1204 = vmatmul.bf16.gmra.mxu0 %v1194
      %v1205 = vpop.f32.mrf.mxu0
      %v1206 = vadd.f32 0.0, %v1205
      %v1207 = vpop.f32.mrf.mxu0
      %v1208 = vadd.f32 0.0, %v1207
      %1209 = vdwg.mxu0
      %v1210 = vpack.c.bf16 %v1206, %v1206
      %v1211 = vpack.c.bf16 %v1208, %v1208
      %v1214 = vunpack.c.l.b16 %v1210
      %v1215 = vunpack.c.l.b16 %v1211
      %v1216 = vpack.c.b16 %v1215, %v1214
      %1217 = vrot.lane.b32.xlu0 %v1216, 2
      %v1218 = vpop.permute.xlu0 %1217
      %v1220 = vsel %vm796, 0, %v1218
      %vm1221 = vcmask 277504
      %v1222 = vsel %vm1221, %v1220, 0
      %v1224 = vld [vmem:[%s8] sm:$0xff]
      %v1225 = vld [vmem:[%s8 + $0x8] sm:$0xff]
      %v1226 = vld [vmem:[%s7] sm:$0xf]
      %v1227 = vld [vmem:[%s7 + $0x4] sm:$0xf]
      %v1230 = vunpack.c.l.b16 %v1226
      %v1231 = vunpack.c.l.b16 %v1227
      %v1232 = vpack.c.b16 %v1231, %v1230
      %vm1233 = vcmask 130048
      %v1235 = vsel %vm1233, %v1232, 0
      %1237 = vmatpush.bf16.msra.mxu0 0
      %1238 = vmatpush.bf16.msra.mxu0 0
      %1239 = vmatpush.bf16.msra.mxu0 0
      %1240 = vmatpush.bf16.msra.mxu0 0
      %1241 = vmatpush.bf16.msra.mxu0 0
      %1242 = vmatpush.bf16.msra.mxu0 0
      %1243 = vmatpush.bf16.msra.mxu0 0
      %1244 = vmatpush.bf16.msra.mxu0 %v1222
      %1245 = vmatmul.bf16.gmra.mxu0 %v1235
      %v1246 = vpop.f32.mrf.mxu0
      %v1247 = vadd.f32 0.0, %v1246
      %v1248 = vpop.f32.mrf.mxu0
      %v1249 = vadd.f32 0.0, %v1248
      %1250 = vdwg.mxu0
      %1252 = vset.pattern.permute.xlu0 0
      %1253 = vperm.xlu0 %1252, %v1224
      %v1254 = vpop.permute.xlu0 %1253
      %1257 = vset.pattern.permute.xlu0 0
      %1258 = vperm.xlu0 %1257, %v1225
      %v1259 = vpop.permute.xlu0 %1258
      %v1261 = vadd.f32 %v1254, %v1247
      %v1262 = vadd.f32 %v1259, %v1249
      %v1263 = vld [vmem:[%s7 + $0x8] sm:$0xf]
      %v1264 = vld [vmem:[%s7 + $0xc] sm:$0xf]
      %v1267 = vunpack.c.l.b16 %v1263
      %v1268 = vunpack.c.l.b16 %v1264
      %v1269 = vpack.c.b16 %v1268, %v1267
      %1271 = vrot.lane.b32.xlu0 %v1222, 127
      %v1272 = vpop.permute.xlu0 %1271
      %v1275 = vsel %vm1233, %v1269, 0
      %1277 = vmatpush.bf16.msra.mxu0 0
      %1278 = vmatpush.bf16.msra.mxu0 0
      %1279 = vmatpush.bf16.msra.mxu0 0
      %1280 = vmatpush.bf16.msra.mxu0 0
      %1281 = vmatpush.bf16.msra.mxu0 0
      %1282 = vmatpush.bf16.msra.mxu0 0
      %1283 = vmatpush.bf16.msra.mxu0 0
      %1284 = vmatpush.bf16.msra.mxu0 %v1272
      %1285 = vmatmul.bf16.gmra.mxu0 %v1275
      %v1286 = vpop.f32.mrf.mxu0
      %v1287 = vadd.f32 0.0, %v1286
      %v1288 = vpop.f32.mrf.mxu0
      %v1289 = vadd.f32 0.0, %v1288
      %1290 = vdwg.mxu0
      %v1291 = vadd.f32 %v1261, %v1287
      %v1292 = vadd.f32 %v1262, %v1289
      %v1293 = vld [vmem:[%s7 + $0x10] sm:$0xf]
      %v1294 = vld [vmem:[%s7 + $0x14] sm:$0xf]
      %v1297 = vunpack.c.l.b16 %v1293
      %v1298 = vunpack.c.l.b16 %v1294
      %v1299 = vpack.c.b16 %v1298, %v1297
      %1300 = vrot.lane.b32.xlu0 %v1222, 126
      %v1301 = vpop.permute.xlu0 %1300
      %v1304 = vsel %vm1233, %v1299, 0
      %1306 = vmatpush.bf16.msra.mxu0 0
      %1307 = vmatpush.bf16.msra.mxu0 0
      %1308 = vmatpush.bf16.msra.mxu0 0
      %1309 = vmatpush.bf16.msra.mxu0 0
      %1310 = vmatpush.bf16.msra.mxu0 0
      %1311 = vmatpush.bf16.msra.mxu0 0
      %1312 = vmatpush.bf16.msra.mxu0 0
      %1313 = vmatpush.bf16.msra.mxu0 %v1301
      %1314 = vmatmul.bf16.gmra.mxu0 %v1304
      %v1315 = vpop.f32.mrf.mxu0
      %v1316 = vadd.f32 0.0, %v1315
      %v1317 = vpop.f32.mrf.mxu0
      %v1318 = vadd.f32 0.0, %v1317
      %1319 = vdwg.mxu0
      %v1320 = vadd.f32 %v1291, %v1316
      %v1321 = vadd.f32 %v1292, %v1318
      %v1322 = vld [vmem:[%s7 + $0x18] sm:$0xf]
      %v1323 = vld [vmem:[%s7 + $0x1c] sm:$0xf]
      %v1326 = vunpack.c.l.b16 %v1322
      %v1327 = vunpack.c.l.b16 %v1323
      %v1328 = vpack.c.b16 %v1327, %v1326
      %1329 = vrot.lane.b32.xlu0 %v1222, 125
      %v1330 = vpop.permute.xlu0 %1329
      %v1333 = vsel %vm1233, %v1328, 0
      %1335 = vmatpush.bf16.msra.mxu0 0
      %1336 = vmatpush.bf16.msra.mxu0 0
      %1337 = vmatpush.bf16.msra.mxu0 0
      %1338 = vmatpush.bf16.msra.mxu0 0
      %1339 = vmatpush.bf16.msra.mxu0 0
      %1340 = vmatpush.bf16.msra.mxu0 0
      %1341 = vmatpush.bf16.msra.mxu0 0
      %1342 = vmatpush.bf16.msra.mxu0 %v1330
      %1343 = vmatmul.bf16.gmra.mxu0 %v1333
      %v1344 = vpop.f32.mrf.mxu0
      %v1345 = vadd.f32 0.0, %v1344
      %v1346 = vpop.f32.mrf.mxu0
      %v1347 = vadd.f32 0.0, %v1346
      %1348 = vdwg.mxu0
      %v1349 = vadd.f32 %v1320, %v1345
      %v1350 = vadd.f32 %v1321, %v1347
      %v1351 = vld [vmem:[%s7 + $0x20] sm:$0xf]
      %v1352 = vld [vmem:[%s7 + $0x24] sm:$0xf]
      %v1355 = vunpack.c.l.b16 %v1351
      %v1356 = vunpack.c.l.b16 %v1352
      %v1357 = vpack.c.b16 %v1356, %v1355
      %1358 = vrot.lane.b32.xlu0 %v1222, 124
      %v1359 = vpop.permute.xlu0 %1358
      %v1362 = vsel %vm1233, %v1357, 0
      %1364 = vmatpush.bf16.msra.mxu0 0
      %1365 = vmatpush.bf16.msra.mxu0 0
      %1366 = vmatpush.bf16.msra.mxu0 0
      %1367 = vmatpush.bf16.msra.mxu0 0
      %1368 = vmatpush.bf16.msra.mxu0 0
      %1369 = vmatpush.bf16.msra.mxu0 0
      %1370 = vmatpush.bf16.msra.mxu0 0
      %1371 = vmatpush.bf16.msra.mxu0 %v1359
      %1372 = vmatmul.bf16.gmra.mxu0 %v1362
      %v1373 = vpop.f32.mrf.mxu0
      %v1374 = vadd.f32 0.0, %v1373
      %v1375 = vpop.f32.mrf.mxu0
      %v1376 = vadd.f32 0.0, %v1375
      %1377 = vdwg.mxu0
      %v1378 = vadd.f32 %v1349, %v1374
      %v1379 = vadd.f32 %v1350, %v1376
      %v1380 = vmax.f32 %v1378, 0.0
      %v1381 = vmax.f32 %v1379, 0.0
      %v1382 = vpack.c.bf16 %v1381, %v1380
      %vm1383 = vcmask 261120
      %v1385 = vsel %vm1383, %v1382, 0
      %1387 = vmatpush.bf16.msra.mxu0 0
      %1388 = vmatpush.bf16.msra.mxu0 0
      %1389 = vmatpush.bf16.msra.mxu0 0
      %1390 = vmatpush.bf16.msra.mxu0 0
      %1391 = vmatpush.bf16.msra.mxu0 0
      %1392 = vmatpush.bf16.msra.mxu0 0
      %1393 = vmatpush.bf16.msra.mxu0 %v994
      %1394 = vmatpush.bf16.msra.mxu0 %v993
      %1395 = vmatmul.bf16.gmra.mxu0 %v1385
      %v1396 = vpop.f32.mrf.mxu0
      %v1397 = vadd.f32 0.0, %v1396
      %v1398 = vpop.f32.mrf.mxu0
      %v1399 = vadd.f32 0.0, %v1398
      %1400 = vdwg.mxu0
      %v1401 = vpack.c.bf16 %v1397, %v1397
      %v1402 = vpack.c.bf16 %v1399, %v1399
      %v1405 = vunpack.c.l.b16 %v1401
      %v1406 = vunpack.c.l.b16 %v1402
      %v1407 = vpack.c.b16 %v1406, %v1405
      %1408 = vrot.lane.b32.xlu0 %v1407, 2
      %v1409 = vpop.permute.xlu0 %1408
      %v1411 = vsel %vm796, 0, %v1409
      %vm1412 = vcmask 146432
      %v1413 = vsel %vm1412, %v1411, 0
      %v1415 = vld [vmem:[%s10] sm:$0xff]
      %v1416 = vld [vmem:[%s10 + $0x8] sm:$0xff]
      %v1417 = vld [vmem:[%s10 + $0x10] sm:$0xff]
      %v1418 = vld [vmem:[%s10 + $0x18] sm:$0xff]
      %v1419 = vld [vmem:[%s9] sm:$0xf]
      %v1420 = vld [vmem:[%s9 + $0x4] sm:$0xf]
      %v1421 = vld [vmem:[%s9 + $0x8] sm:$0xf]
      %v1422 = vld [vmem:[%s9 + $0xc] sm:$0xf]
      %v1427 = vunpack.c.l.b16 %v1419
      %v1428 = vunpack.c.l.b16 %v1420
      %v1429 = vunpack.c.l.b16 %v1421
      %v1430 = vunpack.c.l.b16 %v1422
      %v1431 = vpack.c.b16 %v1428, %v1427
      %v1432 = vpack.c.b16 %v1430, %v1429
      %v1434 = vsel %vm1233, %v1431, 0
      %v1437 = vsel %vm1233, %v1432, 0
      %1439 = vmatpush.bf16.msra.mxu0 0
      %1440 = vmatpush.bf16.msra.mxu0 0
      %1441 = vmatpush.bf16.msra.mxu0 0
      %1442 = vmatpush.bf16.msra.mxu0 0
      %1443 = vmatpush.bf16.msra.mxu0 0
      %1444 = vmatpush.bf16.msra.mxu0 0
      %1445 = vmatpush.bf16.msra.mxu0 0
      %1446 = vmatpush.bf16.msra.mxu0 %v1413
      %1447 = vmatmul.bf16.gmra.mxu0 %v1434
      %v1448 = vpop.f32.mrf.mxu0
      %v1449 = vadd.f32 0.0, %v1448
      %v1450 = vpop.f32.mrf.mxu0
      %v1451 = vadd.f32 0.0, %v1450
      %1452 = vmatmul.bf16.gmra.mxu0 %v1437
      %v1453 = vpop.f32.mrf.mxu0
      %v1454 = vadd.f32 0.0, %v1453
      %v1455 = vpop.f32.mrf.mxu0
      %v1456 = vadd.f32 0.0, %v1455
      %1457 = vdwg.mxu0
      %1459 = vset.pattern.permute.xlu0 0
      %1460 = vperm.xlu0 %1459, %v1415
      %v1461 = vpop.permute.xlu0 %1460
      %1464 = vset.pattern.permute.xlu0 0
      %1465 = vperm.xlu0 %1464, %v1416
      %v1466 = vpop.permute.xlu0 %1465
      %1469 = vset.pattern.permute.xlu0 0
      %1470 = vperm.xlu0 %1469, %v1417
      %v1471 = vpop.permute.xlu0 %1470
      %1474 = vset.pattern.permute.xlu0 0
      %1475 = vperm.xlu0 %1474, %v1418
      %v1476 = vpop.permute.xlu0 %1475
      %v1478 = vadd.f32 %v1461, %v1449
      %v1479 = vadd.f32 %v1466, %v1451
      %v1480 = vadd.f32 %v1471, %v1454
      %v1481 = vadd.f32 %v1476, %v1456
      %v1482 = vld [vmem:[%s9 + $0x10] sm:$0xf]
      %v1483 = vld [vmem:[%s9 + $0x14] sm:$0xf]
      %v1484 = vld [vmem:[%s9 + $0x18] sm:$0xf]
      %v1485 = vld [vmem:[%s9 + $0x1c] sm:$0xf]
      %v1490 = vunpack.c.l.b16 %v1482
      %v1491 = vunpack.c.l.b16 %v1483
      %v1492 = vunpack.c.l.b16 %v1484
      %v1493 = vunpack.c.l.b16 %v1485
      %v1494 = vpack.c.b16 %v1491, %v1490
      %v1495 = vpack.c.b16 %v1493, %v1492
      %1497 = vrot.lane.b32.xlu0 %v1413, 127
      %v1498 = vpop.permute.xlu0 %1497
      %v1501 = vsel %vm1233, %v1494, 0
      %v1504 = vsel %vm1233, %v1495, 0
      %1506 = vmatpush.bf16.msra.mxu0 0
      %1507 = vmatpush.bf16.msra.mxu0 0
      %1508 = vmatpush.bf16.msra.mxu0 0
      %1509 = vmatpush.bf16.msra.mxu0 0
      %1510 = vmatpush.bf16.msra.mxu0 0
      %1511 = vmatpush.bf16.msra.mxu0 0
      %1512 = vmatpush.bf16.msra.mxu0 0
      %1513 = vmatpush.bf16.msra.mxu0 %v1498
      %1514 = vmatmul.bf16.gmra.mxu0 %v1501
      %v1515 = vpop.f32.mrf.mxu0
      %v1516 = vadd.f32 0.0, %v1515
      %v1517 = vpop.f32.mrf.mxu0
      %v1518 = vadd.f32 0.0, %v1517
      %1519 = vmatmul.bf16.gmra.mxu0 %v1504
      %v1520 = vpop.f32.mrf.mxu0
      %v1521 = vadd.f32 0.0, %v1520
      %v1522 = vpop.f32.mrf.mxu0
      %v1523 = vadd.f32 0.0, %v1522
      %1524 = vdwg.mxu0
      %v1525 = vadd.f32 %v1478, %v1516
      %v1526 = vadd.f32 %v1479, %v1518
      %v1527 = vadd.f32 %v1480, %v1521
      %v1528 = vadd.f32 %v1481, %v1523
      %v1529 = vld [vmem:[%s9 + $0x20] sm:$0xf]
      %v1530 = vld [vmem:[%s9 + $0x24] sm:$0xf]
      %v1531 = vld [vmem:[%s9 + $0x28] sm:$0xf]
      %v1532 = vld [vmem:[%s9 + $0x2c] sm:$0xf]
      %v1537 = vunpack.c.l.b16 %v1529
      %v1538 = vunpack.c.l.b16 %v1530
      %v1539 = vunpack.c.l.b16 %v1531
      %v1540 = vunpack.c.l.b16 %v1532
      %v1541 = vpack.c.b16 %v1538, %v1537
      %v1542 = vpack.c.b16 %v1540, %v1539
      %1543 = vrot.lane.b32.xlu0 %v1413, 126
      %v1544 = vpop.permute.xlu0 %1543
      %v1547 = vsel %vm1233, %v1541, 0
      %v1550 = vsel %vm1233, %v1542, 0
      %1552 = vmatpush.bf16.msra.mxu0 0
      %1553 = vmatpush.bf16.msra.mxu0 0
      %1554 = vmatpush.bf16.msra.mxu0 0
      %1555 = vmatpush.bf16.msra.mxu0 0
      %1556 = vmatpush.bf16.msra.mxu0 0
      %1557 = vmatpush.bf16.msra.mxu0 0
      %1558 = vmatpush.bf16.msra.mxu0 0
      %1559 = vmatpush.bf16.msra.mxu0 %v1544
      %1560 = vmatmul.bf16.gmra.mxu0 %v1547
      %v1561 = vpop.f32.mrf.mxu0
      %v1562 = vadd.f32 0.0, %v1561
      %v1563 = vpop.f32.mrf.mxu0
      %v1564 = vadd.f32 0.0, %v1563
      %1565 = vmatmul.bf16.gmra.mxu0 %v1550
      %v1566 = vpop.f32.mrf.mxu0
      %v1567 = vadd.f32 0.0, %v1566
      %v1568 = vpop.f32.mrf.mxu0
      %v1569 = vadd.f32 0.0, %v1568
      %1570 = vdwg.mxu0
      %v1571 = vadd.f32 %v1525, %v1562
      %v1572 = vadd.f32 %v1526, %v1564
      %v1573 = vadd.f32 %v1527, %v1567
      %v1574 = vadd.f32 %v1528, %v1569
      %v1575 = vld [vmem:[%s9 + $0x30] sm:$0xf]
      %v1576 = vld [vmem:[%s9 + $0x34] sm:$0xf]
      %v1577 = vld [vmem:[%s9 + $0x38] sm:$0xf]
      %v1578 = vld [vmem:[%s9 + $0x3c] sm:$0xf]
      %v1583 = vunpack.c.l.b16 %v1575
      %v1584 = vunpack.c.l.b16 %v1576
      %v1585 = vunpack.c.l.b16 %v1577
      %v1586 = vunpack.c.l.b16 %v1578
      %v1587 = vpack.c.b16 %v1584, %v1583
      %v1588 = vpack.c.b16 %v1586, %v1585
      %1589 = vrot.lane.b32.xlu0 %v1413, 125
      %v1590 = vpop.permute.xlu0 %1589
      %v1593 = vsel %vm1233, %v1587, 0
      %v1596 = vsel %vm1233, %v1588, 0
      %1598 = vmatpush.bf16.msra.mxu0 0
      %1599 = vmatpush.bf16.msra.mxu0 0
      %1600 = vmatpush.bf16.msra.mxu0 0
      %1601 = vmatpush.bf16.msra.mxu0 0
      %1602 = vmatpush.bf16.msra.mxu0 0
      %1603 = vmatpush.bf16.msra.mxu0 0
      %1604 = vmatpush.bf16.msra.mxu0 0
      %1605 = vmatpush.bf16.msra.mxu0 %v1590
      %1606 = vmatmul.bf16.gmra.mxu0 %v1593
      %v1607 = vpop.f32.mrf.mxu0
      %v1608 = vadd.f32 0.0, %v1607
      %v1609 = vpop.f32.mrf.mxu0
      %v1610 = vadd.f32 0.0, %v1609
      %1611 = vmatmul.bf16.gmra.mxu0 %v1596
      %v1612 = vpop.f32.mrf.mxu0
      %v1613 = vadd.f32 0.0, %v1612
      %v1614 = vpop.f32.mrf.mxu0
      %v1615 = vadd.f32 0.0, %v1614
      %1616 = vdwg.mxu0
      %v1617 = vadd.f32 %v1571, %v1608
      %v1618 = vadd.f32 %v1572, %v1610
      %v1619 = vadd.f32 %v1573, %v1613
      %v1620 = vadd.f32 %v1574, %v1615
      %v1621 = vld [vmem:[%s9 + $0x40] sm:$0xf]
      %v1622 = vld [vmem:[%s9 + $0x44] sm:$0xf]
      %v1623 = vld [vmem:[%s9 + $0x48] sm:$0xf]
      %v1624 = vld [vmem:[%s9 + $0x4c] sm:$0xf]
      %v1629 = vunpack.c.l.b16 %v1621
      %v1630 = vunpack.c.l.b16 %v1622
      %v1631 = vunpack.c.l.b16 %v1623
      %v1632 = vunpack.c.l.b16 %v1624
      %v1633 = vpack.c.b16 %v1630, %v1629
      %v1634 = vpack.c.b16 %v1632, %v1631
      %1635 = vrot.lane.b32.xlu0 %v1413, 124
      %v1636 = vpop.permute.xlu0 %1635
      %v1639 = vsel %vm1233, %v1633, 0
      %v1642 = vsel %vm1233, %v1634, 0
      %1644 = vmatpush.bf16.msra.mxu0 0
      %1645 = vmatpush.bf16.msra.mxu0 0
      %1646 = vmatpush.bf16.msra.mxu0 0
      %1647 = vmatpush.bf16.msra.mxu0 0
      %1648 = vmatpush.bf16.msra.mxu0 0
      %1649 = vmatpush.bf16.msra.mxu0 0
      %1650 = vmatpush.bf16.msra.mxu0 0
      %1651 = vmatpush.bf16.msra.mxu0 %v1636
      %1652 = vmatmul.bf16.gmra.mxu0 %v1639
      %v1653 = vpop.f32.mrf.mxu0
      %v1654 = vadd.f32 0.0, %v1653
      %v1655 = vpop.f32.mrf.mxu0
      %v1656 = vadd.f32 0.0, %v1655
      %1657 = vmatmul.bf16.gmra.mxu0 %v1642
      %v1658 = vpop.f32.mrf.mxu0
      %v1659 = vadd.f32 0.0, %v1658
      %v1660 = vpop.f32.mrf.mxu0
      %v1661 = vadd.f32 0.0, %v1660
      %1662 = vdwg.mxu0
      %v1663 = vadd.f32 %v1617, %v1654
      %v1664 = vadd.f32 %v1618, %v1656
      %v1665 = vadd.f32 %v1619, %v1659
      %v1666 = vadd.f32 %v1620, %v1661
      %v1667 = vmax.f32 %v1663, 0.0
      %v1668 = vmax.f32 %v1664, 0.0
      %v1669 = vmax.f32 %v1665, 0.0
      %v1670 = vmax.f32 %v1666, 0.0
      %v1671 = vpack.c.bf16 %v1668, %v1667
      %v1672 = vpack.c.bf16 %v1670, %v1669
      %v1674 = vsel %vm1233, %v1671, 0
      %v1677 = vsel %vm1233, %v1672, 0
      %1679 = vmatpush.bf16.msra.mxu0 0
      %1680 = vmatpush.bf16.msra.mxu0 0
      %1681 = vmatpush.bf16.msra.mxu0 0
      %1682 = vmatpush.bf16.msra.mxu0 0
      %1683 = vmatpush.bf16.msra.mxu0 0
      %1684 = vmatpush.bf16.msra.mxu0 0
      %1685 = vmatpush.bf16.msra.mxu0 0
      %1686 = vmatpush.bf16.msra.mxu0 %v993
      %1687 = vmatmul.bf16.gmra.mxu0 %v1674
      %v1688 = vpop.f32.mrf.mxu0
      %v1689 = vadd.f32 0.0, %v1688
      %v1690 = vpop.f32.mrf.mxu0
      %v1691 = vadd.f32 0.0, %v1690
      %1692 = vmatmul.bf16.gmra.mxu0 %v1677
      %v1693 = vpop.f32.mrf.mxu0
      %v1694 = vadd.f32 0.0, %v1693
      %v1695 = vpop.f32.mrf.mxu0
      %v1696 = vadd.f32 0.0, %v1695
      %1697 = vdwg.mxu0
      %v1698 = vpack.c.bf16 %v1689, %v1689
      %v1699 = vpack.c.bf16 %v1691, %v1691
      %v1700 = vpack.c.bf16 %v1694, %v1694
      %v1701 = vpack.c.bf16 %v1696, %v1696
      %v1706 = vunpack.c.l.b16 %v1698
      %v1707 = vunpack.c.l.b16 %v1699
      %v1708 = vunpack.c.l.b16 %v1700
      %v1709 = vunpack.c.l.b16 %v1701
      %v1710 = vpack.c.b16 %v1707, %v1706
      %v1711 = vpack.c.b16 %v1709, %v1708
      %1712 = vrot.lane.b32.xlu0 %v1710, 1
      %v1713 = vpop.permute.xlu0 %1712
      %1714 = vrot.lane.b32.xlu0 %v1711, 1
      %v1715 = vpop.permute.xlu0 %1714
      %vm1716 = vcmask 7168
      %v1718 = vsel %vm1716, 0, %v1713
      %v1720 = vsel %vm1716, 0, %v1715
      %vm1721 = vcmask 72704
      %v1722 = vsel %vm1721, %v1718, 0
      %v1724 = vsel %vm1721, %v1720, 0
      %v1726 = vld [vmem:[%s22] sm:$0xff]
      %v1727 = vld [vmem:[%s22 + $0x8] sm:$0xff]
      %v1728 = vld [vmem:[%s20] sm:$0xf]
      %v1729 = vld [vmem:[%s20 + $0x4] sm:$0xf]
      %v1732 = vunpack.c.l.b16 %v1728
      %v1733 = vunpack.c.l.b16 %v1729
      %v1734 = vpack.c.b16 %v1733, %v1732
      %v1736 = vsel %vm1383, %v1734, 0
      %1738 = vmatpush.bf16.msra.mxu0 0
      %1739 = vmatpush.bf16.msra.mxu0 0
      %1740 = vmatpush.bf16.msra.mxu0 0
      %1741 = vmatpush.bf16.msra.mxu0 0
      %1742 = vmatpush.bf16.msra.mxu0 0
      %1743 = vmatpush.bf16.msra.mxu0 0
      %1744 = vmatpush.bf16.msra.mxu0 %v1724
      %1745 = vmatpush.bf16.msra.mxu0 %v1722
      %1746 = vmatmul.bf16.gmra.mxu0 %v1736
      %v1747 = vpop.f32.mrf.mxu0
      %v1748 = vadd.f32 0.0, %v1747
      %v1749 = vpop.f32.mrf.mxu0
      %v1750 = vadd.f32 0.0, %v1749
      %1751 = vdwg.mxu0
      %1753 = vset.pattern.permute.xlu0 0
      %1754 = vperm.xlu0 %1753, %v1726
      %v1755 = vpop.permute.xlu0 %1754
      %1758 = vset.pattern.permute.xlu0 0
      %1759 = vperm.xlu0 %1758, %v1727
      %v1760 = vpop.permute.xlu0 %1759
      %v1762 = vadd.f32 %v1755, %v1748
      %v1763 = vadd.f32 %v1760, %v1750
      %v1764 = vld [vmem:[%s20 + $0x8] sm:$0xf]
      %v1765 = vld [vmem:[%s20 + $0xc] sm:$0xf]
      %v1768 = vunpack.c.l.b16 %v1764
      %v1769 = vunpack.c.l.b16 %v1765
      %v1770 = vpack.c.b16 %v1769, %v1768
      %1773 = vrot.lane.b32.xlu0 %v1722, 127
      %v1774 = vpop.permute.xlu0 %1773
      %1775 = vrot.lane.b32.xlu0 %v1724, 127
      %v1776 = vpop.permute.xlu0 %1775
      %v1780 = vsel %vm1383, %v1770, 0
      %1782 = vmatpush.bf16.msra.mxu0 0
      %1783 = vmatpush.bf16.msra.mxu0 0
      %1784 = vmatpush.bf16.msra.mxu0 0
      %1785 = vmatpush.bf16.msra.mxu0 0
      %1786 = vmatpush.bf16.msra.mxu0 0
      %1787 = vmatpush.bf16.msra.mxu0 0
      %1788 = vmatpush.bf16.msra.mxu0 %v1776
      %1789 = vmatpush.bf16.msra.mxu0 %v1774
      %1790 = vmatmul.bf16.gmra.mxu0 %v1780
      %v1791 = vpop.f32.mrf.mxu0
      %v1792 = vadd.f32 0.0, %v1791
      %v1793 = vpop.f32.mrf.mxu0
      %v1794 = vadd.f32 0.0, %v1793
      %1795 = vdwg.mxu0
      %v1796 = vadd.f32 %v1762, %v1792
      %v1797 = vadd.f32 %v1763, %v1794
      %v1798 = vld [vmem:[%s20 + $0x10] sm:$0xf]
      %v1799 = vld [vmem:[%s20 + $0x14] sm:$0xf]
      %v1802 = vunpack.c.l.b16 %v1798
      %v1803 = vunpack.c.l.b16 %v1799
      %v1804 = vpack.c.b16 %v1803, %v1802
      %1805 = vrot.lane.b32.xlu0 %v1722, 126
      %v1806 = vpop.permute.xlu0 %1805
      %1807 = vrot.lane.b32.xlu0 %v1724, 126
      %v1808 = vpop.permute.xlu0 %1807
      %v1812 = vsel %vm1383, %v1804, 0
      %1814 = vmatpush.bf16.msra.mxu0 0
      %1815 = vmatpush.bf16.msra.mxu0 0
      %1816 = vmatpush.bf16.msra.mxu0 0
      %1817 = vmatpush.bf16.msra.mxu0 0
      %1818 = vmatpush.bf16.msra.mxu0 0
      %1819 = vmatpush.bf16.msra.mxu0 0
      %1820 = vmatpush.bf16.msra.mxu0 %v1808
      %1821 = vmatpush.bf16.msra.mxu0 %v1806
      %1822 = vmatmul.bf16.gmra.mxu0 %v1812
      %v1823 = vpop.f32.mrf.mxu0
      %v1824 = vadd.f32 0.0, %v1823
      %v1825 = vpop.f32.mrf.mxu0
      %v1826 = vadd.f32 0.0, %v1825
      %1827 = vdwg.mxu0
      %v1828 = vadd.f32 %v1796, %v1824
      %v1829 = vadd.f32 %v1797, %v1826
      %v1830 = vld [vmem:[%s21] sm:$0xf]
      %v1831 = vld [vmem:[%s21 + $0x4] sm:$0xf]
      %v1834 = vunpack.c.l.b16 %v1830
      %v1835 = vunpack.c.l.b16 %v1831
      %v1836 = vpack.c.b16 %v1835, %v1834
      %v1838 = vsel %vm1383, %v1836, 0
      %1840 = vmatpush.bf16.msra.mxu0 0
      %1841 = vmatpush.bf16.msra.mxu0 0
      %1842 = vmatpush.bf16.msra.mxu0 0
      %1843 = vmatpush.bf16.msra.mxu0 0
      %1844 = vmatpush.bf16.msra.mxu0 0
      %1845 = vmatpush.bf16.msra.mxu0 0
      %1846 = vmatpush.bf16.msra.mxu0 %v1776
      %1847 = vmatpush.bf16.msra.mxu0 %v1774
      %1848 = vmatmul.bf16.gmra.mxu0 %v1838
      %v1849 = vpop.f32.mrf.mxu0
      %v1850 = vadd.f32 0.0, %v1849
      %v1851 = vpop.f32.mrf.mxu0
      %v1852 = vadd.f32 0.0, %v1851
      %1853 = vdwg.mxu0
      %v1854 = vadd.f32 %v1755, %v1850
      %v1855 = vadd.f32 %v1760, %v1852
      %v1856 = vld [vmem:[%s21 + $0x8] sm:$0xf]
      %v1857 = vld [vmem:[%s21 + $0xc] sm:$0xf]
      %v1860 = vunpack.c.l.b16 %v1856
      %v1861 = vunpack.c.l.b16 %v1857
      %v1862 = vpack.c.b16 %v1861, %v1860
      %v1864 = vsel %vm1383, %v1862, 0
      %1866 = vmatpush.bf16.msra.mxu0 0
      %1867 = vmatpush.bf16.msra.mxu0 0
      %1868 = vmatpush.bf16.msra.mxu0 0
      %1869 = vmatpush.bf16.msra.mxu0 0
      %1870 = vmatpush.bf16.msra.mxu0 0
      %1871 = vmatpush.bf16.msra.mxu0 0
      %1872 = vmatpush.bf16.msra.mxu0 %v1808
      %1873 = vmatpush.bf16.msra.mxu0 %v1806
      %1874 = vmatmul.bf16.gmra.mxu0 %v1864
      %v1875 = vpop.f32.mrf.mxu0
      %v1876 = vadd.f32 0.0, %v1875
      %v1877 = vpop.f32.mrf.mxu0
      %v1878 = vadd.f32 0.0, %v1877
      %1879 = vdwg.mxu0
      %v1880 = vadd.f32 %v1854, %v1876
      %v1881 = vadd.f32 %v1855, %v1878
      %v1882 = vmax.f32 %v1828, 0.0
      %v1883 = vmax.f32 %v1829, 0.0
      %v1884 = vpack.c.bf16 %v1883, %v1882
      %v1885 = vmax.f32 %v1880, 0.0
      %v1886 = vmax.f32 %v1881, 0.0
      %v1887 = vpack.c.bf16 %v1886, %v1885
      %v1888 = vmul.u32 %v942, 2
      %vm1889 = vcmp.eq.s32.totalorder %v959, %v1888
      %v1890 = vsel %vm1889, 1.0, 0.0
      %v1891 = vpack.c.bf16 %v1890, %v1890
      %v1892 = vadd.s32 %v1888, 1
      %vm1893 = vcmp.eq.s32.totalorder %v959, %v1892
      %v1894 = vsel %vm1893, 1.0, 0.0
      %v1895 = vpack.c.bf16 %v1894, %v1894
      %v1897 = vsel %vm803, %v1887, 0
      %v1900 = vsel %vm807, %v1895, 0
      %1902 = vmatpush.bf16.msra.mxu0 0
      %1903 = vmatpush.bf16.msra.mxu0 0
      %1904 = vmatpush.bf16.msra.mxu0 0
      %1905 = vmatpush.bf16.msra.mxu0 0
      %1906 = vmatpush.bf16.msra.mxu0 0
      %1907 = vmatpush.bf16.msra.mxu0 0
      %1908 = vmatpush.bf16.msra.mxu0 0
      %1909 = vmatpush.bf16.msra.mxu0 %v1900
      %1910 = vmatmul.bf16.gmra.mxu0 %v1897
      %v1911 = vpop.f32.mrf.mxu0
      %v1912 = vadd.f32 0.0, %v1911
      %v1913 = vpop.f32.mrf.mxu0
      %v1914 = vadd.f32 0.0, %v1913
      %1915 = vdwg.mxu0
      %v1917 = vsel %vm803, %v1884, 0
      %v1920 = vsel %vm807, %v1891, 0
      %1922 = vmatpush.bf16.msra.mxu0 0
      %1923 = vmatpush.bf16.msra.mxu0 0
      %1924 = vmatpush.bf16.msra.mxu0 0
      %1925 = vmatpush.bf16.msra.mxu0 0
      %1926 = vmatpush.bf16.msra.mxu0 0
      %1927 = vmatpush.bf16.msra.mxu0 0
      %1928 = vmatpush.bf16.msra.mxu0 0
      %1929 = vmatpush.bf16.msra.mxu0 %v1920
      %1930 = vmatmul.bf16.gmra.mxu0 %v1917
      %v1931 = vpop.f32.mrf.mxu0
      %v1932 = vadd.f32 %v1912, %v1931
      %v1933 = vpop.f32.mrf.mxu0
      %v1934 = vadd.f32 %v1914, %v1933
      %1935 = vdwg.mxu0
      %v1936 = vpack.c.bf16 %v1932, %v1932
      %v1937 = vpack.c.bf16 %v1934, %v1934
      %v1940 = vunpack.c.l.b16 %v1936
      %v1941 = vunpack.c.l.b16 %v1937
      %v1942 = vpack.c.b16 %v1941, %v1940
      %1943 = vrot.lane.b32.xlu0 %v1407, 1
      %v1944 = vpop.permute.xlu0 %1943
      %1945 = vrot.lane.b32.xlu0 %v1942, 1
      %v1946 = vpop.permute.xlu0 %1945
      %v1948 = vsel %vm1716, 0, %v1944
      %v1950 = vsel %vm1716, 0, %v1946
      %vm1951 = vcmask 138240
      %v1952 = vsel %vm1951, %v1948, 0
      %v1954 = vsel %vm1951, %v1950, 0
      %v1956 = vld [vmem:[%s19] sm:$0xff]
      %v1957 = vld [vmem:[%s19 + $0x8] sm:$0xff]
      %v1958 = vld [vmem:[%s17] sm:$0xf]
      %v1959 = vld [vmem:[%s17 + $0x4] sm:$0xf]
      %v1962 = vunpack.c.l.b16 %v1958
      %v1963 = vunpack.c.l.b16 %v1959
      %v1964 = vpack.c.b16 %v1963, %v1962
      %v1966 = vsel %vm1383, %v1964, 0
      %1968 = vmatpush.bf16.msra.mxu0 0
      %1969 = vmatpush.bf16.msra.mxu0 0
      %1970 = vmatpush.bf16.msra.mxu0 0
      %1971 = vmatpush.bf16.msra.mxu0 0
      %1972 = vmatpush.bf16.msra.mxu0 0
      %1973 = vmatpush.bf16.msra.mxu0 0
      %1974 = vmatpush.bf16.msra.mxu0 %v1954
      %1975 = vmatpush.bf16.msra.mxu0 %v1952
      %1976 = vmatmul.bf16.gmra.mxu0 %v1966
      %v1977 = vpop.f32.mrf.mxu0
      %v1978 = vadd.f32 0.0, %v1977
      %v1979 = vpop.f32.mrf.mxu0
      %v1980 = vadd.f32 0.0, %v1979
      %1981 = vdwg.mxu0
      %1983 = vset.pattern.permute.xlu0 0
      %1984 = vperm.xlu0 %1983, %v1956
      %v1985 = vpop.permute.xlu0 %1984
      %1988 = vset.pattern.permute.xlu0 0
      %1989 = vperm.xlu0 %1988, %v1957
      %v1990 = vpop.permute.xlu0 %1989
      %v1992 = vadd.f32 %v1985, %v1978
      %v1993 = vadd.f32 %v1990, %v1980
      %v1994 = vld [vmem:[%s17 + $0x8] sm:$0xf]
      %v1995 = vld [vmem:[%s17 + $0xc] sm:$0xf]
      %v1998 = vunpack.c.l.b16 %v1994
      %v1999 = vunpack.c.l.b16 %v1995
      %v2000 = vpack.c.b16 %v1999, %v1998
      %2003 = vrot.lane.b32.xlu0 %v1952, 127
      %v2004 = vpop.permute.xlu0 %2003
      %2005 = vrot.lane.b32.xlu0 %v1954, 127
      %v2006 = vpop.permute.xlu0 %2005
      %v2010 = vsel %vm1383, %v2000, 0
      %2012 = vmatpush.bf16.msra.mxu0 0
      %2013 = vmatpush.bf16.msra.mxu0 0
      %2014 = vmatpush.bf16.msra.mxu0 0
      %2015 = vmatpush.bf16.msra.mxu0 0
      %2016 = vmatpush.bf16.msra.mxu0 0
      %2017 = vmatpush.bf16.msra.mxu0 0
      %2018 = vmatpush.bf16.msra.mxu0 %v2006
      %2019 = vmatpush.bf16.msra.mxu0 %v2004
      %2020 = vmatmul.bf16.gmra.mxu0 %v2010
      %v2021 = vpop.f32.mrf.mxu0
      %v2022 = vadd.f32 0.0, %v2021
      %v2023 = vpop.f32.mrf.mxu0
      %v2024 = vadd.f32 0.0, %v2023
      %2025 = vdwg.mxu0
      %v2026 = vadd.f32 %v1992, %v2022
      %v2027 = vadd.f32 %v1993, %v2024
      %v2028 = vld [vmem:[%s17 + $0x10] sm:$0xf]
      %v2029 = vld [vmem:[%s17 + $0x14] sm:$0xf]
      %v2032 = vunpack.c.l.b16 %v2028
      %v2033 = vunpack.c.l.b16 %v2029
      %v2034 = vpack.c.b16 %v2033, %v2032
      %2035 = vrot.lane.b32.xlu0 %v1952, 126
      %v2036 = vpop.permute.xlu0 %2035
      %2037 = vrot.lane.b32.xlu0 %v1954, 126
      %v2038 = vpop.permute.xlu0 %2037
      %v2042 = vsel %vm1383, %v2034, 0
      %2044 = vmatpush.bf16.msra.mxu0 0
      %2045 = vmatpush.bf16.msra.mxu0 0
      %2046 = vmatpush.bf16.msra.mxu0 0
      %2047 = vmatpush.bf16.msra.mxu0 0
      %2048 = vmatpush.bf16.msra.mxu0 0
      %2049 = vmatpush.bf16.msra.mxu0 0
      %2050 = vmatpush.bf16.msra.mxu0 %v2038
      %2051 = vmatpush.bf16.msra.mxu0 %v2036
      %2052 = vmatmul.bf16.gmra.mxu0 %v2042
      %v2053 = vpop.f32.mrf.mxu0
      %v2054 = vadd.f32 0.0, %v2053
      %v2055 = vpop.f32.mrf.mxu0
      %v2056 = vadd.f32 0.0, %v2055
      %2057 = vdwg.mxu0
      %v2058 = vadd.f32 %v2026, %v2054
      %v2059 = vadd.f32 %v2027, %v2056
      %v2060 = vld [vmem:[%s18] sm:$0xf]
      %v2061 = vld [vmem:[%s18 + $0x4] sm:$0xf]
      %v2064 = vunpack.c.l.b16 %v2060
      %v2065 = vunpack.c.l.b16 %v2061
      %v2066 = vpack.c.b16 %v2065, %v2064
      %v2068 = vsel %vm1383, %v2066, 0
      %2070 = vmatpush.bf16.msra.mxu0 0
      %2071 = vmatpush.bf16.msra.mxu0 0
      %2072 = vmatpush.bf16.msra.mxu0 0
      %2073 = vmatpush.bf16.msra.mxu0 0
      %2074 = vmatpush.bf16.msra.mxu0 0
      %2075 = vmatpush.bf16.msra.mxu0 0
      %2076 = vmatpush.bf16.msra.mxu0 %v2006
      %2077 = vmatpush.bf16.msra.mxu0 %v2004
      %2078 = vmatmul.bf16.gmra.mxu0 %v2068
      %v2079 = vpop.f32.mrf.mxu0
      %v2080 = vadd.f32 0.0, %v2079
      %v2081 = vpop.f32.mrf.mxu0
      %v2082 = vadd.f32 0.0, %v2081
      %2083 = vdwg.mxu0
      %v2084 = vadd.f32 %v1985, %v2080
      %v2085 = vadd.f32 %v1990, %v2082
      %v2086 = vld [vmem:[%s18 + $0x8] sm:$0xf]
      %v2087 = vld [vmem:[%s18 + $0xc] sm:$0xf]
      %v2090 = vunpack.c.l.b16 %v2086
      %v2091 = vunpack.c.l.b16 %v2087
      %v2092 = vpack.c.b16 %v2091, %v2090
      %v2094 = vsel %vm1383, %v2092, 0
      %2096 = vmatpush.bf16.msra.mxu0 0
      %2097 = vmatpush.bf16.msra.mxu0 0
      %2098 = vmatpush.bf16.msra.mxu0 0
      %2099 = vmatpush.bf16.msra.mxu0 0
      %2100 = vmatpush.bf16.msra.mxu0 0
      %2101 = vmatpush.bf16.msra.mxu0 0
      %2102 = vmatpush.bf16.msra.mxu0 %v2038
      %2103 = vmatpush.bf16.msra.mxu0 %v2036
      %2104 = vmatmul.bf16.gmra.mxu0 %v2094
      %v2105 = vpop.f32.mrf.mxu0
      %v2106 = vadd.f32 0.0, %v2105
      %v2107 = vpop.f32.mrf.mxu0
      %v2108 = vadd.f32 0.0, %v2107
      %2109 = vdwg.mxu0
      %v2110 = vadd.f32 %v2084, %v2106
      %v2111 = vadd.f32 %v2085, %v2108
      %v2112 = vmax.f32 %v2058, 0.0
      %v2113 = vmax.f32 %v2059, 0.0
      %v2114 = vpack.c.bf16 %v2113, %v2112
      %v2115 = vmax.f32 %v2110, 0.0
      %v2116 = vmax.f32 %v2111, 0.0
      %v2117 = vpack.c.bf16 %v2116, %v2115
      %v2118 = vmul.u32 %v943, 2
      %vm2119 = vcmp.eq.s32.totalorder %v959, %v2118
      %v2120 = vsel %vm2119, 1.0, 0.0
      %v2121 = vpack.c.bf16 %v2120, %v1890
      %v2122 = vadd.s32 %v2118, 1
      %vm2123 = vcmp.eq.s32.totalorder %v959, %v2122
      %v2124 = vsel %vm2123, 1.0, 0.0
      %v2125 = vpack.c.bf16 %v2124, %v1894
      %v2127 = vsel %vm1233, %v2117, 0
      %2129 = vmatpush.bf16.msra.mxu0 0
      %2130 = vmatpush.bf16.msra.mxu0 0
      %2131 = vmatpush.bf16.msra.mxu0 0
      %2132 = vmatpush.bf16.msra.mxu0 0
      %2133 = vmatpush.bf16.msra.mxu0 0
      %2134 = vmatpush.bf16.msra.mxu0 0
      %2135 = vmatpush.bf16.msra.mxu0 0
      %2136 = vmatpush.bf16.msra.mxu0 %v2125
      %2137 = vmatmul.bf16.gmra.mxu0 %v2127
      %v2138 = vpop.f32.mrf.mxu0
      %v2139 = vadd.f32 0.0, %v2138
      %v2140 = vpop.f32.mrf.mxu0
      %v2141 = vadd.f32 0.0, %v2140
      %2142 = vdwg.mxu0
      %v2144 = vsel %vm1233, %v2114, 0
      %2146 = vmatpush.bf16.msra.mxu0 0
      %2147 = vmatpush.bf16.msra.mxu0 0
      %2148 = vmatpush.bf16.msra.mxu0 0
      %2149 = vmatpush.bf16.msra.mxu0 0
      %2150 = vmatpush.bf16.msra.mxu0 0
      %2151 = vmatpush.bf16.msra.mxu0 0
      %2152 = vmatpush.bf16.msra.mxu0 0
      %2153 = vmatpush.bf16.msra.mxu0 %v2121
      %2154 = vmatmul.bf16.gmra.mxu0 %v2144
      %v2155 = vpop.f32.mrf.mxu0
      %v2156 = vadd.f32 %v2139, %v2155
      %v2157 = vpop.f32.mrf.mxu0
      %v2158 = vadd.f32 %v2141, %v2157
      %2159 = vdwg.mxu0
      %v2160 = vpack.c.bf16 %v2156, %v2156
      %v2161 = vpack.c.bf16 %v2158, %v2158
      %v2164 = vunpack.c.l.b16 %v2160
      %v2165 = vunpack.c.l.b16 %v2161
      %v2166 = vpack.c.b16 %v2165, %v2164
      %2167 = vrot.lane.b32.xlu0 %v1216, 1
      %v2168 = vpop.permute.xlu0 %2167
      %2169 = vrot.lane.b32.xlu0 %v2166, 1
      %v2170 = vpop.permute.xlu0 %2169
      %v2172 = vsel %vm1716, 0, %v2168
      %v2174 = vsel %vm1716, 0, %v2170
      %vm2175 = vcmask 269312
      %v2176 = vsel %vm2175, %v2172, 0
      %v2178 = vsel %vm2175, %v2174, 0
      %v2180 = vld [vmem:[%s16] sm:$0xff]
      %v2181 = vld [vmem:[%s14] sm:$0xf]
      %v2183 = vsel %vm1383, %v2181, 0
      %2185 = vmatpush.bf16.msra.mxu0 0
      %2186 = vmatpush.bf16.msra.mxu0 0
      %2187 = vmatpush.bf16.msra.mxu0 0
      %2188 = vmatpush.bf16.msra.mxu0 0
      %2189 = vmatpush.bf16.msra.mxu0 0
      %2190 = vmatpush.bf16.msra.mxu0 0
      %2191 = vmatpush.bf16.msra.mxu0 %v2178
      %2192 = vmatpush.bf16.msra.mxu0 %v2176
      %2193 = vmatmul.bf16.gmra.mxu0 %v2183
      %v2194 = vpop.f32.mrf.mxu0
      %v2195 = vadd.f32 0.0, %v2194
      %v2196 = vpop.f32.mrf.mxu0
      %2197 = vdwg.mxu0
      %2199 = vset.pattern.permute.xlu0 0
      %2200 = vperm.xlu0 %2199, %v2180
      %v2201 = vpop.permute.xlu0 %2200
      %v2203 = vadd.f32 %v2201, %v2195
      %v2204 = vld [vmem:[%s14 + $0x4] sm:$0xf]
      %2207 = vrot.lane.b32.xlu0 %v2176, 127
      %v2208 = vpop.permute.xlu0 %2207
      %2209 = vrot.lane.b32.xlu0 %v2178, 127
      %v2210 = vpop.permute.xlu0 %2209
      %v2214 = vsel %vm1383, %v2204, 0
      %2216 = vmatpush.bf16.msra.mxu0 0
      %2217 = vmatpush.bf16.msra.mxu0 0
      %2218 = vmatpush.bf16.msra.mxu0 0
      %2219 = vmatpush.bf16.msra.mxu0 0
      %2220 = vmatpush.bf16.msra.mxu0 0
      %2221 = vmatpush.bf16.msra.mxu0 0
      %2222 = vmatpush.bf16.msra.mxu0 %v2210
      %2223 = vmatpush.bf16.msra.mxu0 %v2208
      %2224 = vmatmul.bf16.gmra.mxu0 %v2214
      %v2225 = vpop.f32.mrf.mxu0
      %v2226 = vadd.f32 0.0, %v2225
      %v2227 = vpop.f32.mrf.mxu0
      %2228 = vdwg.mxu0
      %v2229 = vadd.f32 %v2203, %v2226
      %v2230 = vld [vmem:[%s14 + $0x8] sm:$0xf]
      %2231 = vrot.lane.b32.xlu0 %v2176, 126
      %v2232 = vpop.permute.xlu0 %2231
      %2233 = vrot.lane.b32.xlu0 %v2178, 126
      %v2234 = vpop.permute.xlu0 %2233
      %v2238 = vsel %vm1383, %v2230, 0
      %2240 = vmatpush.bf16.msra.mxu0 0
      %2241 = vmatpush.bf16.msra.mxu0 0
      %2242 = vmatpush.bf16.msra.mxu0 0
      %2243 = vmatpush.bf16.msra.mxu0 0
      %2244 = vmatpush.bf16.msra.mxu0 0
      %2245 = vmatpush.bf16.msra.mxu0 0
      %2246 = vmatpush.bf16.msra.mxu0 %v2234
      %2247 = vmatpush.bf16.msra.mxu0 %v2232
      %2248 = vmatmul.bf16.gmra.mxu0 %v2238
      %v2249 = vpop.f32.mrf.mxu0
      %v2250 = vadd.f32 0.0, %v2249
      %v2251 = vpop.f32.mrf.mxu0
      %2252 = vdwg.mxu0
      %v2253 = vadd.f32 %v2229, %v2250
      %v2254 = vld [vmem:[%s15] sm:$0xf]
      %v2256 = vsel %vm1383, %v2254, 0
      %2258 = vmatpush.bf16.msra.mxu0 0
      %2259 = vmatpush.bf16.msra.mxu0 0
      %2260 = vmatpush.bf16.msra.mxu0 0
      %2261 = vmatpush.bf16.msra.mxu0 0
      %2262 = vmatpush.bf16.msra.mxu0 0
      %2263 = vmatpush.bf16.msra.mxu0 0
      %2264 = vmatpush.bf16.msra.mxu0 %v2210
      %2265 = vmatpush.bf16.msra.mxu0 %v2208
      %2266 = vmatmul.bf16.gmra.mxu0 %v2256
      %v2267 = vpop.f32.mrf.mxu0
      %v2268 = vadd.f32 0.0, %v2267
      %v2269 = vpop.f32.mrf.mxu0
      %2270 = vdwg.mxu0
      %v2271 = vadd.f32 %v2201, %v2268
      %v2272 = vld [vmem:[%s15 + $0x4] sm:$0xf]
      %v2274 = vsel %vm1383, %v2272, 0
      %2276 = vmatpush.bf16.msra.mxu0 0
      %2277 = vmatpush.bf16.msra.mxu0 0
      %2278 = vmatpush.bf16.msra.mxu0 0
      %2279 = vmatpush.bf16.msra.mxu0 0
      %2280 = vmatpush.bf16.msra.mxu0 0
      %2281 = vmatpush.bf16.msra.mxu0 0
      %2282 = vmatpush.bf16.msra.mxu0 %v2234
      %2283 = vmatpush.bf16.msra.mxu0 %v2232
      %2284 = vmatmul.bf16.gmra.mxu0 %v2274
      %v2285 = vpop.f32.mrf.mxu0
      %v2286 = vadd.f32 0.0, %v2285
      %v2287 = vpop.f32.mrf.mxu0
      %2288 = vdwg.mxu0
      %v2289 = vadd.f32 %v2271, %v2286
      %v2290 = vmax.f32 %v2253, 0.0
      %v2291 = vpack.c.bf16 %v2290, %v2290
      %v2292 = vmax.f32 %v2289, 0.0
      %v2293 = vpack.c.bf16 %v2292, %v2292
      %v2294 = vmul.u32 %v944, 2
      %v2295 = vmul.u32 %v945, 2
      %vm2296 = vcmp.eq.s32.totalorder %v959, %v2294
      %vm2297 = vcmp.eq.s32.totalorder %v959, %v2295
      %v2298 = vsel %vm2296, 1.0, 0.0
      %v2299 = vsel %vm2297, 1.0, 0.0
      %v2300 = vpack.c.bf16 %v2299, %v2298
      %v2301 = vadd.s32 %v2294, 1
      %v2302 = vadd.s32 %v2295, 1
      %vm2303 = vcmp.eq.s32.totalorder %v959, %v2301
      %vm2304 = vcmp.eq.s32.totalorder %v959, %v2302
      %v2305 = vsel %vm2303, 1.0, 0.0
      %v2306 = vsel %vm2304, 1.0, 0.0
      %v2307 = vpack.c.bf16 %v2306, %v2305
      %v2309 = vsel %vm1383, %v2293, 0
      %2311 = vmatpush.bf16.msra.mxu0 0
      %2312 = vmatpush.bf16.msra.mxu0 0
      %2313 = vmatpush.bf16.msra.mxu0 0
      %2314 = vmatpush.bf16.msra.mxu0 0
      %2315 = vmatpush.bf16.msra.mxu0 0
      %2316 = vmatpush.bf16.msra.mxu0 0
      %2317 = vmatpush.bf16.msra.mxu0 %v2307
      %2318 = vmatpush.bf16.msra.mxu0 %v2125
      %2319 = vmatmul.bf16.gmra.mxu0 %v2309
      %v2320 = vpop.f32.mrf.mxu0
      %v2321 = vadd.f32 0.0, %v2320
      %v2322 = vpop.f32.mrf.mxu0
      %2323 = vdwg.mxu0
      %v2325 = vsel %vm1383, %v2291, 0
      %2327 = vmatpush.bf16.msra.mxu0 0
      %2328 = vmatpush.bf16.msra.mxu0 0
      %2329 = vmatpush.bf16.msra.mxu0 0
      %2330 = vmatpush.bf16.msra.mxu0 0
      %2331 = vmatpush.bf16.msra.mxu0 0
      %2332 = vmatpush.bf16.msra.mxu0 0
      %2333 = vmatpush.bf16.msra.mxu0 %v2300
      %2334 = vmatpush.bf16.msra.mxu0 %v2121
      %2335 = vmatmul.bf16.gmra.mxu0 %v2325
      %v2336 = vpop.f32.mrf.mxu0
      %v2337 = vadd.f32 %v2321, %v2336
      %v2338 = vpop.f32.mrf.mxu0
      %2339 = vdwg.mxu0
      %v2340 = vpack.c.bf16 %v2337, %v2337
      %v2342 = vunpack.c.l.b16 %v2340
      %v2343 = vpack.c.b16 %v2342, %v2342
      %v2346 = vsel %vm807, %v1014, %v2343
      %2348 = vrot.lane.b32.xlu0 %v2346, 1
      %v2349 = vpop.permute.xlu0 %2348
      %v2351 = vsel %vm1716, 0, %v2349
      %vm2352 = vcmask 531456
      %v2353 = vsel %vm2352, %v2351, 0
      %v2355 = vld [vmem:[%s13] sm:$0xff]
      %v2356 = vld [vmem:[%s11] sm:$0xf]
      %v2358 = vsel %vm1233, %v2356, 0
      %2360 = vmatpush.bf16.msra.mxu0 0
      %2361 = vmatpush.bf16.msra.mxu0 0
      %2362 = vmatpush.bf16.msra.mxu0 0
      %2363 = vmatpush.bf16.msra.mxu0 0
      %2364 = vmatpush.bf16.msra.mxu0 0
      %2365 = vmatpush.bf16.msra.mxu0 0
      %2366 = vmatpush.bf16.msra.mxu0 0
      %2367 = vmatpush.bf16.msra.mxu0 %v2353
      %2368 = vmatmul.bf16.gmra.mxu0 %v2358
      %v2369 = vpop.f32.mrf.mxu0
      %v2370 = vadd.f32 0.0, %v2369
      %v2371 = vpop.f32.mrf.mxu0
      %2372 = vdwg.mxu0
      %2374 = vset.pattern.permute.xlu0 0
      %2375 = vperm.xlu0 %2374, %v2355
      %v2376 = vpop.permute.xlu0 %2375
      %v2378 = vadd.f32 %v2376, %v2370
      %v2379 = vld [vmem:[%s11 + $0x4] sm:$0xf]
      %2381 = vrot.lane.b32.xlu0 %v2353, 127
      %v2382 = vpop.permute.xlu0 %2381
      %v2385 = vsel %vm1233, %v2379, 0
      %2387 = vmatpush.bf16.msra.mxu0 0
      %2388 = vmatpush.bf16.msra.mxu0 0
      %2389 = vmatpush.bf16.msra.mxu0 0
      %2390 = vmatpush.bf16.msra.mxu0 0
      %2391 = vmatpush.bf16.msra.mxu0 0
      %2392 = vmatpush.bf16.msra.mxu0 0
      %2393 = vmatpush.bf16.msra.mxu0 0
      %2394 = vmatpush.bf16.msra.mxu0 %v2382
      %2395 = vmatmul.bf16.gmra.mxu0 %v2385
      %v2396 = vpop.f32.mrf.mxu0
      %v2397 = vadd.f32 0.0, %v2396
      %v2398 = vpop.f32.mrf.mxu0
      %2399 = vdwg.mxu0
      %v2400 = vadd.f32 %v2378, %v2397
      %v2401 = vld [vmem:[%s11 + $0x8] sm:$0xf]
      %2402 = vrot.lane.b32.xlu0 %v2353, 126
      %v2403 = vpop.permute.xlu0 %2402
      %v2406 = vsel %vm1233, %v2401, 0
      %2408 = vmatpush.bf16.msra.mxu0 0
      %2409 = vmatpush.bf16.msra.mxu0 0
      %2410 = vmatpush.bf16.msra.mxu0 0
      %2411 = vmatpush.bf16.msra.mxu0 0
      %2412 = vmatpush.bf16.msra.mxu0 0
      %2413 = vmatpush.bf16.msra.mxu0 0
      %2414 = vmatpush.bf16.msra.mxu0 0
      %2415 = vmatpush.bf16.msra.mxu0 %v2403
      %2416 = vmatmul.bf16.gmra.mxu0 %v2406
      %v2417 = vpop.f32.mrf.mxu0
      %v2418 = vadd.f32 0.0, %v2417
      %v2419 = vpop.f32.mrf.mxu0
      %2420 = vdwg.mxu0
      %v2421 = vadd.f32 %v2400, %v2418
      %v2422 = vld [vmem:[%s12] sm:$0xf]
      %v2424 = vsel %vm1233, %v2422, 0
      %2426 = vmatpush.bf16.msra.mxu0 0
      %2427 = vmatpush.bf16.msra.mxu0 0
      %2428 = vmatpush.bf16.msra.mxu0 0
      %2429 = vmatpush.bf16.msra.mxu0 0
      %2430 = vmatpush.bf16.msra.mxu0 0
      %2431 = vmatpush.bf16.msra.mxu0 0
      %2432 = vmatpush.bf16.msra.mxu0 0
      %2433 = vmatpush.bf16.msra.mxu0 %v2382
      %2434 = vmatmul.bf16.gmra.mxu0 %v2424
      %v2435 = vpop.f32.mrf.mxu0
      %v2436 = vadd.f32 0.0, %v2435
      %v2437 = vpop.f32.mrf.mxu0
      %2438 = vdwg.mxu0
      %v2439 = vadd.f32 %v2376, %v2436
      %v2440 = vld [vmem:[%s12 + $0x4] sm:$0xf]
      %v2442 = vsel %vm1233, %v2440, 0
      %2444 = vmatpush.bf16.msra.mxu0 0
      %2445 = vmatpush.bf16.msra.mxu0 0
      %2446 = vmatpush.bf16.msra.mxu0 0
      %2447 = vmatpush.bf16.msra.mxu0 0
      %2448 = vmatpush.bf16.msra.mxu0 0
      %2449 = vmatpush.bf16.msra.mxu0 0
      %2450 = vmatpush.bf16.msra.mxu0 0
      %2451 = vmatpush.bf16.msra.mxu0 %v2403
      %2452 = vmatmul.bf16.gmra.mxu0 %v2442
      %v2453 = vpop.f32.mrf.mxu0
      %v2454 = vadd.f32 0.0, %v2453
      %v2455 = vpop.f32.mrf.mxu0
      %2456 = vdwg.mxu0
      %v2457 = vadd.f32 %v2439, %v2454
      %v2458 = vmax.f32 %v2421, 0.0
      %v2459 = vpack.c.bf16 %v2458, %v2458
      %v2460 = vmax.f32 %v2457, 0.0
      %v2461 = vpack.c.bf16 %v2460, %v2460
      %v2462 = vmul.u32 %v946, 2
      %v2463 = vmul.u32 %v947, 2
      %v2464 = vmul.u32 %v948, 2
      %v2465 = vmul.u32 %v949, 2
      %vm2466 = vcmp.eq.s32.totalorder %v959, %v2462
      %vm2467 = vcmp.eq.s32.totalorder %v959, %v2463
      %vm2468 = vcmp.eq.s32.totalorder %v959, %v2464
      %vm2469 = vcmp.eq.s32.totalorder %v959, %v2465
      %v2470 = vsel %vm2466, 1.0, 0.0
      %v2471 = vsel %vm2467, 1.0, 0.0
      %v2472 = vsel %vm2468, 1.0, 0.0
      %v2473 = vsel %vm2469, 1.0, 0.0
      %v2474 = vpack.c.bf16 %v2471, %v2470
      %v2475 = vpack.c.bf16 %v2473, %v2472
      %v2476 = vadd.s32 %v2462, 1
      %v2477 = vadd.s32 %v2463, 1
      %v2478 = vadd.s32 %v2464, 1
      %v2479 = vadd.s32 %v2465, 1
      %vm2480 = vcmp.eq.s32.totalorder %v959, %v2476
      %vm2481 = vcmp.eq.s32.totalorder %v959, %v2477
      %vm2482 = vcmp.eq.s32.totalorder %v959, %v2478
      %vm2483 = vcmp.eq.s32.totalorder %v959, %v2479
      %v2484 = vsel %vm2480, 1.0, 0.0
      %v2485 = vsel %vm2481, 1.0, 0.0
      %v2486 = vsel %vm2482, 1.0, 0.0
      %v2487 = vsel %vm2483, 1.0, 0.0
      %v2488 = vpack.c.bf16 %v2485, %v2484
      %v2489 = vpack.c.bf16 %v2487, %v2486
      %v2491 = vsel %vm1192, %v2461, 0
      %2493 = vmatpush.bf16.msra.mxu0 0
      %2494 = vmatpush.bf16.msra.mxu0 0
      %2495 = vmatpush.bf16.msra.mxu0 0
      %2496 = vmatpush.bf16.msra.mxu0 0
      %2497 = vmatpush.bf16.msra.mxu0 %v2489
      %2498 = vmatpush.bf16.msra.mxu0 %v2488
      %2499 = vmatpush.bf16.msra.mxu0 %v2307
      %2500 = vmatpush.bf16.msra.mxu0 %v2125
      %2501 = vmatmul.bf16.gmra.mxu0 %v2491
      %v2502 = vpop.f32.mrf.mxu0
      %v2503 = vadd.f32 0.0, %v2502
      %v2504 = vpop.f32.mrf.mxu0
      %2505 = vdwg.mxu0
      %v2507 = vsel %vm1192, %v2459, 0
      %2509 = vmatpush.bf16.msra.mxu0 0
      %2510 = vmatpush.bf16.msra.mxu0 0
      %2511 = vmatpush.bf16.msra.mxu0 0
      %2512 = vmatpush.bf16.msra.mxu0 0
      %2513 = vmatpush.bf16.msra.mxu0 %v2475
      %2514 = vmatpush.bf16.msra.mxu0 %v2474
      %2515 = vmatpush.bf16.msra.mxu0 %v2300
      %2516 = vmatpush.bf16.msra.mxu0 %v2121
      %2517 = vmatmul.bf16.gmra.mxu0 %v2507
      %v2518 = vpop.f32.mrf.mxu0
      %v2519 = vadd.f32 %v2503, %v2518
      %v2520 = vpop.f32.mrf.mxu0
      %2521 = vdwg.mxu0
      %v2522 = vpack.c.bf16 %v2519, %v2519
      %v2523 = vld [vmem:[%s23] sm:$0x3]
      %v2524 = vld [vmem:[%s24] sm:$0x7]
      %2526 = vset.pattern.permute.xlu0 0
      %2527 = vperm.xlu0 %2526, %v2524
      %v2528 = vpop.permute.xlu0 %2527
      %v2531 = vsel %vm803, %v2523, 0
      %v2534 = vsel %vm807, %v2522, 0
      %2536 = vmatpush.bf16.msra.mxu0 0
      %2537 = vmatpush.bf16.msra.mxu0 0
      %2538 = vmatpush.bf16.msra.mxu0 0
      %2539 = vmatpush.bf16.msra.mxu0 0
      %2540 = vmatpush.bf16.msra.mxu0 0
      %2541 = vmatpush.bf16.msra.mxu0 0
      %2542 = vmatpush.bf16.msra.mxu0 0
      %2543 = vmatpush.bf16.msra.mxu0 %v2534
      %2544 = vmatmul.bf16.gmra.mxu0 %v2531
      %v2545 = vpop.f32.mrf.mxu0
      %v2546 = vadd.f32 %v2528, %v2545
      %v2547 = vpop.f32.mrf.mxu0
      %2548 = vdwg.mxu0
      %v2549 = vpack.c.bf16 %v2546, %v2546
      %vm2550 = vcmask 1041408
      %vm2551 = vsmask.f32 1280
      %vm2552 = vmand %vm2550, %vm2551
      %v2553 = vld [vmem:[%s759] sm:$0x3]
      %v2554 = vsel %vm2552, %v2549, %v2553
      %2555 = vst [vmem:[%s759] sm:$0x3] %v2554
      %p2556 = scmp.lt.s32.totalorder %s36, 1
      %s2557 = scalar_select %p2556, %s36, 1
      %s2558 = smul.addr %s2557, 2
      %s2559 = scalar_lea.vmem %s25, %s2558
      // Predicated region
      $region121: #{dual_convcnp_forward.4} parent=119 // pred_check
        %p2560 = pneg %p584
      $region122: #{dual_convcnp_forward.4} parent=119 // pred_check_branch
        %2562 = sbr.rel (%p2560) target = $region124
      $region123: #{dual_convcnp_forward.4} parent=119 // pred_region
        _
      $region124: #{dual_convcnp_forward.4} parent=119 // pred_fallthru
        _
    $region120: #{dual_convcnp_forward.4} parent=5 // pred_fallthru
      _
    %p2563 = scmp.le.s32.totalorder 2, %s31
    // Predicated region
    $region125: #{dual_convcnp_forward.4} parent=5 // pred_check
      %p2564 = pneg %p2563
    $region126: #{dual_convcnp_forward.4} parent=5 // pred_check_branch
      %2566 = sbr.rel (%p2564) target = $region128
    $region127: #{dual_convcnp_forward.4} parent=5 // pred_region
      %s2567 = ssub.s32 %s31, 2
      // Predicated region
      $region129: #{dual_convcnp_forward.4} parent=127 // pred_check
        %p2568 = pneg %p590
      $region130: #{dual_convcnp_forward.4} parent=127 // pred_check_branch
        %2570 = sbr.rel (%p2568) target = $region132
      $region131: #{dual_convcnp_forward.4} parent=127 // pred_region
        %p2571 = scmp.lt.s32.totalorder %s37, 1
        %s2572 = scalar_select %p2571, %s37, 1
        %s2573 = smul.addr %s2572, 2
        %s2574 = scalar_lea.vmem %s25, %s2573
      $region132: #{dual_convcnp_forward.4} parent=127 // pred_fallthru
        _
    $region128: #{dual_convcnp_forward.4} parent=5 // pred_fallthru
      _
  $region6: #{dual_convcnp_forward.4} parent=0 // loop_footer
    %s35 = sadd.s32 1, %s31
  $region7: #{dual_convcnp_forward.4} parent=0 // loop_footer_branch
    %30 = sbr.rel target = $region3
  $region8: #{dual_convcnp_forward.4} parent=0 // loop_exit
    _

</llo_original>
